<compile_context>
chip_gen: v7x
topology: tpu7x:2x2x1
jax: 0.10.0
libtpu: 0.0.40
codegen_flags: <defaults>
</compile_context>

<pallas_src>
import jax
import jax.numpy as jnp
from jax import lax
from jax.experimental import pallas as pl
from jax.experimental.pallas import tpu as pltpu

GRID_SIZE = 5
SPLINE_ORDER = 3
N_KNOTS = GRID_SIZE + 2 * SPLINE_ORDER + 1      # 12 knots per input feature
N_COEF = GRID_SIZE + SPLINE_ORDER               # 8 spline basis functions
N_SEG = 1 + N_COEF                              # SiLU base branch + 8 spline bases
IN_FEATURES = 250
OUT_FEATURES = 10
FPAD = 256                                      # lane-padded KAN feature width
OPAD = 128                                      # lane-padded logits width
HIGH = jax.lax.Precision.HIGHEST

# row offsets of the reciprocal knot-difference rows inside the precomputed table
_INV_OFF = (N_KNOTS,
            N_KNOTS + (N_KNOTS - 1),
            N_KNOTS + (N_KNOTS - 1) + (N_KNOTS - 2))
TAB_ROWS = N_KNOTS + (N_KNOTS - 1) + (N_KNOTS - 2) + (N_KNOTS - 3)   # 42


def _round_up(x, m):
    return (x + m - 1) // m * m


def _cdiv(a, b):
    return (a + b - 1) // b


def _hw_config():
    """Per-generation tile sizing: v5e/v6e have 128 MiB VMEM, v7x has 64 MiB + 2 TCs."""
    kind = ""
    try:
        kind = jax.devices()[0].device_kind.lower()
    except Exception:
        pass
    if any(s in kind for s in ("v5 lite", "v5e", "v6", "trillium")):
        return dict(conv_tile_cap=16384, kan_tile_b=1024, vmem_limit=64 * 1024 * 1024)
    # v7x / unknown: stay well inside 64 MiB physical VMEM
    return dict(conv_tile_cap=4096, kan_tile_b=512, vmem_limit=48 * 1024 * 1024)


def _pick_lane_tile(n, cap, min_steps=2):
    """Lane tile (multiple of 128), preferring >= min_steps parallel grid steps."""
    npad = _round_up(n, 128)
    steps = max(min_steps, _cdiv(npad, cap)) if npad >= min_steps * 128 else 1
    tile = min(_round_up(_cdiv(npad, steps), 128), cap)
    steps = _cdiv(npad, tile)
    return tile, steps


def _pick_row_tile(n, cap, min_steps=2):
    """Sublane (row) tile (multiple of 8), preferring >= min_steps parallel grid steps."""
    npad = _round_up(n, 8)
    steps = max(min_steps, _cdiv(npad, cap)) if npad >= min_steps * 8 else 1
    tile = min(_round_up(_cdiv(npad, steps), 8), cap)
    steps = _cdiv(npad, tile)
    return tile, steps


# --------------------------------------------------------------------------------------
# Kernel 1: conv (matmul over pool-grouped im2col patches) + pool-max + bias + ReLU
#           in lane-dense (C, N) layout
# --------------------------------------------------------------------------------------
def conv_relu_pool_kernel(patches_ref, w_ref, b_ref, out_ref):
    """patches: (4, K, T) pool-grouped im2col taps; w: (C, K); b: (C, 1); out: (C, T).

    out[c, n] = relu( max_p (w[c, :] @ patches[p, :, n]) + b[c] )
    ReLU is monotone and the bias is identical across the 4 pool positions, so this
    equals maxpool2x2(relu(conv(x) + b)).
    """
    w = w_ref[...]
    y0 = jnp.dot(w, patches_ref[0], preferred_element_type=jnp.float32)
    y1 = jnp.dot(w, patches_ref[1], preferred_element_type=jnp.float32)
    y2 = jnp.dot(w, patches_ref[2], preferred_element_type=jnp.float32)
    y3 = jnp.dot(w, patches_ref[3], preferred_element_type=jnp.float32)
    m = jnp.maximum(jnp.maximum(y0, y1), jnp.maximum(y2, y3))
    out_ref[...] = jnp.maximum(m + b_ref[...], 0.0)


def conv_relu_pool(pat3, w, b, *, tile_cap, vmem_limit):
    """pat3: (4, K, N) pool-grouped patches; w: (C, K); b: (C, 1) -> (C, N)."""
    _, k, n = pat3.shape
    c = w.shape[0]
    tile, ntiles = _pick_lane_tile(n, tile_cap)
    npad = tile * ntiles
    pat3 = jnp.pad(pat3, ((0, 0), (0, 0), (0, npad - n)))
    out = pl.pallas_call(
        conv_relu_pool_kernel,
        out_shape=jax.ShapeDtypeStruct((c, npad), jnp.float32),
        grid=(ntiles,),
        in_specs=[
            pl.BlockSpec((4, k, tile), lambda i: (0, 0, i)),
            pl.BlockSpec((c, k), lambda i: (0, 0)),
            pl.BlockSpec((c, 1), lambda i: (0, 0)),
        ],
        out_specs=pl.BlockSpec((c, tile), lambda i: (0, i)),
        compiler_params=pltpu.CompilerParams(
            dimension_semantics=("parallel",), vmem_limit_bytes=vmem_limit),
    )(pat3, w, b)
    return out[:, :n]


# --------------------------------------------------------------------------------------
# Kernel 2: KANLinear(250 -> 10) + log_softmax
# --------------------------------------------------------------------------------------
def kan_logsoftmax_kernel(x_ref, tab_ref, w_ref, out_ref):
    """x: (TB, FPAD); tab: (TAB_ROWS, FPAD) = [12 knot rows | 30 reciprocal rows];
    w: (N_SEG, FPAD, OPAD) pre-transposed lane-padded weights; out: (TB, OPAD)."""
    x = x_ref[...]
    tab = tab_ref[...]

    def knot(j):
        return tab[j:j + 1, :]

    def inv(k, j):                      # precomputed 1 / (grid[j+k] - grid[j])
        r = _INV_OFF[k - 1] + j
        return tab[r:r + 1, :]

    # SiLU base branch
    silu = x * (1.0 / (1.0 + jnp.exp(-x)))

    # Cox-de-Boor recursion (efficient-kan b_splines); reciprocal knot rows come
    # precomputed from the host, so full-tile work is VALU multiplies only.
    bases = [((x >= knot(j)) & (x < knot(j + 1))).astype(jnp.float32)
             for j in range(N_KNOTS - 1)]
    for k in range(1, SPLINE_ORDER + 1):
        bases = [(x - knot(j)) * inv(k, j) * bases[j]
                 + (knot(j + k + 1) - x) * inv(k, j + 1) * bases[j + 1]
                 for j in range(len(bases) - 1)]          # finally N_COEF (TB, FPAD) arrays

    # Fused base + spline matmul as N_SEG lane-aligned accumulating MN dots
    # (no feats concat buffer, no transposed-RHS contraction).
    segs = [silu] + bases
    logits = jnp.dot(segs[0], w_ref[0], preferred_element_type=jnp.float32)
    for s in range(1, N_SEG):
        logits = logits + jnp.dot(segs[s], w_ref[s], preferred_element_type=jnp.float32)

    # mask padded logit columns before the softmax reductions
    col = lax.broadcasted_iota(jnp.int32, logits.shape, 1)
    logits = jnp.where(col < OUT_FEATURES, logits, -1e30)
    m = jnp.max(logits, axis=-1, keepdims=True)
    z = logits - m
    lse = jnp.log(jnp.sum(jnp.exp(z), axis=-1, keepdims=True))
    out_ref[...] = z - lse


def kan_logsoftmax(x_pad, tab, w_seg_t, bsz, *, tile_b, vmem_limit):
    """x_pad: (bsz, FPAD); returns (bsz, OUT_FEATURES) log-probs."""
    tb, ntiles = _pick_row_tile(bsz, tile_b)
    bpad = tb * ntiles
    xp = jnp.pad(x_pad, ((0, bpad - bsz), (0, 0)))
    out = pl.pallas_call(
        kan_logsoftmax_kernel,
        out_shape=jax.ShapeDtypeStruct((bpad, OPAD), jnp.float32),
        grid=(ntiles,),
        in_specs=[
            pl.BlockSpec((tb, FPAD), lambda i: (i, 0)),
            pl.BlockSpec((TAB_ROWS, FPAD), lambda i: (0, 0)),
            pl.BlockSpec((N_SEG, FPAD, OPAD), lambda i: (0, 0, 0)),
        ],
        out_specs=pl.BlockSpec((tb, OPAD), lambda i: (i, 0)),
        compiler_params=pltpu.CompilerParams(
            dimension_semantics=("parallel",), vmem_limit_bytes=vmem_limit),
    )(xp, tab, w_seg_t)
    return out[:bsz, :OUT_FEATURES]


# --------------------------------------------------------------------------------------
# Host-side prep
# --------------------------------------------------------------------------------------
def pool_grouped_patches(x_cbhw, pool_h, pool_w, k=3):
    """x: (C, B, H, W) channel-major -> (4, C*k*k, B*pool_h*pool_w) with
    out[pi*2+pj, c*9 + di*3 + dj, b*Ph*Pw + i*Pw + j] = x[c, b, 2i+pi+di, 2j+pj+dj]."""
    c, b = x_cbhw.shape[0], x_cbhw.shape[1]
    n = b * pool_h * pool_w
    groups = []
    for pi in range(2):
        for pj in range(2):
            taps = [x_cbhw[:, :, pi + di: pi + di + 2 * pool_h: 2,
                           pj + dj: pj + dj + 2 * pool_w: 2]
                    for di in range(k) for dj in range(k)]
            t = jnp.stack(taps, axis=1)                      # (C, 9, B, Ph, Pw)
            groups.append(t.reshape(c * k * k, n))
    return jnp.stack(groups, axis=0)                         # (4, C*9, N)


def _kan_tables(base_w, spline_w, spline_scaler, grid):
    """Precompute the lane-padded knot / reciprocal table and the fused weight."""
    pad_f = FPAD - IN_FEATURES
    # pad knot rows by replicating a valid knot vector (keeps reciprocals finite);
    # padded feature columns carry zero weights, so they never contribute.
    grid_p = jnp.concatenate(
        [grid, jnp.broadcast_to(grid[:1], (pad_f, N_KNOTS))], axis=0)   # (FPAD, 12)
    rows = [grid_p[:, j] for j in range(N_KNOTS)]
    for k in range(1, SPLINE_ORDER + 1):
        for j in range(N_KNOTS - k):
            rows.append(1.0 / (grid_p[:, j + k] - grid_p[:, j]))
    tab = jnp.stack(rows, axis=0)                                       # (42, FPAD)

    # fused, pre-transposed, lane-padded weight: (N_SEG, FPAD, OPAD)
    sw = spline_w * spline_scaler[:, :, None]                           # (O, F, N_COEF)
    w_seg = jnp.concatenate([base_w[:, None, :], jnp.moveaxis(sw, 2, 1)], axis=1)
    w_seg = jnp.pad(w_seg, ((0, OPAD - OUT_FEATURES), (0, 0), (0, pad_f)))
    return tab, jnp.transpose(w_seg, (1, 2, 0))                         # (9, 256, 128)


def forward_pallas(x, params):
    # TODO(synk): the remaining host-side work is the pool-grouped im2col gather for the
    # two conv stages; fully fusing it in-kernel needs non-128-aligned strided lane
    # slicing of the raw image tile, which is kept off the critical lowering path here.
    (w1, b1, w2, b2, base_w, spline_w, spline_scaler, grid) = params
    cfg = _hw_config()
    bsz = x.shape[0]

    # stage 1: conv1(1->5, 3x3 valid) + bias + relu + maxpool2, lane-dense (C, N) output
    x_cbhw = x.reshape(1, bsz, 28, 28)            # in_channels == 1 -> free relabel
    p1 = pool_grouped_patches(x_cbhw, 13, 13)     # (4, 9, B*169)
    h1 = conv_relu_pool(p1, w1.reshape(5, 9), b1.reshape(5, 1),
                        tile_cap=cfg["conv_tile_cap"], vmem_limit=cfg["vmem_limit"])

    # stage 2: stays lane-dense -- patches come straight from (5, B*169), no NCHW trip
    p2 = pool_grouped_patches(h1.reshape(5, bsz, 13, 13), 5, 5)         # (4, 45, B*25)
    h2 = conv_relu_pool(p2, w2.reshape(10, 45), b2.reshape(10, 1),
                        tile_cap=cfg["conv_tile_cap"], vmem_limit=cfg["vmem_limit"])

    # PyTorch flatten order (B, C*H*W): tiny (10, B, 25) -> (B, 250) transpose, then
    # lane-pad the feature axis to 256 for the KAN kernel.
    feat = h2.reshape(10, bsz, 25).transpose(1, 0, 2).reshape(bsz, IN_FEATURES)
    feat = jnp.pad(feat, ((0, 0), (0, FPAD - IN_FEATURES)))

    tab, w_seg_t = _kan_tables(base_w, spline_w, spline_scaler, grid)
    return kan_logsoftmax(feat, tab, w_seg_t, bsz,
                          tile_b=cfg["kan_tile_b"], vmem_limit=cfg["vmem_limit"])


# --------------------------------------------------------------------------------------
# Pure-JAX reference (mirrors the PyTorch forward semantics)
# --------------------------------------------------------------------------------------
def _maxpool2x2(y):
    b, c, h, w = y.shape
    ho, wo = h // 2, w // 2
    y = y[:, :, :2 * ho, :2 * wo].reshape(b, c, ho, 2, wo, 2)
    return jnp.max(y, axis=(3, 5))


def _b_splines_ref(x, grid):
    xb = x[:, :, None]
    gb = grid[None, :, :]
    bases = ((xb >= gb[:, :, :-1]) & (xb < gb[:, :, 1:])).astype(x.dtype)
    for k in range(1, SPLINE_ORDER + 1):
        bases = ((xb - gb[:, :, :-(k + 1)])
                 / (gb[:, :, k:-1] - gb[:, :, :-(k + 1)]) * bases[:, :, :-1]
                 + (gb[:, :, k + 1:] - xb)
                 / (gb[:, :, k + 1:] - gb[:, :, 1:-k]) * bases[:, :, 1:])
    return bases


def forward_reference(x, params):
    (w1, b1, w2, b2, base_w, spline_w, spline_scaler, grid) = params
    dn = ('NCHW', 'OIHW', 'NCHW')
    y = lax.conv_general_dilated(x, w1, (1, 1), 'VALID', dimension_numbers=dn,
                                 precision=HIGH) + b1[None, :, None, None]
    y = _maxpool2x2(jnp.maximum(y, 0.0))
    y = lax.conv_general_dilated(y, w2, (1, 1), 'VALID', dimension_numbers=dn,
                                 precision=HIGH) + b2[None, :, None, None]
    y = _maxpool2x2(jnp.maximum(y, 0.0))
    feat = y.reshape(y.shape[0], -1)                                  # (B, 250)
    base = jnp.dot(jax.nn.silu(feat), base_w.T, precision=HIGH)
    bases = _b_splines_ref(feat, grid)                                # (B, 250, 8)
    sw = (spline_w * spline_scaler[:, :, None]).reshape(OUT_FEATURES, -1)
    spline = jnp.dot(bases.reshape(feat.shape[0], -1), sw.T, precision=HIGH)
    return jax.nn.log_softmax(base + spline, axis=1)


# --------------------------------------------------------------------------------------
# Deterministic parameter init (synthetic, shapes match the PyTorch module)
# --------------------------------------------------------------------------------------
def init_params(key):
    ks = jax.random.split(key, 7)
    w1 = jax.random.normal(ks[0], (5, 1, 3, 3), jnp.float32) * 0.3
    b1 = jax.random.normal(ks[1], (5,), jnp.float32) * 0.1
    w2 = jax.random.normal(ks[2], (10, 5, 3, 3), jnp.float32) * 0.15
    b2 = jax.random.normal(ks[3], (10,), jnp.float32) * 0.1
    base_w = jax.random.normal(ks[4], (OUT_FEATURES, IN_FEATURES), jnp.float32) * 0.05
    spline_w = jax.random.normal(ks[5], (OUT_FEATURES, IN_FEATURES, N_COEF), jnp.float32) * 0.05
    spline_scaler = jax.random.normal(ks[6], (OUT_FEATURES, IN_FEATURES), jnp.float32)
    h = (1.0 - 0.0) / GRID_SIZE
    knots = jnp.arange(-SPLINE_ORDER, GRID_SIZE + SPLINE_ORDER + 1, dtype=jnp.float32) * h
    grid = jnp.broadcast_to(knots, (IN_FEATURES, N_KNOTS))
    return (w1, b1, w2, b2, base_w, spline_w, spline_scaler, grid)


if __name__ == "__main__":
    key = jax.random.PRNGKey(0)
    pkey, xkey = jax.random.split(key)
    params = init_params(pkey)
    x = jax.random.normal(xkey, (8, 1, 28, 28), jnp.float32)   # NCHW, like PyTorch

    out = jax.jit(forward_pallas)(x, params)
    out = jax.block_until_ready(out)
    assert out.shape == (8, OUT_FEATURES)

    # Kernels use default MXU precision (bf16 passes); the reference uses HIGHEST,
    # so allow a small numerical gap.
    ref = forward_reference(x, params)
    if not jnp.allclose(out, ref, atol=1e-2, rtol=1e-2):
        max_err = float(jnp.max(jnp.abs(out - ref)))
        raise SystemExit(f"mismatch vs reference, max abs err = {max_err}")
    print("KERNEL_OK")
</pallas_src>

<mosaic_0001>
module attributes {stable_mosaic.version = 11 : i64} {
  func.func @conv_relu_pool_kernel(%arg0: i32, %arg1: memref<4x9x768xf32, #tpu.memory_space<vmem>>, %arg2: memref<5x9xf32, #tpu.memory_space<vmem>>, %arg3: memref<5x1xf32, #tpu.memory_space<vmem>>, %arg4: memref<5x768xf32, #tpu.memory_space<vmem>>) attributes {dimension_semantics = [#tpu.dimension_semantics<parallel>], iteration_bounds = array<i64: 2>, scalar_prefetch = 0 : i64, scratch_operands = 0 : i64, tpu.core_type = #tpu.core_type<tc>, window_params = [{transform_indices = @transform_0, window_bounds = array<i64: 4, 9, 768>}, {pipeline_mode = #tpu.pipeline_mode<synchronous>, transform_indices = @transform_1, window_bounds = array<i64: 5, 9>}, {pipeline_mode = #tpu.pipeline_mode<synchronous>, transform_indices = @transform_2, window_bounds = array<i64: 5, 1>}, {transform_indices = @transform_3, window_bounds = array<i64: 5, 768>}]} {
    %c0 = arith.constant 0 : index
    %c0_0 = arith.constant 0 : index
    %0 = vector.load %arg2[%c0, %c0_0] : memref<5x9xf32, #tpu.memory_space<vmem>>, vector<5x9xf32>
    %c0_1 = arith.constant 0 : index
    %c0_2 = arith.constant 0 : index
    %c0_3 = arith.constant 0 : index
    %1 = vector.load %arg1[%c0_1, %c0_2, %c0_3] : memref<4x9x768xf32, #tpu.memory_space<vmem>>, vector<1x9x768xf32>
    %2 = vector.shape_cast %1 : vector<1x9x768xf32> to vector<9x768xf32>
    %cst = arith.constant dense<0.000000e+00> : vector<5x768xf32>
    %3 = tpu.matmul %0, %2, %cst {dimension_numbers = #tpu.dot_dimension_numbers<[1], [0], [0], [1], [0, 0, 1, 1], [], []>} : vector<5x9xf32>, vector<9x768xf32>, vector<5x768xf32> -> vector<5x768xf32>
    %c1 = arith.constant 1 : index
    %c0_4 = arith.constant 0 : index
    %c0_5 = arith.constant 0 : index
    %4 = vector.load %arg1[%c1, %c0_4, %c0_5] : memref<4x9x768xf32, #tpu.memory_space<vmem>>, vector<1x9x768xf32>
    %5 = vector.shape_cast %4 : vector<1x9x768xf32> to vector<9x768xf32>
    %cst_6 = arith.constant dense<0.000000e+00> : vector<5x768xf32>
    %6 = tpu.matmul %0, %5, %cst_6 {dimension_numbers = #tpu.dot_dimension_numbers<[1], [0], [0], [1], [0, 0, 1, 1], [], []>} : vector<5x9xf32>, vector<9x768xf32>, vector<5x768xf32> -> vector<5x768xf32>
    %c2 = arith.constant 2 : index
    %c0_7 = arith.constant 0 : index
    %c0_8 = arith.constant 0 : index
    %7 = vector.load %arg1[%c2, %c0_7, %c0_8] : memref<4x9x768xf32, #tpu.memory_space<vmem>>, vector<1x9x768xf32>
    %8 = vector.shape_cast %7 : vector<1x9x768xf32> to vector<9x768xf32>
    %cst_9 = arith.constant dense<0.000000e+00> : vector<5x768xf32>
    %9 = tpu.matmul %0, %8, %cst_9 {dimension_numbers = #tpu.dot_dimension_numbers<[1], [0], [0], [1], [0, 0, 1, 1], [], []>} : vector<5x9xf32>, vector<9x768xf32>, vector<5x768xf32> -> vector<5x768xf32>
    %c3 = arith.constant 3 : index
    %c0_10 = arith.constant 0 : index
    %c0_11 = arith.constant 0 : index
    %10 = vector.load %arg1[%c3, %c0_10, %c0_11] : memref<4x9x768xf32, #tpu.memory_space<vmem>>, vector<1x9x768xf32>
    %11 = vector.shape_cast %10 : vector<1x9x768xf32> to vector<9x768xf32>
    %cst_12 = arith.constant dense<0.000000e+00> : vector<5x768xf32>
    %12 = tpu.matmul %0, %11, %cst_12 {dimension_numbers = #tpu.dot_dimension_numbers<[1], [0], [0], [1], [0, 0, 1, 1], [], []>} : vector<5x9xf32>, vector<9x768xf32>, vector<5x768xf32> -> vector<5x768xf32>
    %13 = arith.maximumf %3, %6 : vector<5x768xf32>
    %14 = arith.maximumf %9, %12 : vector<5x768xf32>
    %15 = arith.maximumf %13, %14 : vector<5x768xf32>
    %c0_13 = arith.constant 0 : index
    %c0_14 = arith.constant 0 : index
    %16 = vector.load %arg3[%c0_13, %c0_14] : memref<5x1xf32, #tpu.memory_space<vmem>>, vector<5x1xf32>
    %17 = vector.broadcast %16 : vector<5x1xf32> to vector<5x768xf32>
    %18 = arith.addf %15, %17 : vector<5x768xf32>
    %cst_15 = arith.constant 0.000000e+00 : f32
    %19 = vector.broadcast %cst_15 : f32 to vector<5x768xf32>
    %20 = arith.maximumf %18, %19 : vector<5x768xf32>
    %c0_16 = arith.constant 0 : index
    %c0_17 = arith.constant 0 : index
    %21 = vector.load %arg4[%c0_16, %c0_17] : memref<5x768xf32, #tpu.memory_space<vmem>>, vector<5x768xf32>
    tpu.vector_store %arg4[%c0_16, %c0_17], %20 {strides = array<i32>} : memref<5x768xf32, #tpu.memory_space<vmem>>, vector<5x768xf32>,
    return
  }
  func.func @transform_0(%arg0: i32) -> (i32, i32, i32) {
    %c0_i32 = arith.constant 0 : i32
    %c0_i32_0 = arith.constant 0 : i32
    %c0_i32_1 = arith.constant 0 : i32
    return %c0_i32, %c0_i32_0, %arg0 : i32, i32, i32
  }
  func.func @transform_1(%arg0: i32) -> (i32, i32) {
    %c0_i32 = arith.constant 0 : i32
    %c0_i32_0 = arith.constant 0 : i32
    %c0_i32_1 = arith.constant 0 : i32
    return %c0_i32, %c0_i32_0 : i32, i32
  }
  func.func @transform_2(%arg0: i32) -> (i32, i32) {
    %c0_i32 = arith.constant 0 : i32
    %c0_i32_0 = arith.constant 0 : i32
    %c0_i32_1 = arith.constant 0 : i32
    return %c0_i32, %c0_i32_0 : i32, i32
  }
  func.func @transform_3(%arg0: i32) -> (i32, i32) {
    %c0_i32 = arith.constant 0 : i32
    %c0_i32_0 = arith.constant 0 : i32
    return %c0_i32, %arg0 : i32, i32
  }
}

module attributes {stable_mosaic.version = 11 : i64} {
  func.func @conv_relu_pool_kernel(%arg0: i32, %arg1: memref<4x45x128xf32, #tpu.memory_space<vmem>>, %arg2: memref<10x45xf32, #tpu.memory_space<vmem>>, %arg3: memref<10x1xf32, #tpu.memory_space<vmem>>, %arg4: memref<10x128xf32, #tpu.memory_space<vmem>>) attributes {dimension_semantics = [#tpu.dimension_semantics<parallel>], iteration_bounds = array<i64: 2>, scalar_prefetch = 0 : i64, scratch_operands = 0 : i64, tpu.core_type = #tpu.core_type<tc>, window_params = [{transform_indices = @transform_0, window_bounds = array<i64: 4, 45, 128>}, {pipeline_mode = #tpu.pipeline_mode<synchronous>, transform_indices = @transform_1, window_bounds = array<i64: 10, 45>}, {pipeline_mode = #tpu.pipeline_mode<synchronous>, transform_indices = @transform_2, window_bounds = array<i64: 10, 1>}, {transform_indices = @transform_3, window_bounds = array<i64: 10, 128>}]} {
    %c0 = arith.constant 0 : index
    %c0_0 = arith.constant 0 : index
    %0 = vector.load %arg2[%c0, %c0_0] : memref<10x45xf32, #tpu.memory_space<vmem>>, vector<10x45xf32>
    %c0_1 = arith.constant 0 : index
    %c0_2 = arith.constant 0 : index
    %c0_3 = arith.constant 0 : index
    %1 = vector.load %arg1[%c0_1, %c0_2, %c0_3] : memref<4x45x128xf32, #tpu.memory_space<vmem>>, vector<1x45x128xf32>
    %2 = vector.shape_cast %1 : vector<1x45x128xf32> to vector<45x128xf32>
    %cst = arith.constant dense<0.000000e+00> : vector<10x128xf32>
    %3 = tpu.matmul %0, %2, %cst {dimension_numbers = #tpu.dot_dimension_numbers<[1], [0], [0], [1], [0, 0, 1, 1], [], []>} : vector<10x45xf32>, vector<45x128xf32>, vector<10x128xf32> -> vector<10x128xf32>
    %c1 = arith.constant 1 : index
    %c0_4 = arith.constant 0 : index
    %c0_5 = arith.constant 0 : index
    %4 = vector.load %arg1[%c1, %c0_4, %c0_5] : memref<4x45x128xf32, #tpu.memory_space<vmem>>, vector<1x45x128xf32>
    %5 = vector.shape_cast %4 : vector<1x45x128xf32> to vector<45x128xf32>
    %cst_6 = arith.constant dense<0.000000e+00> : vector<10x128xf32>
    %6 = tpu.matmul %0, %5, %cst_6 {dimension_numbers = #tpu.dot_dimension_numbers<[1], [0], [0], [1], [0, 0, 1, 1], [], []>} : vector<10x45xf32>, vector<45x128xf32>, vector<10x128xf32> -> vector<10x128xf32>
    %c2 = arith.constant 2 : index
    %c0_7 = arith.constant 0 : index
    %c0_8 = arith.constant 0 : index
    %7 = vector.load %arg1[%c2, %c0_7, %c0_8] : memref<4x45x128xf32, #tpu.memory_space<vmem>>, vector<1x45x128xf32>
    %8 = vector.shape_cast %7 : vector<1x45x128xf32> to vector<45x128xf32>
    %cst_9 = arith.constant dense<0.000000e+00> : vector<10x128xf32>
    %9 = tpu.matmul %0, %8, %cst_9 {dimension_numbers = #tpu.dot_dimension_numbers<[1], [0], [0], [1], [0, 0, 1, 1], [], []>} : vector<10x45xf32>, vector<45x128xf32>, vector<10x128xf32> -> vector<10x128xf32>
    %c3 = arith.constant 3 : index
    %c0_10 = arith.constant 0 : index
    %c0_11 = arith.constant 0 : index
    %10 = vector.load %arg1[%c3, %c0_10, %c0_11] : memref<4x45x128xf32, #tpu.memory_space<vmem>>, vector<1x45x128xf32>
    %11 = vector.shape_cast %10 : vector<1x45x128xf32> to vector<45x128xf32>
    %cst_12 = arith.constant dense<0.000000e+00> : vector<10x128xf32>
    %12 = tpu.matmul %0, %11, %cst_12 {dimension_numbers = #tpu.dot_dimension_numbers<[1], [0], [0], [1], [0, 0, 1, 1], [], []>} : vector<10x45xf32>, vector<45x128xf32>, vector<10x128xf32> -> vector<10x128xf32>
    %13 = arith.maximumf %3, %6 : vector<10x128xf32>
    %14 = arith.maximumf %9, %12 : vector<10x128xf32>
    %15 = arith.maximumf %13, %14 : vector<10x128xf32>
    %c0_13 = arith.constant 0 : index
    %c0_14 = arith.constant 0 : index
    %16 = vector.load %arg3[%c0_13, %c0_14] : memref<10x1xf32, #tpu.memory_space<vmem>>, vector<10x1xf32>
    %17 = vector.broadcast %16 : vector<10x1xf32> to vector<10x128xf32>
    %18 = arith.addf %15, %17 : vector<10x128xf32>
    %cst_15 = arith.constant 0.000000e+00 : f32
    %19 = vector.broadcast %cst_15 : f32 to vector<10x128xf32>
    %20 = arith.maximumf %18, %19 : vector<10x128xf32>
    %c0_16 = arith.constant 0 : index
    %c0_17 = arith.constant 0 : index
    %21 = vector.load %arg4[%c0_16, %c0_17] : memref<10x128xf32, #tpu.memory_space<vmem>>, vector<10x128xf32>
    tpu.vector_store %arg4[%c0_16, %c0_17], %20 {strides = array<i32>} : memref<10x128xf32, #tpu.memory_space<vmem>>, vector<10x128xf32>,
    return
  }
  func.func @transform_0(%arg0: i32) -> (i32, i32, i32) {
    %c0_i32 = arith.constant 0 : i32
    %c0_i32_0 = arith.constant 0 : i32
    %c0_i32_1 = arith.constant 0 : i32
    return %c0_i32, %c0_i32_0, %arg0 : i32, i32, i32
  }
  func.func @transform_1(%arg0: i32) -> (i32, i32) {
    %c0_i32 = arith.constant 0 : i32
    %c0_i32_0 = arith.constant 0 : i32
    %c0_i32_1 = arith.constant 0 : i32
    return %c0_i32, %c0_i32_0 : i32, i32
  }
  func.func @transform_2(%arg0: i32) -> (i32, i32) {
    %c0_i32 = arith.constant 0 : i32
    %c0_i32_0 = arith.constant 0 : i32
    %c0_i32_1 = arith.constant 0 : i32
    return %c0_i32, %c0_i32_0 : i32, i32
  }
  func.func @transform_3(%arg0: i32) -> (i32, i32) {
    %c0_i32 = arith.constant 0 : i32
    %c0_i32_0 = arith.constant 0 : i32
    return %c0_i32, %arg0 : i32, i32
  }
}

module attributes {stable_mosaic.version = 11 : i64} {
  func.func @kan_logsoftmax_kernel(%arg0: i32, %arg1: memref<8x256xf32, #tpu.memory_space<vmem>>, %arg2: memref<42x256xf32, #tpu.memory_space<vmem>>, %arg3: memref<9x256x128xf32, #tpu.memory_space<vmem>>, %arg4: memref<8x128xf32, #tpu.memory_space<vmem>>) attributes {dimension_semantics = [#tpu.dimension_semantics<parallel>], iteration_bounds = array<i64: 1>, scalar_prefetch = 0 : i64, scratch_operands = 0 : i64, tpu.core_type = #tpu.core_type<tc>, window_params = [{transform_indices = @transform_0, window_bounds = array<i64: 8, 256>}, {pipeline_mode = #tpu.pipeline_mode<synchronous>, transform_indices = @transform_1, window_bounds = array<i64: 42, 256>}, {pipeline_mode = #tpu.pipeline_mode<synchronous>, transform_indices = @transform_2, window_bounds = array<i64: 9, 256, 128>}, {transform_indices = @transform_3, window_bounds = array<i64: 8, 128>}]} {
    %c0 = arith.constant 0 : index
    %c0_0 = arith.constant 0 : index
    %0 = vector.load %arg1[%c0, %c0_0] : memref<8x256xf32, #tpu.memory_space<vmem>>, vector<8x256xf32>
    %c0_1 = arith.constant 0 : index
    %c0_2 = arith.constant 0 : index
    %1 = vector.load %arg2[%c0_1, %c0_2] : memref<42x256xf32, #tpu.memory_space<vmem>>, vector<42x256xf32>
    %cst = arith.constant 0.000000e+00 : f32
    %2 = vector.broadcast %cst : f32 to vector<8x256xf32>
    %3 = arith.subf %2, %0 : vector<8x256xf32>
    %4 = math.exp %3 : vector<8x256xf32>
    %cst_3 = arith.constant 1.000000e+00 : f32
    %5 = vector.broadcast %cst_3 : f32 to vector<8x256xf32>
    %6 = arith.addf %5, %4 : vector<8x256xf32>
    %cst_4 = arith.constant 1.000000e+00 : f32
    %7 = vector.broadcast %cst_4 : f32 to vector<8x256xf32>
    %8 = arith.divf %7, %6 : vector<8x256xf32>
    %9 = arith.mulf %0, %8 : vector<8x256xf32>
    %10 = vector.extract_strided_slice %1 {offsets = [0, 0], sizes = [1, 256], strides = [1, 1]} : vector<42x256xf32> to vector<1x256xf32>
    %11 = vector.broadcast %10 : vector<1x256xf32> to vector<8x256xf32>
    %12 = arith.cmpf oge, %0, %11 : vector<8x256xf32>
    %13 = vector.extract_strided_slice %1 {offsets = [1, 0], sizes = [1, 256], strides = [1, 1]} : vector<42x256xf32> to vector<1x256xf32>
    %14 = vector.broadcast %13 : vector<1x256xf32> to vector<8x256xf32>
    %15 = arith.cmpf olt, %0, %14 : vector<8x256xf32>
    %16 = arith.andi %12, %15 : vector<8x256xi1>
    %17 = arith.extui %16 : vector<8x256xi1> to vector<8x256xi32>
    %18 = arith.sitofp %17 : vector<8x256xi32> to vector<8x256xf32>
    %19 = vector.extract_strided_slice %1 {offsets = [1, 0], sizes = [1, 256], strides = [1, 1]} : vector<42x256xf32> to vector<1x256xf32>
    %20 = vector.broadcast %19 : vector<1x256xf32> to vector<8x256xf32>
    %21 = arith.cmpf oge, %0, %20 : vector<8x256xf32>
    %22 = vector.extract_strided_slice %1 {offsets = [2, 0], sizes = [1, 256], strides = [1, 1]} : vector<42x256xf32> to vector<1x256xf32>
    %23 = vector.broadcast %22 : vector<1x256xf32> to vector<8x256xf32>
    %24 = arith.cmpf olt, %0, %23 : vector<8x256xf32>
    %25 = arith.andi %21, %24 : vector<8x256xi1>
    %26 = arith.extui %25 : vector<8x256xi1> to vector<8x256xi32>
    %27 = arith.sitofp %26 : vector<8x256xi32> to vector<8x256xf32>
    %28 = vector.extract_strided_slice %1 {offsets = [2, 0], sizes = [1, 256], strides = [1, 1]} : vector<42x256xf32> to vector<1x256xf32>
    %29 = vector.broadcast %28 : vector<1x256xf32> to vector<8x256xf32>
    %30 = arith.cmpf oge, %0, %29 : vector<8x256xf32>
    %31 = vector.extract_strided_slice %1 {offsets = [3, 0], sizes = [1, 256], strides = [1, 1]} : vector<42x256xf32> to vector<1x256xf32>
    %32 = vector.broadcast %31 : vector<1x256xf32> to vector<8x256xf32>
    %33 = arith.cmpf olt, %0, %32 : vector<8x256xf32>
    %34 = arith.andi %30, %33 : vector<8x256xi1>
    %35 = arith.extui %34 : vector<8x256xi1> to vector<8x256xi32>
    %36 = arith.sitofp %35 : vector<8x256xi32> to vector<8x256xf32>
    %37 = vector.extract_strided_slice %1 {offsets = [3, 0], sizes = [1, 256], strides = [1, 1]} : vector<42x256xf32> to vector<1x256xf32>
    %38 = vector.broadcast %37 : vector<1x256xf32> to vector<8x256xf32>
    %39 = arith.cmpf oge, %0, %38 : vector<8x256xf32>
    %40 = vector.extract_strided_slice %1 {offsets = [4, 0], sizes = [1, 256], strides = [1, 1]} : vector<42x256xf32> to vector<1x256xf32>
    %41 = vector.broadcast %40 : vector<1x256xf32> to vector<8x256xf32>
    %42 = arith.cmpf olt, %0, %41 : vector<8x256xf32>
    %43 = arith.andi %39, %42 : vector<8x256xi1>
    %44 = arith.extui %43 : vector<8x256xi1> to vector<8x256xi32>
    %45 = arith.sitofp %44 : vector<8x256xi32> to vector<8x256xf32>
    %46 = vector.extract_strided_slice %1 {offsets = [4, 0], sizes = [1, 256], strides = [1, 1]} : vector<42x256xf32> to vector<1x256xf32>
    %47 = vector.broadcast %46 : vector<1x256xf32> to vector<8x256xf32>
    %48 = arith.cmpf oge, %0, %47 : vector<8x256xf32>
    %49 = vector.extract_strided_slice %1 {offsets = [5, 0], sizes = [1, 256], strides = [1, 1]} : vector<42x256xf32> to vector<1x256xf32>
    %50 = vector.broadcast %49 : vector<1x256xf32> to vector<8x256xf32>
    %51 = arith.cmpf olt, %0, %50 : vector<8x256xf32>
    %52 = arith.andi %48, %51 : vector<8x256xi1>
    %53 = arith.extui %52 : vector<8x256xi1> to vector<8x256xi32>
    %54 = arith.sitofp %53 : vector<8x256xi32> to vector<8x256xf32>
    %55 = vector.extract_strided_slice %1 {offsets = [5, 0], sizes = [1, 256], strides = [1, 1]} : vector<42x256xf32> to vector<1x256xf32>
    %56 = vector.broadcast %55 : vector<1x256xf32> to vector<8x256xf32>
    %57 = arith.cmpf oge, %0, %56 : vector<8x256xf32>
    %58 = vector.extract_strided_slice %1 {offsets = [6, 0], sizes = [1, 256], strides = [1, 1]} : vector<42x256xf32> to vector<1x256xf32>
    %59 = vector.broadcast %58 : vector<1x256xf32> to vector<8x256xf32>
    %60 = arith.cmpf olt, %0, %59 : vector<8x256xf32>
    %61 = arith.andi %57, %60 : vector<8x256xi1>
    %62 = arith.extui %61 : vector<8x256xi1> to vector<8x256xi32>
    %63 = arith.sitofp %62 : vector<8x256xi32> to vector<8x256xf32>
    %64 = vector.extract_strided_slice %1 {offsets = [6, 0], sizes = [1, 256], strides = [1, 1]} : vector<42x256xf32> to vector<1x256xf32>
    %65 = vector.broadcast %64 : vector<1x256xf32> to vector<8x256xf32>
    %66 = arith.cmpf oge, %0, %65 : vector<8x256xf32>
    %67 = vector.extract_strided_slice %1 {offsets = [7, 0], sizes = [1, 256], strides = [1, 1]} : vector<42x256xf32> to vector<1x256xf32>
    %68 = vector.broadcast %67 : vector<1x256xf32> to vector<8x256xf32>
    %69 = arith.cmpf olt, %0, %68 : vector<8x256xf32>
    %70 = arith.andi %66, %69 : vector<8x256xi1>
    %71 = arith.extui %70 : vector<8x256xi1> to vector<8x256xi32>
    %72 = arith.sitofp %71 : vector<8x256xi32> to vector<8x256xf32>
    %73 = vector.extract_strided_slice %1 {offsets = [7, 0], sizes = [1, 256], strides = [1, 1]} : vector<42x256xf32> to vector<1x256xf32>
    %74 = vector.broadcast %73 : vector<1x256xf32> to vector<8x256xf32>
    %75 = arith.cmpf oge, %0, %74 : vector<8x256xf32>
    %76 = vector.extract_strided_slice %1 {offsets = [8, 0], sizes = [1, 256], strides = [1, 1]} : vector<42x256xf32> to vector<1x256xf32>
    %77 = vector.broadcast %76 : vector<1x256xf32> to vector<8x256xf32>
    %78 = arith.cmpf olt, %0, %77 : vector<8x256xf32>
    %79 = arith.andi %75, %78 : vector<8x256xi1>
    %80 = arith.extui %79 : vector<8x256xi1> to vector<8x256xi32>
    %81 = arith.sitofp %80 : vector<8x256xi32> to vector<8x256xf32>
    %82 = vector.extract_strided_slice %1 {offsets = [8, 0], sizes = [1, 256], strides = [1, 1]} : vector<42x256xf32> to vector<1x256xf32>
    %83 = vector.broadcast %82 : vector<1x256xf32> to vector<8x256xf32>
    %84 = arith.cmpf oge, %0, %83 : vector<8x256xf32>
    %85 = vector.extract_strided_slice %1 {offsets = [9, 0], sizes = [1, 256], strides = [1, 1]} : vector<42x256xf32> to vector<1x256xf32>
    %86 = vector.broadcast %85 : vector<1x256xf32> to vector<8x256xf32>
    %87 = arith.cmpf olt, %0, %86 : vector<8x256xf32>
    %88 = arith.andi %84, %87 : vector<8x256xi1>
    %89 = arith.extui %88 : vector<8x256xi1> to vector<8x256xi32>
    %90 = arith.sitofp %89 : vector<8x256xi32> to vector<8x256xf32>
    %91 = vector.extract_strided_slice %1 {offsets = [9, 0], sizes = [1, 256], strides = [1, 1]} : vector<42x256xf32> to vector<1x256xf32>
    %92 = vector.broadcast %91 : vector<1x256xf32> to vector<8x256xf32>
    %93 = arith.cmpf oge, %0, %92 : vector<8x256xf32>
    %94 = vector.extract_strided_slice %1 {offsets = [10, 0], sizes = [1, 256], strides = [1, 1]} : vector<42x256xf32> to vector<1x256xf32>
    %95 = vector.broadcast %94 : vector<1x256xf32> to vector<8x256xf32>
    %96 = arith.cmpf olt, %0, %95 : vector<8x256xf32>
    %97 = arith.andi %93, %96 : vector<8x256xi1>
    %98 = arith.extui %97 : vector<8x256xi1> to vector<8x256xi32>
    %99 = arith.sitofp %98 : vector<8x256xi32> to vector<8x256xf32>
    %100 = vector.extract_strided_slice %1 {offsets = [10, 0], sizes = [1, 256], strides = [1, 1]} : vector<42x256xf32> to vector<1x256xf32>
    %101 = vector.broadcast %100 : vector<1x256xf32> to vector<8x256xf32>
    %102 = arith.cmpf oge, %0, %101 : vector<8x256xf32>
    %103 = vector.extract_strided_slice %1 {offsets = [11, 0], sizes = [1, 256], strides = [1, 1]} : vector<42x256xf32> to vector<1x256xf32>
    %104 = vector.broadcast %103 : vector<1x256xf32> to vector<8x256xf32>
    %105 = arith.cmpf olt, %0, %104 : vector<8x256xf32>
    %106 = arith.andi %102, %105 : vector<8x256xi1>
    %107 = arith.extui %106 : vector<8x256xi1> to vector<8x256xi32>
    %108 = arith.sitofp %107 : vector<8x256xi32> to vector<8x256xf32>
    %109 = vector.extract_strided_slice %1 {offsets = [0, 0], sizes = [1, 256], strides = [1, 1]} : vector<42x256xf32> to vector<1x256xf32>
    %110 = vector.broadcast %109 : vector<1x256xf32> to vector<8x256xf32>
    %111 = arith.subf %0, %110 : vector<8x256xf32>
    %112 = vector.extract_strided_slice %1 {offsets = [12, 0], sizes = [1, 256], strides = [1, 1]} : vector<42x256xf32> to vector<1x256xf32>
    %113 = vector.broadcast %112 : vector<1x256xf32> to vector<8x256xf32>
    %114 = arith.mulf %111, %113 : vector<8x256xf32>
    %115 = arith.mulf %114, %18 : vector<8x256xf32>
    %116 = vector.extract_strided_slice %1 {offsets = [2, 0], sizes = [1, 256], strides = [1, 1]} : vector<42x256xf32> to vector<1x256xf32>
    %117 = vector.broadcast %116 : vector<1x256xf32> to vector<8x256xf32>
    %118 = arith.subf %117, %0 : vector<8x256xf32>
    %119 = vector.extract_strided_slice %1 {offsets = [13, 0], sizes = [1, 256], strides = [1, 1]} : vector<42x256xf32> to vector<1x256xf32>
    %120 = vector.broadcast %119 : vector<1x256xf32> to vector<8x256xf32>
    %121 = arith.mulf %118, %120 : vector<8x256xf32>
    %122 = arith.mulf %121, %27 : vector<8x256xf32>
    %123 = arith.addf %115, %122 : vector<8x256xf32>
    %124 = vector.extract_strided_slice %1 {offsets = [1, 0], sizes = [1, 256], strides = [1, 1]} : vector<42x256xf32> to vector<1x256xf32>
    %125 = vector.broadcast %124 : vector<1x256xf32> to vector<8x256xf32>
    %126 = arith.subf %0, %125 : vector<8x256xf32>
    %127 = vector.extract_strided_slice %1 {offsets = [13, 0], sizes = [1, 256], strides = [1, 1]} : vector<42x256xf32> to vector<1x256xf32>
    %128 = vector.broadcast %127 : vector<1x256xf32> to vector<8x256xf32>
    %129 = arith.mulf %126, %128 : vector<8x256xf32>
    %130 = arith.mulf %129, %27 : vector<8x256xf32>
    %131 = vector.extract_strided_slice %1 {offsets = [3, 0], sizes = [1, 256], strides = [1, 1]} : vector<42x256xf32> to vector<1x256xf32>
    %132 = vector.broadcast %131 : vector<1x256xf32> to vector<8x256xf32>
    %133 = arith.subf %132, %0 : vector<8x256xf32>
    %134 = vector.extract_strided_slice %1 {offsets = [14, 0], sizes = [1, 256], strides = [1, 1]} : vector<42x256xf32> to vector<1x256xf32>
    %135 = vector.broadcast %134 : vector<1x256xf32> to vector<8x256xf32>
    %136 = arith.mulf %133, %135 : vector<8x256xf32>
    %137 = arith.mulf %136, %36 : vector<8x256xf32>
    %138 = arith.addf %130, %137 : vector<8x256xf32>
    %139 = vector.extract_strided_slice %1 {offsets = [2, 0], sizes = [1, 256], strides = [1, 1]} : vector<42x256xf32> to vector<1x256xf32>
    %140 = vector.broadcast %139 : vector<1x256xf32> to vector<8x256xf32>
    %141 = arith.subf %0, %140 : vector<8x256xf32>
    %142 = vector.extract_strided_slice %1 {offsets = [14, 0], sizes = [1, 256], strides = [1, 1]} : vector<42x256xf32> to vector<1x256xf32>
    %143 = vector.broadcast %142 : vector<1x256xf32> to vector<8x256xf32>
    %144 = arith.mulf %141, %143 : vector<8x256xf32>
    %145 = arith.mulf %144, %36 : vector<8x256xf32>
    %146 = vector.extract_strided_slice %1 {offsets = [4, 0], sizes = [1, 256], strides = [1, 1]} : vector<42x256xf32> to vector<1x256xf32>
    %147 = vector.broadcast %146 : vector<1x256xf32> to vector<8x256xf32>
    %148 = arith.subf %147, %0 : vector<8x256xf32>
    %149 = vector.extract_strided_slice %1 {offsets = [15, 0], sizes = [1, 256], strides = [1, 1]} : vector<42x256xf32> to vector<1x256xf32>
    %150 = vector.broadcast %149 : vector<1x256xf32> to vector<8x256xf32>
    %151 = arith.mulf %148, %150 : vector<8x256xf32>
    %152 = arith.mulf %151, %45 : vector<8x256xf32>
    %153 = arith.addf %145, %152 : vector<8x256xf32>
    %154 = vector.extract_strided_slice %1 {offsets = [3, 0], sizes = [1, 256], strides = [1, 1]} : vector<42x256xf32> to vector<1x256xf32>
    %155 = vector.broadcast %154 : vector<1x256xf32> to vector<8x256xf32>
    %156 = arith.subf %0, %155 : vector<8x256xf32>
    %157 = vector.extract_strided_slice %1 {offsets = [15, 0], sizes = [1, 256], strides = [1, 1]} : vector<42x256xf32> to vector<1x256xf32>
    %158 = vector.broadcast %157 : vector<1x256xf32> to vector<8x256xf32>
    %159 = arith.mulf %156, %158 : vector<8x256xf32>
    %160 = arith.mulf %159, %45 : vector<8x256xf32>
    %161 = vector.extract_strided_slice %1 {offsets = [5, 0], sizes = [1, 256], strides = [1, 1]} : vector<42x256xf32> to vector<1x256xf32>
    %162 = vector.broadcast %161 : vector<1x256xf32> to vector<8x256xf32>
    %163 = arith.subf %162, %0 : vector<8x256xf32>
    %164 = vector.extract_strided_slice %1 {offsets = [16, 0], sizes = [1, 256], strides = [1, 1]} : vector<42x256xf32> to vector<1x256xf32>
    %165 = vector.broadcast %164 : vector<1x256xf32> to vector<8x256xf32>
    %166 = arith.mulf %163, %165 : vector<8x256xf32>
    %167 = arith.mulf %166, %54 : vector<8x256xf32>
    %168 = arith.addf %160, %167 : vector<8x256xf32>
    %169 = vector.extract_strided_slice %1 {offsets = [4, 0], sizes = [1, 256], strides = [1, 1]} : vector<42x256xf32> to vector<1x256xf32>
    %170 = vector.broadcast %169 : vector<1x256xf32> to vector<8x256xf32>
    %171 = arith.subf %0, %170 : vector<8x256xf32>
    %172 = vector.extract_strided_slice %1 {offsets = [16, 0], sizes = [1, 256], strides = [1, 1]} : vector<42x256xf32> to vector<1x256xf32>
    %173 = vector.broadcast %172 : vector<1x256xf32> to vector<8x256xf32>
    %174 = arith.mulf %171, %173 : vector<8x256xf32>
    %175 = arith.mulf %174, %54 : vector<8x256xf32>
    %176 = vector.extract_strided_slice %1 {offsets = [6, 0], sizes = [1, 256], strides = [1, 1]} : vector<42x256xf32> to vector<1x256xf32>
    %177 = vector.broadcast %176 : vector<1x256xf32> to vector<8x256xf32>
    %178 = arith.subf %177, %0 : vector<8x256xf32>
    %179 = vector.extract_strided_slice %1 {offsets = [17, 0], sizes = [1, 256], strides = [1, 1]} : vector<42x256xf32> to vector<1x256xf32>
    %180 = vector.broadcast %179 : vector<1x256xf32> to vector<8x256xf32>
    %181 = arith.mulf %178, %180 : vector<8x256xf32>
    %182 = arith.mulf %181, %63 : vector<8x256xf32>
    %183 = arith.addf %175, %182 : vector<8x256xf32>
    %184 = vector.extract_strided_slice %1 {offsets = [5, 0], sizes = [1, 256], strides = [1, 1]} : vector<42x256xf32> to vector<1x256xf32>
    %185 = vector.broadcast %184 : vector<1x256xf32> to vector<8x256xf32>
    %186 = arith.subf %0, %185 : vector<8x256xf32>
    %187 = vector.extract_strided_slice %1 {offsets = [17, 0], sizes = [1, 256], strides = [1, 1]} : vector<42x256xf32> to vector<1x256xf32>
    %188 = vector.broadcast %187 : vector<1x256xf32> to vector<8x256xf32>
    %189 = arith.mulf %186, %188 : vector<8x256xf32>
    %190 = arith.mulf %189, %63 : vector<8x256xf32>
    %191 = vector.extract_strided_slice %1 {offsets = [7, 0], sizes = [1, 256], strides = [1, 1]} : vector<42x256xf32> to vector<1x256xf32>
    %192 = vector.broadcast %191 : vector<1x256xf32> to vector<8x256xf32>
    %193 = arith.subf %192, %0 : vector<8x256xf32>
    %194 = vector.extract_strided_slice %1 {offsets = [18, 0], sizes = [1, 256], strides = [1, 1]} : vector<42x256xf32> to vector<1x256xf32>
    %195 = vector.broadcast %194 : vector<1x256xf32> to vector<8x256xf32>
    %196 = arith.mulf %193, %195 : vector<8x256xf32>
    %197 = arith.mulf %196, %72 : vector<8x256xf32>
    %198 = arith.addf %190, %197 : vector<8x256xf32>
    %199 = vector.extract_strided_slice %1 {offsets = [6, 0], sizes = [1, 256], strides = [1, 1]} : vector<42x256xf32> to vector<1x256xf32>
    %200 = vector.broadcast %199 : vector<1x256xf32> to vector<8x256xf32>
    %201 = arith.subf %0, %200 : vector<8x256xf32>
    %202 = vector.extract_strided_slice %1 {offsets = [18, 0], sizes = [1, 256], strides = [1, 1]} : vector<42x256xf32> to vector<1x256xf32>
    %203 = vector.broadcast %202 : vector<1x256xf32> to vector<8x256xf32>
    %204 = arith.mulf %201, %203 : vector<8x256xf32>
    %205 = arith.mulf %204, %72 : vector<8x256xf32>
    %206 = vector.extract_strided_slice %1 {offsets = [8, 0], sizes = [1, 256], strides = [1, 1]} : vector<42x256xf32> to vector<1x256xf32>
    %207 = vector.broadcast %206 : vector<1x256xf32> to vector<8x256xf32>
    %208 = arith.subf %207, %0 : vector<8x256xf32>
    %209 = vector.extract_strided_slice %1 {offsets = [19, 0], sizes = [1, 256], strides = [1, 1]} : vector<42x256xf32> to vector<1x256xf32>
    %210 = vector.broadcast %209 : vector<1x256xf32> to vector<8x256xf32>
    %211 = arith.mulf %208, %210 : vector<8x256xf32>
    %212 = arith.mulf %211, %81 : vector<8x256xf32>
    %213 = arith.addf %205, %212 : vector<8x256xf32>
    %214 = vector.extract_strided_slice %1 {offsets = [7, 0], sizes = [1, 256], strides = [1, 1]} : vector<42x256xf32> to vector<1x256xf32>
    %215 = vector.broadcast %214 : vector<1x256xf32> to vector<8x256xf32>
    %216 = arith.subf %0, %215 : vector<8x256xf32>
    %217 = vector.extract_strided_slice %1 {offsets = [19, 0], sizes = [1, 256], strides = [1, 1]} : vector<42x256xf32> to vector<1x256xf32>
    %218 = vector.broadcast %217 : vector<1x256xf32> to vector<8x256xf32>
    %219 = arith.mulf %216, %218 : vector<8x256xf32>
    %220 = arith.mulf %219, %81 : vector<8x256xf32>
    %221 = vector.extract_strided_slice %1 {offsets = [9, 0], sizes = [1, 256], strides = [1, 1]} : vector<42x256xf32> to vector<1x256xf32>
    %222 = vector.broadcast %221 : vector<1x256xf32> to vector<8x256xf32>
    %223 = arith.subf %222, %0 : vector<8x256xf32>
    %224 = vector.extract_strided_slice %1 {offsets = [20, 0], sizes = [1, 256], strides = [1, 1]} : vector<42x256xf32> to vector<1x256xf32>
    %225 = vector.broadcast %224 : vector<1x256xf32> to vector<8x256xf32>
    %226 = arith.mulf %223, %225 : vector<8x256xf32>
    %227 = arith.mulf %226, %90 : vector<8x256xf32>
    %228 = arith.addf %220, %227 : vector<8x256xf32>
    %229 = vector.extract_strided_slice %1 {offsets = [8, 0], sizes = [1, 256], strides = [1, 1]} : vector<42x256xf32> to vector<1x256xf32>
    %230 = vector.broadcast %229 : vector<1x256xf32> to vector<8x256xf32>
    %231 = arith.subf %0, %230 : vector<8x256xf32>
    %232 = vector.extract_strided_slice %1 {offsets = [20, 0], sizes = [1, 256], strides = [1, 1]} : vector<42x256xf32> to vector<1x256xf32>
    %233 = vector.broadcast %232 : vector<1x256xf32> to vector<8x256xf32>
    %234 = arith.mulf %231, %233 : vector<8x256xf32>
    %235 = arith.mulf %234, %90 : vector<8x256xf32>
    %236 = vector.extract_strided_slice %1 {offsets = [10, 0], sizes = [1, 256], strides = [1, 1]} : vector<42x256xf32> to vector<1x256xf32>
    %237 = vector.broadcast %236 : vector<1x256xf32> to vector<8x256xf32>
    %238 = arith.subf %237, %0 : vector<8x256xf32>
    %239 = vector.extract_strided_slice %1 {offsets = [21, 0], sizes = [1, 256], strides = [1, 1]} : vector<42x256xf32> to vector<1x256xf32>
    %240 = vector.broadcast %239 : vector<1x256xf32> to vector<8x256xf32>
    %241 = arith.mulf %238, %240 : vector<8x256xf32>
    %242 = arith.mulf %241, %99 : vector<8x256xf32>
    %243 = arith.addf %235, %242 : vector<8x256xf32>
    %244 = vector.extract_strided_slice %1 {offsets = [9, 0], sizes = [1, 256], strides = [1, 1]} : vector<42x256xf32> to vector<1x256xf32>
    %245 = vector.broadcast %244 : vector<1x256xf32> to vector<8x256xf32>
    %246 = arith.subf %0, %245 : vector<8x256xf32>
    %247 = vector.extract_strided_slice %1 {offsets = [21, 0], sizes = [1, 256], strides = [1, 1]} : vector<42x256xf32> to vector<1x256xf32>
    %248 = vector.broadcast %247 : vector<1x256xf32> to vector<8x256xf32>
    %249 = arith.mulf %246, %248 : vector<8x256xf32>
    %250 = arith.mulf %249, %99 : vector<8x256xf32>
    %251 = vector.extract_strided_slice %1 {offsets = [11, 0], sizes = [1, 256], strides = [1, 1]} : vector<42x256xf32> to vector<1x256xf32>
    %252 = vector.broadcast %251 : vector<1x256xf32> to vector<8x256xf32>
    %253 = arith.subf %252, %0 : vector<8x256xf32>
    %254 = vector.extract_strided_slice %1 {offsets = [22, 0], sizes = [1, 256], strides = [1, 1]} : vector<42x256xf32> to vector<1x256xf32>
    %255 = vector.broadcast %254 : vector<1x256xf32> to vector<8x256xf32>
    %256 = arith.mulf %253, %255 : vector<8x256xf32>
    %257 = arith.mulf %256, %108 : vector<8x256xf32>
    %258 = arith.addf %250, %257 : vector<8x256xf32>
    %259 = vector.extract_strided_slice %1 {offsets = [0, 0], sizes = [1, 256], strides = [1, 1]} : vector<42x256xf32> to vector<1x256xf32>
    %260 = vector.broadcast %259 : vector<1x256xf32> to vector<8x256xf32>
    %261 = arith.subf %0, %260 : vector<8x256xf32>
    %262 = vector.extract_strided_slice %1 {offsets = [23, 0], sizes = [1, 256], strides = [1, 1]} : vector<42x256xf32> to vector<1x256xf32>
    %263 = vector.broadcast %262 : vector<1x256xf32> to vector<8x256xf32>
    %264 = arith.mulf %261, %263 : vector<8x256xf32>
    %265 = arith.mulf %264, %123 : vector<8x256xf32>
    %266 = vector.extract_strided_slice %1 {offsets = [3, 0], sizes = [1, 256], strides = [1, 1]} : vector<42x256xf32> to vector<1x256xf32>
    %267 = vector.broadcast %266 : vector<1x256xf32> to vector<8x256xf32>
    %268 = arith.subf %267, %0 : vector<8x256xf32>
    %269 = vector.extract_strided_slice %1 {offsets = [24, 0], sizes = [1, 256], strides = [1, 1]} : vector<42x256xf32> to vector<1x256xf32>
    %270 = vector.broadcast %269 : vector<1x256xf32> to vector<8x256xf32>
    %271 = arith.mulf %268, %270 : vector<8x256xf32>
    %272 = arith.mulf %271, %138 : vector<8x256xf32>
    %273 = arith.addf %265, %272 : vector<8x256xf32>
    %274 = vector.extract_strided_slice %1 {offsets = [1, 0], sizes = [1, 256], strides = [1, 1]} : vector<42x256xf32> to vector<1x256xf32>
    %275 = vector.broadcast %274 : vector<1x256xf32> to vector<8x256xf32>
    %276 = arith.subf %0, %275 : vector<8x256xf32>
    %277 = vector.extract_strided_slice %1 {offsets = [24, 0], sizes = [1, 256], strides = [1, 1]} : vector<42x256xf32> to vector<1x256xf32>
    %278 = vector.broadcast %277 : vector<1x256xf32> to vector<8x256xf32>
    %279 = arith.mulf %276, %278 : vector<8x256xf32>
    %280 = arith.mulf %279, %138 : vector<8x256xf32>
    %281 = vector.extract_strided_slice %1 {offsets = [4, 0], sizes = [1, 256], strides = [1, 1]} : vector<42x256xf32> to vector<1x256xf32>
    %282 = vector.broadcast %281 : vector<1x256xf32> to vector<8x256xf32>
    %283 = arith.subf %282, %0 : vector<8x256xf32>
    %284 = vector.extract_strided_slice %1 {offsets = [25, 0], sizes = [1, 256], strides = [1, 1]} : vector<42x256xf32> to vector<1x256xf32>
    %285 = vector.broadcast %284 : vector<1x256xf32> to vector<8x256xf32>
    %286 = arith.mulf %283, %285 : vector<8x256xf32>
    %287 = arith.mulf %286, %153 : vector<8x256xf32>
    %288 = arith.addf %280, %287 : vector<8x256xf32>
    %289 = vector.extract_strided_slice %1 {offsets = [2, 0], sizes = [1, 256], strides = [1, 1]} : vector<42x256xf32> to vector<1x256xf32>
    %290 = vector.broadcast %289 : vector<1x256xf32> to vector<8x256xf32>
    %291 = arith.subf %0, %290 : vector<8x256xf32>
    %292 = vector.extract_strided_slice %1 {offsets = [25, 0], sizes = [1, 256], strides = [1, 1]} : vector<42x256xf32> to vector<1x256xf32>
    %293 = vector.broadcast %292 : vector<1x256xf32> to vector<8x256xf32>
    %294 = arith.mulf %291, %293 : vector<8x256xf32>
    %295 = arith.mulf %294, %153 : vector<8x256xf32>
    %296 = vector.extract_strided_slice %1 {offsets = [5, 0], sizes = [1, 256], strides = [1, 1]} : vector<42x256xf32> to vector<1x256xf32>
    %297 = vector.broadcast %296 : vector<1x256xf32> to vector<8x256xf32>
    %298 = arith.subf %297, %0 : vector<8x256xf32>
    %299 = vector.extract_strided_slice %1 {offsets = [26, 0], sizes = [1, 256], strides = [1, 1]} : vector<42x256xf32> to vector<1x256xf32>
    %300 = vector.broadcast %299 : vector<1x256xf32> to vector<8x256xf32>
    %301 = arith.mulf %298, %300 : vector<8x256xf32>
    %302 = arith.mulf %301, %168 : vector<8x256xf32>
    %303 = arith.addf %295, %302 : vector<8x256xf32>
    %304 = vector.extract_strided_slice %1 {offsets = [3, 0], sizes = [1, 256], strides = [1, 1]} : vector<42x256xf32> to vector<1x256xf32>
    %305 = vector.broadcast %304 : vector<1x256xf32> to vector<8x256xf32>
    %306 = arith.subf %0, %305 : vector<8x256xf32>
    %307 = vector.extract_strided_slice %1 {offsets = [26, 0], sizes = [1, 256], strides = [1, 1]} : vector<42x256xf32> to vector<1x256xf32>
    %308 = vector.broadcast %307 : vector<1x256xf32> to vector<8x256xf32>
    %309 = arith.mulf %306, %308 : vector<8x256xf32>
    %310 = arith.mulf %309, %168 : vector<8x256xf32>
    %311 = vector.extract_strided_slice %1 {offsets = [6, 0], sizes = [1, 256], strides = [1, 1]} : vector<42x256xf32> to vector<1x256xf32>
    %312 = vector.broadcast %311 : vector<1x256xf32> to vector<8x256xf32>
    %313 = arith.subf %312, %0 : vector<8x256xf32>
    %314 = vector.extract_strided_slice %1 {offsets = [27, 0], sizes = [1, 256], strides = [1, 1]} : vector<42x256xf32> to vector<1x256xf32>
    %315 = vector.broadcast %314 : vector<1x256xf32> to vector<8x256xf32>
    %316 = arith.mulf %313, %315 : vector<8x256xf32>
    %317 = arith.mulf %316, %183 : vector<8x256xf32>
    %318 = arith.addf %310, %317 : vector<8x256xf32>
    %319 = vector.extract_strided_slice %1 {offsets = [4, 0], sizes = [1, 256], strides = [1, 1]} : vector<42x256xf32> to vector<1x256xf32>
    %320 = vector.broadcast %319 : vector<1x256xf32> to vector<8x256xf32>
    %321 = arith.subf %0, %320 : vector<8x256xf32>
    %322 = vector.extract_strided_slice %1 {offsets = [27, 0], sizes = [1, 256], strides = [1, 1]} : vector<42x256xf32> to vector<1x256xf32>
    %323 = vector.broadcast %322 : vector<1x256xf32> to vector<8x256xf32>
    %324 = arith.mulf %321, %323 : vector<8x256xf32>
    %325 = arith.mulf %324, %183 : vector<8x256xf32>
    %326 = vector.extract_strided_slice %1 {offsets = [7, 0], sizes = [1, 256], strides = [1, 1]} : vector<42x256xf32> to vector<1x256xf32>
    %327 = vector.broadcast %326 : vector<1x256xf32> to vector<8x256xf32>
    %328 = arith.subf %327, %0 : vector<8x256xf32>
    %329 = vector.extract_strided_slice %1 {offsets = [28, 0], sizes = [1, 256], strides = [1, 1]} : vector<42x256xf32> to vector<1x256xf32>
    %330 = vector.broadcast %329 : vector<1x256xf32> to vector<8x256xf32>
    %331 = arith.mulf %328, %330 : vector<8x256xf32>
    %332 = arith.mulf %331, %198 : vector<8x256xf32>
    %333 = arith.addf %325, %332 : vector<8x256xf32>
    %334 = vector.extract_strided_slice %1 {offsets = [5, 0], sizes = [1, 256], strides = [1, 1]} : vector<42x256xf32> to vector<1x256xf32>
    %335 = vector.broadcast %334 : vector<1x256xf32> to vector<8x256xf32>
    %336 = arith.subf %0, %335 : vector<8x256xf32>
    %337 = vector.extract_strided_slice %1 {offsets = [28, 0], sizes = [1, 256], strides = [1, 1]} : vector<42x256xf32> to vector<1x256xf32>
    %338 = vector.broadcast %337 : vector<1x256xf32> to vector<8x256xf32>
    %339 = arith.mulf %336, %338 : vector<8x256xf32>
    %340 = arith.mulf %339, %198 : vector<8x256xf32>
    %341 = vector.extract_strided_slice %1 {offsets = [8, 0], sizes = [1, 256], strides = [1, 1]} : vector<42x256xf32> to vector<1x256xf32>
    %342 = vector.broadcast %341 : vector<1x256xf32> to vector<8x256xf32>
    %343 = arith.subf %342, %0 : vector<8x256xf32>
    %344 = vector.extract_strided_slice %1 {offsets = [29, 0], sizes = [1, 256], strides = [1, 1]} : vector<42x256xf32> to vector<1x256xf32>
    %345 = vector.broadcast %344 : vector<1x256xf32> to vector<8x256xf32>
    %346 = arith.mulf %343, %345 : vector<8x256xf32>
    %347 = arith.mulf %346, %213 : vector<8x256xf32>
    %348 = arith.addf %340, %347 : vector<8x256xf32>
    %349 = vector.extract_strided_slice %1 {offsets = [6, 0], sizes = [1, 256], strides = [1, 1]} : vector<42x256xf32> to vector<1x256xf32>
    %350 = vector.broadcast %349 : vector<1x256xf32> to vector<8x256xf32>
    %351 = arith.subf %0, %350 : vector<8x256xf32>
    %352 = vector.extract_strided_slice %1 {offsets = [29, 0], sizes = [1, 256], strides = [1, 1]} : vector<42x256xf32> to vector<1x256xf32>
    %353 = vector.broadcast %352 : vector<1x256xf32> to vector<8x256xf32>
    %354 = arith.mulf %351, %353 : vector<8x256xf32>
    %355 = arith.mulf %354, %213 : vector<8x256xf32>
    %356 = vector.extract_strided_slice %1 {offsets = [9, 0], sizes = [1, 256], strides = [1, 1]} : vector<42x256xf32> to vector<1x256xf32>
    %357 = vector.broadcast %356 : vector<1x256xf32> to vector<8x256xf32>
    %358 = arith.subf %357, %0 : vector<8x256xf32>
    %359 = vector.extract_strided_slice %1 {offsets = [30, 0], sizes = [1, 256], strides = [1, 1]} : vector<42x256xf32> to vector<1x256xf32>
    %360 = vector.broadcast %359 : vector<1x256xf32> to vector<8x256xf32>
    %361 = arith.mulf %358, %360 : vector<8x256xf32>
    %362 = arith.mulf %361, %228 : vector<8x256xf32>
    %363 = arith.addf %355, %362 : vector<8x256xf32>
    %364 = vector.extract_strided_slice %1 {offsets = [7, 0], sizes = [1, 256], strides = [1, 1]} : vector<42x256xf32> to vector<1x256xf32>
    %365 = vector.broadcast %364 : vector<1x256xf32> to vector<8x256xf32>
    %366 = arith.subf %0, %365 : vector<8x256xf32>
    %367 = vector.extract_strided_slice %1 {offsets = [30, 0], sizes = [1, 256], strides = [1, 1]} : vector<42x256xf32> to vector<1x256xf32>
    %368 = vector.broadcast %367 : vector<1x256xf32> to vector<8x256xf32>
    %369 = arith.mulf %366, %368 : vector<8x256xf32>
    %370 = arith.mulf %369, %228 : vector<8x256xf32>
    %371 = vector.extract_strided_slice %1 {offsets = [10, 0], sizes = [1, 256], strides = [1, 1]} : vector<42x256xf32> to vector<1x256xf32>
    %372 = vector.broadcast %371 : vector<1x256xf32> to vector<8x256xf32>
    %373 = arith.subf %372, %0 : vector<8x256xf32>
    %374 = vector.extract_strided_slice %1 {offsets = [31, 0], sizes = [1, 256], strides = [1, 1]} : vector<42x256xf32> to vector<1x256xf32>
    %375 = vector.broadcast %374 : vector<1x256xf32> to vector<8x256xf32>
    %376 = arith.mulf %373, %375 : vector<8x256xf32>
    %377 = arith.mulf %376, %243 : vector<8x256xf32>
    %378 = arith.addf %370, %377 : vector<8x256xf32>
    %379 = vector.extract_strided_slice %1 {offsets = [8, 0], sizes = [1, 256], strides = [1, 1]} : vector<42x256xf32> to vector<1x256xf32>
    %380 = vector.broadcast %379 : vector<1x256xf32> to vector<8x256xf32>
    %381 = arith.subf %0, %380 : vector<8x256xf32>
    %382 = vector.extract_strided_slice %1 {offsets = [31, 0], sizes = [1, 256], strides = [1, 1]} : vector<42x256xf32> to vector<1x256xf32>
    %383 = vector.broadcast %382 : vector<1x256xf32> to vector<8x256xf32>
    %384 = arith.mulf %381, %383 : vector<8x256xf32>
    %385 = arith.mulf %384, %243 : vector<8x256xf32>
    %386 = vector.extract_strided_slice %1 {offsets = [11, 0], sizes = [1, 256], strides = [1, 1]} : vector<42x256xf32> to vector<1x256xf32>
    %387 = vector.broadcast %386 : vector<1x256xf32> to vector<8x256xf32>
    %388 = arith.subf %387, %0 : vector<8x256xf32>
    %389 = vector.extract_strided_slice %1 {offsets = [32, 0], sizes = [1, 256], strides = [1, 1]} : vector<42x256xf32> to vector<1x256xf32>
    %390 = vector.broadcast %389 : vector<1x256xf32> to vector<8x256xf32>
    %391 = arith.mulf %388, %390 : vector<8x256xf32>
    %392 = arith.mulf %391, %258 : vector<8x256xf32>
    %393 = arith.addf %385, %392 : vector<8x256xf32>
    %394 = vector.extract_strided_slice %1 {offsets = [0, 0], sizes = [1, 256], strides = [1, 1]} : vector<42x256xf32> to vector<1x256xf32>
    %395 = vector.broadcast %394 : vector<1x256xf32> to vector<8x256xf32>
    %396 = arith.subf %0, %395 : vector<8x256xf32>
    %397 = vector.extract_strided_slice %1 {offsets = [33, 0], sizes = [1, 256], strides = [1, 1]} : vector<42x256xf32> to vector<1x256xf32>
    %398 = vector.broadcast %397 : vector<1x256xf32> to vector<8x256xf32>
    %399 = arith.mulf %396, %398 : vector<8x256xf32>
    %400 = arith.mulf %399, %273 : vector<8x256xf32>
    %401 = vector.extract_strided_slice %1 {offsets = [4, 0], sizes = [1, 256], strides = [1, 1]} : vector<42x256xf32> to vector<1x256xf32>
    %402 = vector.broadcast %401 : vector<1x256xf32> to vector<8x256xf32>
    %403 = arith.subf %402, %0 : vector<8x256xf32>
    %404 = vector.extract_strided_slice %1 {offsets = [34, 0], sizes = [1, 256], strides = [1, 1]} : vector<42x256xf32> to vector<1x256xf32>
    %405 = vector.broadcast %404 : vector<1x256xf32> to vector<8x256xf32>
    %406 = arith.mulf %403, %405 : vector<8x256xf32>
    %407 = arith.mulf %406, %288 : vector<8x256xf32>
    %408 = arith.addf %400, %407 : vector<8x256xf32>
    %409 = vector.extract_strided_slice %1 {offsets = [1, 0], sizes = [1, 256], strides = [1, 1]} : vector<42x256xf32> to vector<1x256xf32>
    %410 = vector.broadcast %409 : vector<1x256xf32> to vector<8x256xf32>
    %411 = arith.subf %0, %410 : vector<8x256xf32>
    %412 = vector.extract_strided_slice %1 {offsets = [34, 0], sizes = [1, 256], strides = [1, 1]} : vector<42x256xf32> to vector<1x256xf32>
    %413 = vector.broadcast %412 : vector<1x256xf32> to vector<8x256xf32>
    %414 = arith.mulf %411, %413 : vector<8x256xf32>
    %415 = arith.mulf %414, %288 : vector<8x256xf32>
    %416 = vector.extract_strided_slice %1 {offsets = [5, 0], sizes = [1, 256], strides = [1, 1]} : vector<42x256xf32> to vector<1x256xf32>
    %417 = vector.broadcast %416 : vector<1x256xf32> to vector<8x256xf32>
    %418 = arith.subf %417, %0 : vector<8x256xf32>
    %419 = vector.extract_strided_slice %1 {offsets = [35, 0], sizes = [1, 256], strides = [1, 1]} : vector<42x256xf32> to vector<1x256xf32>
    %420 = vector.broadcast %419 : vector<1x256xf32> to vector<8x256xf32>
    %421 = arith.mulf %418, %420 : vector<8x256xf32>
    %422 = arith.mulf %421, %303 : vector<8x256xf32>
    %423 = arith.addf %415, %422 : vector<8x256xf32>
    %424 = vector.extract_strided_slice %1 {offsets = [2, 0], sizes = [1, 256], strides = [1, 1]} : vector<42x256xf32> to vector<1x256xf32>
    %425 = vector.broadcast %424 : vector<1x256xf32> to vector<8x256xf32>
    %426 = arith.subf %0, %425 : vector<8x256xf32>
    %427 = vector.extract_strided_slice %1 {offsets = [35, 0], sizes = [1, 256], strides = [1, 1]} : vector<42x256xf32> to vector<1x256xf32>
    %428 = vector.broadcast %427 : vector<1x256xf32> to vector<8x256xf32>
    %429 = arith.mulf %426, %428 : vector<8x256xf32>
    %430 = arith.mulf %429, %303 : vector<8x256xf32>
    %431 = vector.extract_strided_slice %1 {offsets = [6, 0], sizes = [1, 256], strides = [1, 1]} : vector<42x256xf32> to vector<1x256xf32>
    %432 = vector.broadcast %431 : vector<1x256xf32> to vector<8x256xf32>
    %433 = arith.subf %432, %0 : vector<8x256xf32>
    %434 = vector.extract_strided_slice %1 {offsets = [36, 0], sizes = [1, 256], strides = [1, 1]} : vector<42x256xf32> to vector<1x256xf32>
    %435 = vector.broadcast %434 : vector<1x256xf32> to vector<8x256xf32>
    %436 = arith.mulf %433, %435 : vector<8x256xf32>
    %437 = arith.mulf %436, %318 : vector<8x256xf32>
    %438 = arith.addf %430, %437 : vector<8x256xf32>
    %439 = vector.extract_strided_slice %1 {offsets = [3, 0], sizes = [1, 256], strides = [1, 1]} : vector<42x256xf32> to vector<1x256xf32>
    %440 = vector.broadcast %439 : vector<1x256xf32> to vector<8x256xf32>
    %441 = arith.subf %0, %440 : vector<8x256xf32>
    %442 = vector.extract_strided_slice %1 {offsets = [36, 0], sizes = [1, 256], strides = [1, 1]} : vector<42x256xf32> to vector<1x256xf32>
    %443 = vector.broadcast %442 : vector<1x256xf32> to vector<8x256xf32>
    %444 = arith.mulf %441, %443 : vector<8x256xf32>
    %445 = arith.mulf %444, %318 : vector<8x256xf32>
    %446 = vector.extract_strided_slice %1 {offsets = [7, 0], sizes = [1, 256], strides = [1, 1]} : vector<42x256xf32> to vector<1x256xf32>
    %447 = vector.broadcast %446 : vector<1x256xf32> to vector<8x256xf32>
    %448 = arith.subf %447, %0 : vector<8x256xf32>
    %449 = vector.extract_strided_slice %1 {offsets = [37, 0], sizes = [1, 256], strides = [1, 1]} : vector<42x256xf32> to vector<1x256xf32>
    %450 = vector.broadcast %449 : vector<1x256xf32> to vector<8x256xf32>
    %451 = arith.mulf %448, %450 : vector<8x256xf32>
    %452 = arith.mulf %451, %333 : vector<8x256xf32>
    %453 = arith.addf %445, %452 : vector<8x256xf32>
    %454 = vector.extract_strided_slice %1 {offsets = [4, 0], sizes = [1, 256], strides = [1, 1]} : vector<42x256xf32> to vector<1x256xf32>
    %455 = vector.broadcast %454 : vector<1x256xf32> to vector<8x256xf32>
    %456 = arith.subf %0, %455 : vector<8x256xf32>
    %457 = vector.extract_strided_slice %1 {offsets = [37, 0], sizes = [1, 256], strides = [1, 1]} : vector<42x256xf32> to vector<1x256xf32>
    %458 = vector.broadcast %457 : vector<1x256xf32> to vector<8x256xf32>
    %459 = arith.mulf %456, %458 : vector<8x256xf32>
    %460 = arith.mulf %459, %333 : vector<8x256xf32>
    %461 = vector.extract_strided_slice %1 {offsets = [8, 0], sizes = [1, 256], strides = [1, 1]} : vector<42x256xf32> to vector<1x256xf32>
    %462 = vector.broadcast %461 : vector<1x256xf32> to vector<8x256xf32>
    %463 = arith.subf %462, %0 : vector<8x256xf32>
    %464 = vector.extract_strided_slice %1 {offsets = [38, 0], sizes = [1, 256], strides = [1, 1]} : vector<42x256xf32> to vector<1x256xf32>
    %465 = vector.broadcast %464 : vector<1x256xf32> to vector<8x256xf32>
    %466 = arith.mulf %463, %465 : vector<8x256xf32>
    %467 = arith.mulf %466, %348 : vector<8x256xf32>
    %468 = arith.addf %460, %467 : vector<8x256xf32>
    %469 = vector.extract_strided_slice %1 {offsets = [5, 0], sizes = [1, 256], strides = [1, 1]} : vector<42x256xf32> to vector<1x256xf32>
    %470 = vector.broadcast %469 : vector<1x256xf32> to vector<8x256xf32>
    %471 = arith.subf %0, %470 : vector<8x256xf32>
    %472 = vector.extract_strided_slice %1 {offsets = [38, 0], sizes = [1, 256], strides = [1, 1]} : vector<42x256xf32> to vector<1x256xf32>
    %473 = vector.broadcast %472 : vector<1x256xf32> to vector<8x256xf32>
    %474 = arith.mulf %471, %473 : vector<8x256xf32>
    %475 = arith.mulf %474, %348 : vector<8x256xf32>
    %476 = vector.extract_strided_slice %1 {offsets = [9, 0], sizes = [1, 256], strides = [1, 1]} : vector<42x256xf32> to vector<1x256xf32>
    %477 = vector.broadcast %476 : vector<1x256xf32> to vector<8x256xf32>
    %478 = arith.subf %477, %0 : vector<8x256xf32>
    %479 = vector.extract_strided_slice %1 {offsets = [39, 0], sizes = [1, 256], strides = [1, 1]} : vector<42x256xf32> to vector<1x256xf32>
    %480 = vector.broadcast %479 : vector<1x256xf32> to vector<8x256xf32>
    %481 = arith.mulf %478, %480 : vector<8x256xf32>
    %482 = arith.mulf %481, %363 : vector<8x256xf32>
    %483 = arith.addf %475, %482 : vector<8x256xf32>
    %484 = vector.extract_strided_slice %1 {offsets = [6, 0], sizes = [1, 256], strides = [1, 1]} : vector<42x256xf32> to vector<1x256xf32>
    %485 = vector.broadcast %484 : vector<1x256xf32> to vector<8x256xf32>
    %486 = arith.subf %0, %485 : vector<8x256xf32>
    %487 = vector.extract_strided_slice %1 {offsets = [39, 0], sizes = [1, 256], strides = [1, 1]} : vector<42x256xf32> to vector<1x256xf32>
    %488 = vector.broadcast %487 : vector<1x256xf32> to vector<8x256xf32>
    %489 = arith.mulf %486, %488 : vector<8x256xf32>
    %490 = arith.mulf %489, %363 : vector<8x256xf32>
    %491 = vector.extract_strided_slice %1 {offsets = [10, 0], sizes = [1, 256], strides = [1, 1]} : vector<42x256xf32> to vector<1x256xf32>
    %492 = vector.broadcast %491 : vector<1x256xf32> to vector<8x256xf32>
    %493 = arith.subf %492, %0 : vector<8x256xf32>
    %494 = vector.extract_strided_slice %1 {offsets = [40, 0], sizes = [1, 256], strides = [1, 1]} : vector<42x256xf32> to vector<1x256xf32>
    %495 = vector.broadcast %494 : vector<1x256xf32> to vector<8x256xf32>
    %496 = arith.mulf %493, %495 : vector<8x256xf32>
    %497 = arith.mulf %496, %378 : vector<8x256xf32>
    %498 = arith.addf %490, %497 : vector<8x256xf32>
    %499 = vector.extract_strided_slice %1 {offsets = [7, 0], sizes = [1, 256], strides = [1, 1]} : vector<42x256xf32> to vector<1x256xf32>
    %500 = vector.broadcast %499 : vector<1x256xf32> to vector<8x256xf32>
    %501 = arith.subf %0, %500 : vector<8x256xf32>
    %502 = vector.extract_strided_slice %1 {offsets = [40, 0], sizes = [1, 256], strides = [1, 1]} : vector<42x256xf32> to vector<1x256xf32>
    %503 = vector.broadcast %502 : vector<1x256xf32> to vector<8x256xf32>
    %504 = arith.mulf %501, %503 : vector<8x256xf32>
    %505 = arith.mulf %504, %378 : vector<8x256xf32>
    %506 = vector.extract_strided_slice %1 {offsets = [11, 0], sizes = [1, 256], strides = [1, 1]} : vector<42x256xf32> to vector<1x256xf32>
    %507 = vector.broadcast %506 : vector<1x256xf32> to vector<8x256xf32>
    %508 = arith.subf %507, %0 : vector<8x256xf32>
    %509 = vector.extract_strided_slice %1 {offsets = [41, 0], sizes = [1, 256], strides = [1, 1]} : vector<42x256xf32> to vector<1x256xf32>
    %510 = vector.broadcast %509 : vector<1x256xf32> to vector<8x256xf32>
    %511 = arith.mulf %508, %510 : vector<8x256xf32>
    %512 = arith.mulf %511, %393 : vector<8x256xf32>
    %513 = arith.addf %505, %512 : vector<8x256xf32>
    %c0_5 = arith.constant 0 : index
    %c0_6 = arith.constant 0 : index
    %c0_7 = arith.constant 0 : index
    %514 = vector.load %arg3[%c0_5, %c0_6, %c0_7] : memref<9x256x128xf32, #tpu.memory_space<vmem>>, vector<1x256x128xf32>
    %515 = vector.shape_cast %514 : vector<1x256x128xf32> to vector<256x128xf32>
    %cst_8 = arith.constant dense<0.000000e+00> : vector<8x128xf32>
    %516 = tpu.matmul %9, %515, %cst_8 {dimension_numbers = #tpu.dot_dimension_numbers<[1], [0], [0], [1], [0, 0, 1, 1], [], []>} : vector<8x256xf32>, vector<256x128xf32>, vector<8x128xf32> -> vector<8x128xf32>
    %c1 = arith.constant 1 : index
    %c0_9 = arith.constant 0 : index
    %c0_10 = arith.constant 0 : index
    %517 = vector.load %arg3[%c1, %c0_9, %c0_10] : memref<9x256x128xf32, #tpu.memory_space<vmem>>, vector<1x256x128xf32>
    %518 = vector.shape_cast %517 : vector<1x256x128xf32> to vector<256x128xf32>
    %cst_11 = arith.constant dense<0.000000e+00> : vector<8x128xf32>
    %519 = tpu.matmul %408, %518, %cst_11 {dimension_numbers = #tpu.dot_dimension_numbers<[1], [0], [0], [1], [0, 0, 1, 1], [], []>} : vector<8x256xf32>, vector<256x128xf32>, vector<8x128xf32> -> vector<8x128xf32>
    %520 = arith.addf %516, %519 : vector<8x128xf32>
    %c2 = arith.constant 2 : index
    %c0_12 = arith.constant 0 : index
    %c0_13 = arith.constant 0 : index
    %521 = vector.load %arg3[%c2, %c0_12, %c0_13] : memref<9x256x128xf32, #tpu.memory_space<vmem>>, vector<1x256x128xf32>
    %522 = vector.shape_cast %521 : vector<1x256x128xf32> to vector<256x128xf32>
    %cst_14 = arith.constant dense<0.000000e+00> : vector<8x128xf32>
    %523 = tpu.matmul %423, %522, %cst_14 {dimension_numbers = #tpu.dot_dimension_numbers<[1], [0], [0], [1], [0, 0, 1, 1], [], []>} : vector<8x256xf32>, vector<256x128xf32>, vector<8x128xf32> -> vector<8x128xf32>
    %524 = arith.addf %520, %523 : vector<8x128xf32>
    %c3 = arith.constant 3 : index
    %c0_15 = arith.constant 0 : index
    %c0_16 = arith.constant 0 : index
    %525 = vector.load %arg3[%c3, %c0_15, %c0_16] : memref<9x256x128xf32, #tpu.memory_space<vmem>>, vector<1x256x128xf32>
    %526 = vector.shape_cast %525 : vector<1x256x128xf32> to vector<256x128xf32>
    %cst_17 = arith.constant dense<0.000000e+00> : vector<8x128xf32>
    %527 = tpu.matmul %438, %526, %cst_17 {dimension_numbers = #tpu.dot_dimension_numbers<[1], [0], [0], [1], [0, 0, 1, 1], [], []>} : vector<8x256xf32>, vector<256x128xf32>, vector<8x128xf32> -> vector<8x128xf32>
    %528 = arith.addf %524, %527 : vector<8x128xf32>
    %c4 = arith.constant 4 : index
    %c0_18 = arith.constant 0 : index
    %c0_19 = arith.constant 0 : index
    %529 = vector.load %arg3[%c4, %c0_18, %c0_19] : memref<9x256x128xf32, #tpu.memory_space<vmem>>, vector<1x256x128xf32>
    %530 = vector.shape_cast %529 : vector<1x256x128xf32> to vector<256x128xf32>
    %cst_20 = arith.constant dense<0.000000e+00> : vector<8x128xf32>
    %531 = tpu.matmul %453, %530, %cst_20 {dimension_numbers = #tpu.dot_dimension_numbers<[1], [0], [0], [1], [0, 0, 1, 1], [], []>} : vector<8x256xf32>, vector<256x128xf32>, vector<8x128xf32> -> vector<8x128xf32>
    %532 = arith.addf %528, %531 : vector<8x128xf32>
    %c5 = arith.constant 5 : index
    %c0_21 = arith.constant 0 : index
    %c0_22 = arith.constant 0 : index
    %533 = vector.load %arg3[%c5, %c0_21, %c0_22] : memref<9x256x128xf32, #tpu.memory_space<vmem>>, vector<1x256x128xf32>
    %534 = vector.shape_cast %533 : vector<1x256x128xf32> to vector<256x128xf32>
    %cst_23 = arith.constant dense<0.000000e+00> : vector<8x128xf32>
    %535 = tpu.matmul %468, %534, %cst_23 {dimension_numbers = #tpu.dot_dimension_numbers<[1], [0], [0], [1], [0, 0, 1, 1], [], []>} : vector<8x256xf32>, vector<256x128xf32>, vector<8x128xf32> -> vector<8x128xf32>
    %536 = arith.addf %532, %535 : vector<8x128xf32>
    %c6 = arith.constant 6 : index
    %c0_24 = arith.constant 0 : index
    %c0_25 = arith.constant 0 : index
    %537 = vector.load %arg3[%c6, %c0_24, %c0_25] : memref<9x256x128xf32, #tpu.memory_space<vmem>>, vector<1x256x128xf32>
    %538 = vector.shape_cast %537 : vector<1x256x128xf32> to vector<256x128xf32>
    %cst_26 = arith.constant dense<0.000000e+00> : vector<8x128xf32>
    %539 = tpu.matmul %483, %538, %cst_26 {dimension_numbers = #tpu.dot_dimension_numbers<[1], [0], [0], [1], [0, 0, 1, 1], [], []>} : vector<8x256xf32>, vector<256x128xf32>, vector<8x128xf32> -> vector<8x128xf32>
    %540 = arith.addf %536, %539 : vector<8x128xf32>
    %c7 = arith.constant 7 : index
    %c0_27 = arith.constant 0 : index
    %c0_28 = arith.constant 0 : index
    %541 = vector.load %arg3[%c7, %c0_27, %c0_28] : memref<9x256x128xf32, #tpu.memory_space<vmem>>, vector<1x256x128xf32>
    %542 = vector.shape_cast %541 : vector<1x256x128xf32> to vector<256x128xf32>
    %cst_29 = arith.constant dense<0.000000e+00> : vector<8x128xf32>
    %543 = tpu.matmul %498, %542, %cst_29 {dimension_numbers = #tpu.dot_dimension_numbers<[1], [0], [0], [1], [0, 0, 1, 1], [], []>} : vector<8x256xf32>, vector<256x128xf32>, vector<8x128xf32> -> vector<8x128xf32>
    %544 = arith.addf %540, %543 : vector<8x128xf32>
    %c8 = arith.constant 8 : index
    %c0_30 = arith.constant 0 : index
    %c0_31 = arith.constant 0 : index
    %545 = vector.load %arg3[%c8, %c0_30, %c0_31] : memref<9x256x128xf32, #tpu.memory_space<vmem>>, vector<1x256x128xf32>
    %546 = vector.shape_cast %545 : vector<1x256x128xf32> to vector<256x128xf32>
    %cst_32 = arith.constant dense<0.000000e+00> : vector<8x128xf32>
    %547 = tpu.matmul %513, %546, %cst_32 {dimension_numbers = #tpu.dot_dimension_numbers<[1], [0], [0], [1], [0, 0, 1, 1], [], []>} : vector<8x256xf32>, vector<256x128xf32>, vector<8x128xf32> -> vector<8x128xf32>
    %548 = arith.addf %544, %547 : vector<8x128xf32>
    %549 = tpu.iota {dimensions = array<i32: 1>} : vector<8x128xi32>
    %c10_i32 = arith.constant 10 : i32
    %550 = vector.broadcast %c10_i32 : i32 to vector<8x128xi32>
    %551 = arith.cmpi slt, %549, %550 : vector<8x128xi32>
    %cst_33 = arith.constant -1.000000e+30 : f32
    %552 = vector.broadcast %cst_33 : f32 to vector<8x128xf32>
    %553 = arith.select %551, %548, %552 : vector<8x128xi1>, vector<8x128xf32>
    %cst_34 = arith.constant dense<0xFF800000> : vector<8xf32>
    %554 = vector.multi_reduction <maximumf>, %553, %cst_34 [1] : vector<8x128xf32> to vector<8xf32>
    %555 = vector.shape_cast %554 : vector<8xf32> to vector<8x1xf32>
    %556 = vector.broadcast %555 : vector<8x1xf32> to vector<8x128xf32>
    %557 = arith.subf %553, %556 : vector<8x128xf32>
    %558 = math.exp %557 : vector<8x128xf32>
    %cst_35 = arith.constant dense<0.000000e+00> : vector<8xf32>
    %559 = vector.multi_reduction <add>, %558, %cst_35 [1] : vector<8x128xf32> to vector<8xf32>
    %560 = vector.shape_cast %559 : vector<8xf32> to vector<8x1xf32>
    %561 = math.log %560 : vector<8x1xf32>
    %562 = vector.broadcast %561 : vector<8x1xf32> to vector<8x128xf32>
    %563 = arith.subf %557, %562 : vector<8x128xf32>
    %c0_36 = arith.constant 0 : index
    %c0_37 = arith.constant 0 : index
    %564 = vector.load %arg4[%c0_36, %c0_37] : memref<8x128xf32, #tpu.memory_space<vmem>>, vector<8x128xf32>
    tpu.vector_store %arg4[%c0_36, %c0_37], %563 {strides = array<i32>} : memref<8x128xf32, #tpu.memory_space<vmem>>, vector<8x128xf32>,
    return
  }
  func.func @transform_0(%arg0: i32) -> (i32, i32) {
    %c0_i32 = arith.constant 0 : i32
    %c0_i32_0 = arith.constant 0 : i32
    return %arg0, %c0_i32 : i32, i32
  }
  func.func @transform_1(%arg0: i32) -> (i32, i32) {
    %c0_i32 = arith.constant 0 : i32
    %c0_i32_0 = arith.constant 0 : i32
    %c0_i32_1 = arith.constant 0 : i32
    return %c0_i32, %c0_i32_0 : i32, i32
  }
  func.func @transform_2(%arg0: i32) -> (i32, i32, i32) {
    %c0_i32 = arith.constant 0 : i32
    %c0_i32_0 = arith.constant 0 : i32
    %c0_i32_1 = arith.constant 0 : i32
    %c0_i32_2 = arith.constant 0 : i32
    return %c0_i32, %c0_i32_0, %c0_i32_1 : i32, i32, i32
  }
  func.func @transform_3(%arg0: i32) -> (i32, i32) {
    %c0_i32 = arith.constant 0 : i32
    %c0_i32_0 = arith.constant 0 : i32
    return %arg0, %c0_i32 : i32, i32
  }
}

</mosaic_0001>

<llo_original>
// kernel: forward_pallas.3
$region0: #{forward_pallas.3}
  #allocation0 [shape = 'u32[]', space=smem, size = 0x4, offset = 0x4, fixed_abs, tag = 'smem constant byte address 0x4 - core index']
  #allocation1 [shape = 'u32[144,128]{1,0:T(1,128)}', space=vmem, size = 0x12000, scoped, tag = 'internal scratch']
  %s0 = inlined_call_operand.vmem [shape: f32[4,9,1536], index: 0, kind: input, shape index: {}]
  %s1 = inlined_call_operand.vmem [shape: f32[5,9], index: 1, kind: input, shape index: {}]
  %s2 = inlined_call_operand.vmem [shape: f32[5,1], index: 2, kind: input, shape index: {}]
  %s3 = inlined_call_operand.vmem [shape: f32[5,1536], index: 3, kind: output, shape index: {}]
  %s4 = sld [smem:[#allocation0]]
  $region68: #{forward_pallas.3} parent=0
    _
  %s6 = ssub.s32 1, %s4
  %s7 = scalar_select 0, %s6, %s4
  $region1: #{forward_pallas.3} parent=0
    #allocation2 [shape = 'u8[393216]{0}', space=vmem, size = 0x60000, scoped, tag = 'input window, operand 0']
    loop: start=0, step=1, limit=4
    $region2: #{forward_pallas.3} parent=1 // loop_pre_header
      _
    $region3: #{forward_pallas.3} parent=1 // loop_header
      %s9 = sphi 0, %s13
      %p10 = scmp.ge.s32.totalorder %s9, 4
      %s19 = sphi 0, %s21
      %s22 = sphi 0, %s19
      %s23 = sphi 0, %s22
      %s39 = sphi 0, %s23
      %s43 = sphi 0, %s43
      %s45 = sphi 0, %s43
      %s46 = sphi 0, %s45
      %s60 = sphi 0, %s46
      %s64 = sphi 0, %s64
      %s66 = sphi 0, %s64
      %s67 = sphi 0, %s66
      %s81 = sphi 0, %s67
      %s87 = sphi 0, %s89
      %s90 = sphi 0, %s87
      %s91 = sphi 0, %s90
      %s107 = sphi 0, %s91
    $region4: #{forward_pallas.3} parent=1 // loop_header_branch
      %12 = sbr.rel (%p10) target = $region8
    $region5: #{forward_pallas.3} parent=1 // loop_body
      %s14 = ssub.s32 %s9, 1
      %s15 = ssub.s32 %s9, 2
      %s16 = sadd.s32 %s9, 1
      %s17 = ssub.s32 %s9, %s16
      %p18 = scmp.eq.s32.totalorder %s17, 0
      %s20 = sadd.s32 %s19, 1
      %s21 = scalar_select %p18, %s19, %s20
      %p24 = pneg %p18
      %p25 = scmp.eq.s32.totalorder %s9, 1
      %p26 = por %p24, %p25
      %p27 = scmp.ne.s32.totalorder %s19, %s22
      %p28 = scmp.eq.s32.totalorder %s9, 0
      %p29 = por %p27, %p28
      %p30 = scmp.ne.s32.totalorder %s19, %s22
      %p31 = scmp.eq.s32.totalorder %s14, 1
      %p32 = por %p30, %p31
      %p33 = scmp.ne.s32.totalorder %s22, %s23
      %p34 = scmp.eq.s32.totalorder %s14, 0
      %p35 = por %p33, %p34
      %p36 = scmp.ne.s32.totalorder %s22, %s23
      %p37 = scmp.eq.s32.totalorder %s15, 1
      %p38 = por %p36, %p37
      %p40 = scmp.ne.s32.totalorder %s23, %s39
      %p41 = scmp.eq.s32.totalorder %s15, 0
      %p42 = por %p40, %p41
      %s44 = sadd.s32 %s43, 1
      %p47 = scmp.eq.s32.totalorder %s9, 1
      %p48 = scmp.ne.s32.totalorder %s43, %s45
      %p49 = scmp.eq.s32.totalorder %s9, 0
      %p50 = por %p48, %p49
      %p51 = scmp.ne.s32.totalorder %s43, %s45
      %p52 = scmp.eq.s32.totalorder %s14, 1
      %p53 = por %p51, %p52
      %p54 = scmp.ne.s32.totalorder %s45, %s46
      %p55 = scmp.eq.s32.totalorder %s14, 0
      %p56 = por %p54, %p55
      %p57 = scmp.ne.s32.totalorder %s45, %s46
      %p58 = scmp.eq.s32.totalorder %s15, 1
      %p59 = por %p57, %p58
      %p61 = scmp.ne.s32.totalorder %s46, %s60
      %p62 = scmp.eq.s32.totalorder %s15, 0
      %p63 = por %p61, %p62
      %s65 = sadd.s32 %s64, 1
      %p68 = scmp.eq.s32.totalorder %s9, 1
      %p69 = scmp.ne.s32.totalorder %s64, %s66
      %p70 = scmp.eq.s32.totalorder %s9, 0
      %p71 = por %p69, %p70
      %p72 = scmp.ne.s32.totalorder %s64, %s66
      %p73 = scmp.eq.s32.totalorder %s14, 1
      %p74 = por %p72, %p73
      %p75 = scmp.ne.s32.totalorder %s66, %s67
      %p76 = scmp.eq.s32.totalorder %s14, 0
      %p77 = por %p75, %p76
      %p78 = scmp.ne.s32.totalorder %s66, %s67
      %p79 = scmp.eq.s32.totalorder %s15, 1
      %p80 = por %p78, %p79
      %p82 = scmp.ne.s32.totalorder %s67, %s81
      %p83 = scmp.eq.s32.totalorder %s15, 0
      %p84 = por %p82, %p83
      %s85 = ssub.s32 %s9, %s16
      %p86 = scmp.eq.s32.totalorder %s85, 0
      %s88 = sadd.s32 %s87, 1
      %s89 = scalar_select %p86, %s87, %s88
      %p92 = pneg %p86
      %p93 = scmp.eq.s32.totalorder %s9, 1
      %p94 = por %p92, %p93
      %p95 = scmp.ne.s32.totalorder %s87, %s90
      %p96 = scmp.eq.s32.totalorder %s9, 0
      %p97 = por %p95, %p96
      %p98 = scmp.ne.s32.totalorder %s87, %s90
      %p99 = scmp.eq.s32.totalorder %s14, 1
      %p100 = por %p98, %p99
      %p101 = scmp.ne.s32.totalorder %s90, %s91
      %p102 = scmp.eq.s32.totalorder %s14, 0
      %p103 = por %p101, %p102
      %p104 = scmp.ne.s32.totalorder %s90, %s91
      %p105 = scmp.eq.s32.totalorder %s15, 1
      %p106 = por %p104, %p105
      %p108 = scmp.ne.s32.totalorder %s91, %s107
      %p109 = scmp.eq.s32.totalorder %s15, 0
      %p110 = por %p108, %p109
      %p111 = scmp.le.s32.totalorder 1, %s9
      %p112 = scmp.lt.s32.totalorder %s9, 3
      %p113 = pnand %p111, %p112
      %p114 = pneg %p113
      // Predicated region
      $region9: #{forward_pallas.3} parent=5 // pred_check
        _
      $region10: #{forward_pallas.3} parent=5 // pred_check_branch
        %116 = sbr.rel (%p113) target = $region12
      $region11: #{forward_pallas.3} parent=5 // pred_region
        %s117 = ssub.s32 %s9, 1
        // Predicated region
        $region13: #{forward_pallas.3} parent=11 // pred_check
          %p118 = pneg %p56
        $region14: #{forward_pallas.3} parent=11 // pred_check_branch
          %120 = sbr.rel (%p118) target = $region16
        $region15: #{forward_pallas.3} parent=11 // pred_region
          _
        $region16: #{forward_pallas.3} parent=11 // pred_fallthru
          _
        // Predicated region
        $region17: #{forward_pallas.3} parent=11 // pred_check
          %p121 = pneg %p77
        $region18: #{forward_pallas.3} parent=11 // pred_check_branch
          %123 = sbr.rel (%p121) target = $region20
        $region19: #{forward_pallas.3} parent=11 // pred_region
          _
        $region20: #{forward_pallas.3} parent=11 // pred_fallthru
          _
      $region12: #{forward_pallas.3} parent=5 // pred_fallthru
        _
      %p124 = scmp.lt.s32.totalorder %s9, 2
      // Predicated region
      $region21: #{forward_pallas.3} parent=5 // pred_check
        %p125 = pneg %p124
      $region22: #{forward_pallas.3} parent=5 // pred_check_branch
        %127 = sbr.rel (%p125) target = $region24
      $region23: #{forward_pallas.3} parent=5 // pred_region
        // Predicated region
        $region25: #{forward_pallas.3} parent=23 // pred_check
          %p128 = pneg %p29
        $region26: #{forward_pallas.3} parent=23 // pred_check_branch
          %130 = sbr.rel (%p128) target = $region28
        $region27: #{forward_pallas.3} parent=23 // pred_region
          %s131 = sand.u32 %s19, 1
          %s132 = sand.u32 %s19, 1
          %s133 = smul.addr %s132, 384
          %s134 = scalar_lea.vmem [#allocation2], %s133
          %s135 = smul.u32 6, %s9
          %s136 = smul.addr %s135, 8
          %s137 = scalar_lea.vmem %s0, %s136
          // Predicated region
          $region29: #{forward_pallas.3} parent=27 // pred_check
            _
          $region30: #{forward_pallas.3} parent=27 // pred_check_branch
            %139 = sbr.rel (0) target = $region32
          $region31: #{forward_pallas.3} parent=27 // pred_region
            // Predicated region
            $region33: #{forward_pallas.3} parent=31 // pred_check
              _
            $region34: #{forward_pallas.3} parent=31 // pred_check_branch
              %141 = sbr.rel (0) target = $region36
            $region35: #{forward_pallas.3} parent=31 // pred_region
              loop: start=0, step=1, limit=1
              $region37: #{forward_pallas.3} parent=35 // loop_pre_header
                _
              $region38: #{forward_pallas.3} parent=35 // loop_header
                %s143 = sphi 0, %s147
                %p144 = scmp.ge.s32.totalorder %s143, 1
                %s148 = sphi %s137, %s137
                %s149 = sphi %s134, %s134
              $region39: #{forward_pallas.3} parent=35 // loop_header_branch
                %146 = sbr.rel (%p144) target = $region43
              $region40: #{forward_pallas.3} parent=35 // loop_body
                %v150 = vld [vmem:[%s148] sm:$0xff]
                %151 = vst [vmem:[%s149] sm:$0xff] %v150
                %v152 = vld [vmem:[%s148 + $0x8] sm:$0xff]
                %153 = vst [vmem:[%s149 + $0x8] sm:$0xff] %v152
                %v154 = vld [vmem:[%s148 + $0x10] sm:$0xff]
                %155 = vst [vmem:[%s149 + $0x10] sm:$0xff] %v154
                %v156 = vld [vmem:[%s148 + $0x18] sm:$0xff]
                %157 = vst [vmem:[%s149 + $0x18] sm:$0xff] %v156
                %v158 = vld [vmem:[%s148 + $0x20] sm:$0xff]
                %159 = vst [vmem:[%s149 + $0x20] sm:$0xff] %v158
                %v160 = vld [vmem:[%s148 + $0x28] sm:$0xff]
                %161 = vst [vmem:[%s149 + $0x28] sm:$0xff] %v160
                %v162 = vld [vmem:[%s148 + $0x60] sm:$0xff]
                %163 = vst [vmem:[%s149 + $0x30] sm:$0xff] %v162
                %v164 = vld [vmem:[%s148 + $0x68] sm:$0xff]
                %165 = vst [vmem:[%s149 + $0x38] sm:$0xff] %v164
                %v166 = vld [vmem:[%s148 + $0x70] sm:$0xff]
                %167 = vst [vmem:[%s149 + $0x40] sm:$0xff] %v166
                %v168 = vld [vmem:[%s148 + $0x78] sm:$0xff]
                %169 = vst [vmem:[%s149 + $0x48] sm:$0xff] %v168
                %v170 = vld [vmem:[%s148 + $0x80] sm:$0xff]
                %171 = vst [vmem:[%s149 + $0x50] sm:$0xff] %v170
                %v172 = vld [vmem:[%s148 + $0x88] sm:$0xff]
                %173 = vst [vmem:[%s149 + $0x58] sm:$0xff] %v172
                %v174 = vld [vmem:[%s148 + $0xc0] sm:$0xff]
                %175 = vst [vmem:[%s149 + $0x60] sm:$0xff] %v174
                %v176 = vld [vmem:[%s148 + $0xc8] sm:$0xff]
                %177 = vst [vmem:[%s149 + $0x68] sm:$0xff] %v176
                %v178 = vld [vmem:[%s148 + $0xd0] sm:$0xff]
                %179 = vst [vmem:[%s149 + $0x70] sm:$0xff] %v178
                %v180 = vld [vmem:[%s148 + $0xd8] sm:$0xff]
                %181 = vst [vmem:[%s149 + $0x78] sm:$0xff] %v180
                %v182 = vld [vmem:[%s148 + $0xe0] sm:$0xff]
                %183 = vst [vmem:[%s149 + $0x80] sm:$0xff] %v182
                %v184 = vld [vmem:[%s148 + $0xe8] sm:$0xff]
                %185 = vst [vmem:[%s149 + $0x88] sm:$0xff] %v184
                %v186 = vld [vmem:[%s148 + $0x120] sm:$0xff]
                %187 = vst [vmem:[%s149 + $0x90] sm:$0xff] %v186
                %v188 = vld [vmem:[%s148 + $0x128] sm:$0xff]
                %189 = vst [vmem:[%s149 + $0x98] sm:$0xff] %v188
                %v190 = vld [vmem:[%s148 + $0x130] sm:$0xff]
                %191 = vst [vmem:[%s149 + $0xa0] sm:$0xff] %v190
                %v192 = vld [vmem:[%s148 + $0x138] sm:$0xff]
                %193 = vst [vmem:[%s149 + $0xa8] sm:$0xff] %v192
                %v194 = vld [vmem:[%s148 + $0x140] sm:$0xff]
                %195 = vst [vmem:[%s149 + $0xb0] sm:$0xff] %v194
                %v196 = vld [vmem:[%s148 + $0x148] sm:$0xff]
                %197 = vst [vmem:[%s149 + $0xb8] sm:$0xff] %v196
                %v198 = vld [vmem:[%s148 + $0x180] sm:$0xff]
                %199 = vst [vmem:[%s149 + $0xc0] sm:$0xff] %v198
                %v200 = vld [vmem:[%s148 + $0x188] sm:$0xff]
                %201 = vst [vmem:[%s149 + $0xc8] sm:$0xff] %v200
                %v202 = vld [vmem:[%s148 + $0x190] sm:$0xff]
                %203 = vst [vmem:[%s149 + $0xd0] sm:$0xff] %v202
                %v204 = vld [vmem:[%s148 + $0x198] sm:$0xff]
                %205 = vst [vmem:[%s149 + $0xd8] sm:$0xff] %v204
                %v206 = vld [vmem:[%s148 + $0x1a0] sm:$0xff]
                %207 = vst [vmem:[%s149 + $0xe0] sm:$0xff] %v206
                %v208 = vld [vmem:[%s148 + $0x1a8] sm:$0xff]
                %209 = vst [vmem:[%s149 + $0xe8] sm:$0xff] %v208
                %v210 = vld [vmem:[%s148 + $0x1e0] sm:$0xff]
                %211 = vst [vmem:[%s149 + $0xf0] sm:$0xff] %v210
                %v212 = vld [vmem:[%s148 + $0x1e8] sm:$0xff]
                %213 = vst [vmem:[%s149 + $0xf8] sm:$0xff] %v212
                %v214 = vld [vmem:[%s148 + $0x1f0] sm:$0xff]
                %215 = vst [vmem:[%s149 + $0x100] sm:$0xff] %v214
                %v216 = vld [vmem:[%s148 + $0x1f8] sm:$0xff]
                %217 = vst [vmem:[%s149 + $0x108] sm:$0xff] %v216
                %v218 = vld [vmem:[%s148 + $0x200] sm:$0xff]
                %219 = vst [vmem:[%s149 + $0x110] sm:$0xff] %v218
                %v220 = vld [vmem:[%s148 + $0x208] sm:$0xff]
                %221 = vst [vmem:[%s149 + $0x118] sm:$0xff] %v220
                %v222 = vld [vmem:[%s148 + $0x240] sm:$0xff]
                %223 = vst [vmem:[%s149 + $0x120] sm:$0xff] %v222
                %v224 = vld [vmem:[%s148 + $0x248] sm:$0xff]
                %225 = vst [vmem:[%s149 + $0x128] sm:$0xff] %v224
                %v226 = vld [vmem:[%s148 + $0x250] sm:$0xff]
                %227 = vst [vmem:[%s149 + $0x130] sm:$0xff] %v226
                %v228 = vld [vmem:[%s148 + $0x258] sm:$0xff]
                %229 = vst [vmem:[%s149 + $0x138] sm:$0xff] %v228
                %v230 = vld [vmem:[%s148 + $0x260] sm:$0xff]
                %231 = vst [vmem:[%s149 + $0x140] sm:$0xff] %v230
                %v232 = vld [vmem:[%s148 + $0x268] sm:$0xff]
                %233 = vst [vmem:[%s149 + $0x148] sm:$0xff] %v232
                %v234 = vld [vmem:[%s148 + $0x2a0] sm:$0xff]
                %235 = vst [vmem:[%s149 + $0x150] sm:$0xff] %v234
                %v236 = vld [vmem:[%s148 + $0x2a8] sm:$0xff]
                %237 = vst [vmem:[%s149 + $0x158] sm:$0xff] %v236
                %v238 = vld [vmem:[%s148 + $0x2b0] sm:$0xff]
                %239 = vst [vmem:[%s149 + $0x160] sm:$0xff] %v238
                %v240 = vld [vmem:[%s148 + $0x2b8] sm:$0xff]
                %241 = vst [vmem:[%s149 + $0x168] sm:$0xff] %v240
                %v242 = vld [vmem:[%s148 + $0x2c0] sm:$0xff]
                %243 = vst [vmem:[%s149 + $0x170] sm:$0xff] %v242
                %v244 = vld [vmem:[%s148 + $0x2c8] sm:$0xff]
                %245 = vst [vmem:[%s149 + $0x178] sm:$0xff] %v244
              $region41: #{forward_pallas.3} parent=35 // loop_footer
                %s147 = sadd.s32 1, %s143
              $region42: #{forward_pallas.3} parent=35 // loop_footer_branch
                %142 = sbr.rel target = $region38
              $region43: #{forward_pallas.3} parent=35 // loop_exit
                _
            $region36: #{forward_pallas.3} parent=31 // pred_fallthru
              _
            // Predicated region
            $region44: #{forward_pallas.3} parent=31 // pred_check
              _
            $region45: #{forward_pallas.3} parent=31 // pred_check_branch
              %247 = sbr.rel target = $region47
            $region46: #{forward_pallas.3} parent=31 // pred_region
              _
            $region47: #{forward_pallas.3} parent=31 // pred_fallthru
              _
          $region32: #{forward_pallas.3} parent=27 // pred_fallthru
            _
          %248 = vnop
        $region28: #{forward_pallas.3} parent=23 // pred_fallthru
          _
      $region24: #{forward_pallas.3} parent=5 // pred_fallthru
        _
      %p249 = scmp.le.s32.totalorder 1, %s9
      %p250 = scmp.lt.s32.totalorder %s9, 3
      %p251 = pnand %p249, %p250
      %p252 = pneg %p251
      // Predicated region
      $region48: #{forward_pallas.3} parent=5 // pred_check
        _
      $region49: #{forward_pallas.3} parent=5 // pred_check_branch
        %254 = sbr.rel (%p251) target = $region51
      $region50: #{forward_pallas.3} parent=5 // pred_region
        %s255 = ssub.s32 %s9, 1
        %s256 = sand.u32 %s22, 1
        %s257 = sand.u32 %s22, 1
        %s258 = smul.addr %s257, 384
        %s259 = scalar_lea.vmem [#allocation2], %s258
        // Predicated region
        $region52: #{forward_pallas.3} parent=50 // pred_check
          %p260 = pneg %p35
        $region53: #{forward_pallas.3} parent=50 // pred_check_branch
          %262 = sbr.rel (%p260) target = $region55
        $region54: #{forward_pallas.3} parent=50 // pred_region
          _
        $region55: #{forward_pallas.3} parent=50 // pred_fallthru
          _
        %s263 = sand.u32 %s22, 1
        %s264 = sand.u32 %s22, 1
        %s265 = smul.addr %s264, 384
        %s266 = scalar_lea.vmem [#allocation2], %s265
        %p267 = pneg %p35
        %p268 = pneg %p32
        %p269 = pneg %p56
        %p270 = pneg %p53
        %p271 = pneg %p77
        %p272 = pneg %p74
        %p273 = pneg %p103
        %p274 = pneg %p100
        %s275 = smul.u32 6, %s14
        %p276 = scmp.lt.s32.totalorder %s275, 11
        %s277 = scalar_select %p276, %s275, 11
        %s278 = smul.addr %s277, 8
        %s279 = scalar_lea.vmem %s3, %s278
        %s280 = smul.u32 6, %s14
        %s281 = smul.u32 6, %s14
        %p282 = scmp.lt.s32.totalorder %s281, 11
        %s283 = scalar_select %p282, %s281, 11
        %s284 = smul.addr %s283, 8
        %s285 = scalar_lea.vmem %s3, %s284
        %s286 = smul.u32 6, %s14
        %v287 = vld [vmem:[%s1] sm:$0x1f]
        %v288 = vld [vmem:[%s259] sm:$0xff]
        %v289 = vld [vmem:[%s259 + $0x8] sm:$0xff]
        %v290 = vld [vmem:[%s259 + $0x10] sm:$0xff]
        %v291 = vld [vmem:[%s259 + $0x18] sm:$0xff]
        %v292 = vld [vmem:[%s259 + $0x20] sm:$0xff]
        %v293 = vld [vmem:[%s259 + $0x28] sm:$0xff]
        %v294 = vld [vmem:[%s259 + $0x30] sm:$0x1]
        %v295 = vld [vmem:[%s259 + $0x38] sm:$0x1]
        %v296 = vld [vmem:[%s259 + $0x40] sm:$0x1]
        %v297 = vld [vmem:[%s259 + $0x48] sm:$0x1]
        %v298 = vld [vmem:[%s259 + $0x50] sm:$0x1]
        %v299 = vld [vmem:[%s259 + $0x58] sm:$0x1]
        %vm300 = vcmask 72704
        %v302 = vsel %vm300, %v287, 0
        %vm304 = vcmask 1040384
        %v306 = vsel %vm304, %v294, 0
        %v309 = vsel %vm304, %v295, 0
        %v312 = vsel %vm304, %v296, 0
        %v315 = vsel %vm304, %v297, 0
        %v318 = vsel %vm304, %v298, 0
        %v321 = vsel %vm304, %v299, 0
        %323 = vmatprep.subr.mxu0 %v289
        %324 = vmatpush1.msra.mxu0 %v288
        %325 = vmatprep.subr.mxu0 %v309
        %326 = vmatpush1.msra.mxu0 %v306
        %327 = vmatprep.subr.mxu0 0.0
        %328 = vmatpush1.msra.mxu0 0.0
        %329 = vmatprep.subr.mxu0 0.0
        %330 = vmatpush1.msra.mxu0 0.0
        %331 = vmatprep.subr.mxu0 0.0
        %332 = vmatpush1.msra.mxu0 0.0
        %333 = vmatprep.subr.mxu0 0.0
        %334 = vmatpush1.msra.mxu0 0.0
        %335 = vmatprep.subr.mxu0 0.0
        %336 = vmatpush1.msra.mxu0 0.0
        %337 = vmatprep.subr.mxu0 0.0
        %338 = vmatpush1.msra.mxu0 0.0
        %339 = vmatprep.subr.mxu0 0.0
        %340 = vmatpush1.msra.mxu0 0.0
        %341 = vmatprep.subr.mxu0 0.0
        %342 = vmatpush1.msra.mxu0 0.0
        %343 = vmatprep.subr.mxu0 0.0
        %344 = vmatpush1.msra.mxu0 0.0
        %345 = vmatprep.subr.mxu0 0.0
        %346 = vmatpush1.msra.mxu0 0.0
        %347 = vmatprep.subr.mxu0 0.0
        %348 = vmatpush1.msra.mxu0 0.0
        %349 = vmatprep.subr.mxu0 0.0
        %350 = vmatpush1.msra.mxu0 0.0
        %351 = vmatprep.subr.mxu0 0.0
        %352 = vmatpush1.msra.mxu0 0.0
        %353 = vmatprep.subr.mxu0 0.0
        %354 = vmatpush1.msra.mxu0 0.0
        %355 = vmatprep.subr.mxu0 0.0
        %356 = vmatpush1.msra.mxu0 0.0
        %357 = vmatprep.subr.mxu0 0.0
        %358 = vmatpush1.msra.mxu0 0.0
        %359 = vmatprep.subr.mxu0 0.0
        %360 = vmatpush1.msra.mxu0 0.0
        %361 = vmatprep.subr.mxu0 0.0
        %362 = vmatpush1.msra.mxu0 0.0
        %363 = vmatprep.subr.mxu0 0.0
        %364 = vmatpush1.msra.mxu0 0.0
        %365 = vmatprep.subr.mxu0 0.0
        %366 = vmatpush1.msra.mxu0 0.0
        %367 = vmatprep.subr.mxu0 0.0
        %368 = vmatpush1.msra.mxu0 0.0
        %369 = vmatprep.subr.mxu0 0.0
        %370 = vmatpush1.msra.mxu0 0.0
        %371 = vmatprep.subr.mxu0 0.0
        %372 = vmatpush1.msra.mxu0 0.0
        %373 = vmatprep.subr.mxu0 0.0
        %374 = vmatpush1.msra.mxu0 0.0
        %375 = vmatprep.subr.mxu0 0.0
        %376 = vmatpush1.msra.mxu0 0.0
        %377 = vmatprep.subr.mxu0 0.0
        %378 = vmatpush1.msra.mxu0 0.0
        %379 = vmatprep.subr.mxu0 0.0
        %380 = vmatpush1.msra.mxu0 0.0
        %381 = vmatprep.subr.mxu0 0.0
        %382 = vmatpush1.msra.mxu0 0.0
        %383 = vmatprep.subr.mxu0 0.0
        %384 = vmatpush1.msra.mxu0 0.0
        %385 = vmatprep.subr.mxu0 0.0
        %386 = vmatpush1.msra.mxu0 0.0
        %387 = vmatprep.mubr.f32.mxu0 0.0
        %388 = vmatmul.mubr.f32.gmra.mrb[0].mxu0 %v302
        %v389 = vpop.f32.mrb[0].mxu0
        %v390 = vadd.f32 0.0, %v389
        %v391 = vpop.f32.mrb[0].mxu0
        %v392 = vadd.f32 0.0, %v391
        %393 = vdwg.mxu0
        %394 = vmatprep.subr.mxu0 %v291
        %395 = vmatpush1.msra.mxu0 %v290
        %396 = vmatprep.subr.mxu0 %v315
        %397 = vmatpush1.msra.mxu0 %v312
        %398 = vmatprep.subr.mxu0 0.0
        %399 = vmatpush1.msra.mxu0 0.0
        %400 = vmatprep.subr.mxu0 0.0
        %401 = vmatpush1.msra.mxu0 0.0
        %402 = vmatprep.subr.mxu0 0.0
        %403 = vmatpush1.msra.mxu0 0.0
        %404 = vmatprep.subr.mxu0 0.0
        %405 = vmatpush1.msra.mxu0 0.0
        %406 = vmatprep.subr.mxu0 0.0
        %407 = vmatpush1.msra.mxu0 0.0
        %408 = vmatprep.subr.mxu0 0.0
        %409 = vmatpush1.msra.mxu0 0.0
        %410 = vmatprep.subr.mxu0 0.0
        %411 = vmatpush1.msra.mxu0 0.0
        %412 = vmatprep.subr.mxu0 0.0
        %413 = vmatpush1.msra.mxu0 0.0
        %414 = vmatprep.subr.mxu0 0.0
        %415 = vmatpush1.msra.mxu0 0.0
        %416 = vmatprep.subr.mxu0 0.0
        %417 = vmatpush1.msra.mxu0 0.0
        %418 = vmatprep.subr.mxu0 0.0
        %419 = vmatpush1.msra.mxu0 0.0
        %420 = vmatprep.subr.mxu0 0.0
        %421 = vmatpush1.msra.mxu0 0.0
        %422 = vmatprep.subr.mxu0 0.0
        %423 = vmatpush1.msra.mxu0 0.0
        %424 = vmatprep.subr.mxu0 0.0
        %425 = vmatpush1.msra.mxu0 0.0
        %426 = vmatprep.subr.mxu0 0.0
        %427 = vmatpush1.msra.mxu0 0.0
        %428 = vmatprep.subr.mxu0 0.0
        %429 = vmatpush1.msra.mxu0 0.0
        %430 = vmatprep.subr.mxu0 0.0
        %431 = vmatpush1.msra.mxu0 0.0
        %432 = vmatprep.subr.mxu0 0.0
        %433 = vmatpush1.msra.mxu0 0.0
        %434 = vmatprep.subr.mxu0 0.0
        %435 = vmatpush1.msra.mxu0 0.0
        %436 = vmatprep.subr.mxu0 0.0
        %437 = vmatpush1.msra.mxu0 0.0
        %438 = vmatprep.subr.mxu0 0.0
        %439 = vmatpush1.msra.mxu0 0.0
        %440 = vmatprep.subr.mxu0 0.0
        %441 = vmatpush1.msra.mxu0 0.0
        %442 = vmatprep.subr.mxu0 0.0
        %443 = vmatpush1.msra.mxu0 0.0
        %444 = vmatprep.subr.mxu0 0.0
        %445 = vmatpush1.msra.mxu0 0.0
        %446 = vmatprep.subr.mxu0 0.0
        %447 = vmatpush1.msra.mxu0 0.0
        %448 = vmatprep.subr.mxu0 0.0
        %449 = vmatpush1.msra.mxu0 0.0
        %450 = vmatprep.subr.mxu0 0.0
        %451 = vmatpush1.msra.mxu0 0.0
        %452 = vmatprep.subr.mxu0 0.0
        %453 = vmatpush1.msra.mxu0 0.0
        %454 = vmatprep.subr.mxu0 0.0
        %455 = vmatpush1.msra.mxu0 0.0
        %456 = vmatprep.subr.mxu0 0.0
        %457 = vmatpush1.msra.mxu0 0.0
        %458 = vmatprep.mubr.f32.mxu0 0.0
        %459 = vmatmul.mubr.f32.gmra.mrb[0].mxu0 %v302
        %v460 = vpop.f32.mrb[0].mxu0
        %v461 = vadd.f32 0.0, %v460
        %v462 = vpop.f32.mrb[0].mxu0
        %v463 = vadd.f32 0.0, %v462
        %464 = vdwg.mxu0
        %465 = vmatprep.subr.mxu0 %v293
        %466 = vmatpush1.msra.mxu0 %v292
        %467 = vmatprep.subr.mxu0 %v321
        %468 = vmatpush1.msra.mxu0 %v318
        %469 = vmatprep.subr.mxu0 0.0
        %470 = vmatpush1.msra.mxu0 0.0
        %471 = vmatprep.subr.mxu0 0.0
        %472 = vmatpush1.msra.mxu0 0.0
        %473 = vmatprep.subr.mxu0 0.0
        %474 = vmatpush1.msra.mxu0 0.0
        %475 = vmatprep.subr.mxu0 0.0
        %476 = vmatpush1.msra.mxu0 0.0
        %477 = vmatprep.subr.mxu0 0.0
        %478 = vmatpush1.msra.mxu0 0.0
        %479 = vmatprep.subr.mxu0 0.0
        %480 = vmatpush1.msra.mxu0 0.0
        %481 = vmatprep.subr.mxu0 0.0
        %482 = vmatpush1.msra.mxu0 0.0
        %483 = vmatprep.subr.mxu0 0.0
        %484 = vmatpush1.msra.mxu0 0.0
        %485 = vmatprep.subr.mxu0 0.0
        %486 = vmatpush1.msra.mxu0 0.0
        %487 = vmatprep.subr.mxu0 0.0
        %488 = vmatpush1.msra.mxu0 0.0
        %489 = vmatprep.subr.mxu0 0.0
        %490 = vmatpush1.msra.mxu0 0.0
        %491 = vmatprep.subr.mxu0 0.0
        %492 = vmatpush1.msra.mxu0 0.0
        %493 = vmatprep.subr.mxu0 0.0
        %494 = vmatpush1.msra.mxu0 0.0
        %495 = vmatprep.subr.mxu0 0.0
        %496 = vmatpush1.msra.mxu0 0.0
        %497 = vmatprep.subr.mxu0 0.0
        %498 = vmatpush1.msra.mxu0 0.0
        %499 = vmatprep.subr.mxu0 0.0
        %500 = vmatpush1.msra.mxu0 0.0
        %501 = vmatprep.subr.mxu0 0.0
        %502 = vmatpush1.msra.mxu0 0.0
        %503 = vmatprep.subr.mxu0 0.0
        %504 = vmatpush1.msra.mxu0 0.0
        %505 = vmatprep.subr.mxu0 0.0
        %506 = vmatpush1.msra.mxu0 0.0
        %507 = vmatprep.subr.mxu0 0.0
        %508 = vmatpush1.msra.mxu0 0.0
        %509 = vmatprep.subr.mxu0 0.0
        %510 = vmatpush1.msra.mxu0 0.0
        %511 = vmatprep.subr.mxu0 0.0
        %512 = vmatpush1.msra.mxu0 0.0
        %513 = vmatprep.subr.mxu0 0.0
        %514 = vmatpush1.msra.mxu0 0.0
        %515 = vmatprep.subr.mxu0 0.0
        %516 = vmatpush1.msra.mxu0 0.0
        %517 = vmatprep.subr.mxu0 0.0
        %518 = vmatpush1.msra.mxu0 0.0
        %519 = vmatprep.subr.mxu0 0.0
        %520 = vmatpush1.msra.mxu0 0.0
        %521 = vmatprep.subr.mxu0 0.0
        %522 = vmatpush1.msra.mxu0 0.0
        %523 = vmatprep.subr.mxu0 0.0
        %524 = vmatpush1.msra.mxu0 0.0
        %525 = vmatprep.subr.mxu0 0.0
        %526 = vmatpush1.msra.mxu0 0.0
        %527 = vmatprep.subr.mxu0 0.0
        %528 = vmatpush1.msra.mxu0 0.0
        %529 = vmatprep.mubr.f32.mxu0 0.0
        %530 = vmatmul.mubr.f32.gmra.mrb[0].mxu0 %v302
        %v531 = vpop.f32.mrb[0].mxu0
        %v532 = vadd.f32 0.0, %v531
        %v533 = vpop.f32.mrb[0].mxu0
        %v534 = vadd.f32 0.0, %v533
        %535 = vdwg.mxu0
        %s536 = scalar_lea.vmem %s259, 96 [#allocation2]
        %v537 = vld [vmem:[%s536] sm:$0xff]
        %v538 = vld [vmem:[%s536 + $0x8] sm:$0xff]
        %v539 = vld [vmem:[%s536 + $0x10] sm:$0xff]
        %v540 = vld [vmem:[%s536 + $0x18] sm:$0xff]
        %v541 = vld [vmem:[%s536 + $0x20] sm:$0xff]
        %v542 = vld [vmem:[%s536 + $0x28] sm:$0xff]
        %v543 = vld [vmem:[%s536 + $0x30] sm:$0x1]
        %v544 = vld [vmem:[%s536 + $0x38] sm:$0x1]
        %v545 = vld [vmem:[%s536 + $0x40] sm:$0x1]
        %v546 = vld [vmem:[%s536 + $0x48] sm:$0x1]
        %v547 = vld [vmem:[%s536 + $0x50] sm:$0x1]
        %v548 = vld [vmem:[%s536 + $0x58] sm:$0x1]
        %v550 = vsel %vm304, %v543, 0
        %v553 = vsel %vm304, %v544, 0
        %v556 = vsel %vm304, %v545, 0
        %v559 = vsel %vm304, %v546, 0
        %v562 = vsel %vm304, %v547, 0
        %v565 = vsel %vm304, %v548, 0
        %567 = vmatprep.subr.mxu0 %v538
        %568 = vmatpush1.msra.mxu0 %v537
        %569 = vmatprep.subr.mxu0 %v553
        %570 = vmatpush1.msra.mxu0 %v550
        %571 = vmatprep.subr.mxu0 0.0
        %572 = vmatpush1.msra.mxu0 0.0
        %573 = vmatprep.subr.mxu0 0.0
        %574 = vmatpush1.msra.mxu0 0.0
        %575 = vmatprep.subr.mxu0 0.0
        %576 = vmatpush1.msra.mxu0 0.0
        %577 = vmatprep.subr.mxu0 0.0
        %578 = vmatpush1.msra.mxu0 0.0
        %579 = vmatprep.subr.mxu0 0.0
        %580 = vmatpush1.msra.mxu0 0.0
        %581 = vmatprep.subr.mxu0 0.0
        %582 = vmatpush1.msra.mxu0 0.0
        %583 = vmatprep.subr.mxu0 0.0
        %584 = vmatpush1.msra.mxu0 0.0
        %585 = vmatprep.subr.mxu0 0.0
        %586 = vmatpush1.msra.mxu0 0.0
        %587 = vmatprep.subr.mxu0 0.0
        %588 = vmatpush1.msra.mxu0 0.0
        %589 = vmatprep.subr.mxu0 0.0
        %590 = vmatpush1.msra.mxu0 0.0
        %591 = vmatprep.subr.mxu0 0.0
        %592 = vmatpush1.msra.mxu0 0.0
        %593 = vmatprep.subr.mxu0 0.0
        %594 = vmatpush1.msra.mxu0 0.0
        %595 = vmatprep.subr.mxu0 0.0
        %596 = vmatpush1.msra.mxu0 0.0
        %597 = vmatprep.subr.mxu0 0.0
        %598 = vmatpush1.msra.mxu0 0.0
        %599 = vmatprep.subr.mxu0 0.0
        %600 = vmatpush1.msra.mxu0 0.0
        %601 = vmatprep.subr.mxu0 0.0
        %602 = vmatpush1.msra.mxu0 0.0
        %603 = vmatprep.subr.mxu0 0.0
        %604 = vmatpush1.msra.mxu0 0.0
        %605 = vmatprep.subr.mxu0 0.0
        %606 = vmatpush1.msra.mxu0 0.0
        %607 = vmatprep.subr.mxu0 0.0
        %608 = vmatpush1.msra.mxu0 0.0
        %609 = vmatprep.subr.mxu0 0.0
        %610 = vmatpush1.msra.mxu0 0.0
        %611 = vmatprep.subr.mxu0 0.0
        %612 = vmatpush1.msra.mxu0 0.0
        %613 = vmatprep.subr.mxu0 0.0
        %614 = vmatpush1.msra.mxu0 0.0
        %615 = vmatprep.subr.mxu0 0.0
        %616 = vmatpush1.msra.mxu0 0.0
        %617 = vmatprep.subr.mxu0 0.0
        %618 = vmatpush1.msra.mxu0 0.0
        %619 = vmatprep.subr.mxu0 0.0
        %620 = vmatpush1.msra.mxu0 0.0
        %621 = vmatprep.subr.mxu0 0.0
        %622 = vmatpush1.msra.mxu0 0.0
        %623 = vmatprep.subr.mxu0 0.0
        %624 = vmatpush1.msra.mxu0 0.0
        %625 = vmatprep.subr.mxu0 0.0
        %626 = vmatpush1.msra.mxu0 0.0
        %627 = vmatprep.subr.mxu0 0.0
        %628 = vmatpush1.msra.mxu0 0.0
        %629 = vmatprep.subr.mxu0 0.0
        %630 = vmatpush1.msra.mxu0 0.0
        %631 = vmatprep.mubr.f32.mxu0 0.0
        %632 = vmatmul.mubr.f32.gmra.mrb[0].mxu0 %v302
        %v633 = vpop.f32.mrb[0].mxu0
        %v634 = vadd.f32 0.0, %v633
        %v635 = vpop.f32.mrb[0].mxu0
        %v636 = vadd.f32 0.0, %v635
        %637 = vdwg.mxu0
        %638 = vmatprep.subr.mxu0 %v540
        %639 = vmatpush1.msra.mxu0 %v539
        %640 = vmatprep.subr.mxu0 %v559
        %641 = vmatpush1.msra.mxu0 %v556
        %642 = vmatprep.subr.mxu0 0.0
        %643 = vmatpush1.msra.mxu0 0.0
        %644 = vmatprep.subr.mxu0 0.0
        %645 = vmatpush1.msra.mxu0 0.0
        %646 = vmatprep.subr.mxu0 0.0
        %647 = vmatpush1.msra.mxu0 0.0
        %648 = vmatprep.subr.mxu0 0.0
        %649 = vmatpush1.msra.mxu0 0.0
        %650 = vmatprep.subr.mxu0 0.0
        %651 = vmatpush1.msra.mxu0 0.0
        %652 = vmatprep.subr.mxu0 0.0
        %653 = vmatpush1.msra.mxu0 0.0
        %654 = vmatprep.subr.mxu0 0.0
        %655 = vmatpush1.msra.mxu0 0.0
        %656 = vmatprep.subr.mxu0 0.0
        %657 = vmatpush1.msra.mxu0 0.0
        %658 = vmatprep.subr.mxu0 0.0
        %659 = vmatpush1.msra.mxu0 0.0
        %660 = vmatprep.subr.mxu0 0.0
        %661 = vmatpush1.msra.mxu0 0.0
        %662 = vmatprep.subr.mxu0 0.0
        %663 = vmatpush1.msra.mxu0 0.0
        %664 = vmatprep.subr.mxu0 0.0
        %665 = vmatpush1.msra.mxu0 0.0
        %666 = vmatprep.subr.mxu0 0.0
        %667 = vmatpush1.msra.mxu0 0.0
        %668 = vmatprep.subr.mxu0 0.0
        %669 = vmatpush1.msra.mxu0 0.0
        %670 = vmatprep.subr.mxu0 0.0
        %671 = vmatpush1.msra.mxu0 0.0
        %672 = vmatprep.subr.mxu0 0.0
        %673 = vmatpush1.msra.mxu0 0.0
        %674 = vmatprep.subr.mxu0 0.0
        %675 = vmatpush1.msra.mxu0 0.0
        %676 = vmatprep.subr.mxu0 0.0
        %677 = vmatpush1.msra.mxu0 0.0
        %678 = vmatprep.subr.mxu0 0.0
        %679 = vmatpush1.msra.mxu0 0.0
        %680 = vmatprep.subr.mxu0 0.0
        %681 = vmatpush1.msra.mxu0 0.0
        %682 = vmatprep.subr.mxu0 0.0
        %683 = vmatpush1.msra.mxu0 0.0
        %684 = vmatprep.subr.mxu0 0.0
        %685 = vmatpush1.msra.mxu0 0.0
        %686 = vmatprep.subr.mxu0 0.0
        %687 = vmatpush1.msra.mxu0 0.0
        %688 = vmatprep.subr.mxu0 0.0
        %689 = vmatpush1.msra.mxu0 0.0
        %690 = vmatprep.subr.mxu0 0.0
        %691 = vmatpush1.msra.mxu0 0.0
        %692 = vmatprep.subr.mxu0 0.0
        %693 = vmatpush1.msra.mxu0 0.0
        %694 = vmatprep.subr.mxu0 0.0
        %695 = vmatpush1.msra.mxu0 0.0
        %696 = vmatprep.subr.mxu0 0.0
        %697 = vmatpush1.msra.mxu0 0.0
        %698 = vmatprep.subr.mxu0 0.0
        %699 = vmatpush1.msra.mxu0 0.0
        %700 = vmatprep.subr.mxu0 0.0
        %701 = vmatpush1.msra.mxu0 0.0
        %702 = vmatprep.mubr.f32.mxu0 0.0
        %703 = vmatmul.mubr.f32.gmra.mrb[0].mxu0 %v302
        %v704 = vpop.f32.mrb[0].mxu0
        %v705 = vadd.f32 0.0, %v704
        %v706 = vpop.f32.mrb[0].mxu0
        %v707 = vadd.f32 0.0, %v706
        %708 = vdwg.mxu0
        %709 = vmatprep.subr.mxu0 %v542
        %710 = vmatpush1.msra.mxu0 %v541
        %711 = vmatprep.subr.mxu0 %v565
        %712 = vmatpush1.msra.mxu0 %v562
        %713 = vmatprep.subr.mxu0 0.0
        %714 = vmatpush1.msra.mxu0 0.0
        %715 = vmatprep.subr.mxu0 0.0
        %716 = vmatpush1.msra.mxu0 0.0
        %717 = vmatprep.subr.mxu0 0.0
        %718 = vmatpush1.msra.mxu0 0.0
        %719 = vmatprep.subr.mxu0 0.0
        %720 = vmatpush1.msra.mxu0 0.0
        %721 = vmatprep.subr.mxu0 0.0
        %722 = vmatpush1.msra.mxu0 0.0
        %723 = vmatprep.subr.mxu0 0.0
        %724 = vmatpush1.msra.mxu0 0.0
        %725 = vmatprep.subr.mxu0 0.0
        %726 = vmatpush1.msra.mxu0 0.0
        %727 = vmatprep.subr.mxu0 0.0
        %728 = vmatpush1.msra.mxu0 0.0
        %729 = vmatprep.subr.mxu0 0.0
        %730 = vmatpush1.msra.mxu0 0.0
        %731 = vmatprep.subr.mxu0 0.0
        %732 = vmatpush1.msra.mxu0 0.0
        %733 = vmatprep.subr.mxu0 0.0
        %734 = vmatpush1.msra.mxu0 0.0
        %735 = vmatprep.subr.mxu0 0.0
        %736 = vmatpush1.msra.mxu0 0.0
        %737 = vmatprep.subr.mxu0 0.0
        %738 = vmatpush1.msra.mxu0 0.0
        %739 = vmatprep.subr.mxu0 0.0
        %740 = vmatpush1.msra.mxu0 0.0
        %741 = vmatprep.subr.mxu0 0.0
        %742 = vmatpush1.msra.mxu0 0.0
        %743 = vmatprep.subr.mxu0 0.0
        %744 = vmatpush1.msra.mxu0 0.0
        %745 = vmatprep.subr.mxu0 0.0
        %746 = vmatpush1.msra.mxu0 0.0
        %747 = vmatprep.subr.mxu0 0.0
        %748 = vmatpush1.msra.mxu0 0.0
        %749 = vmatprep.subr.mxu0 0.0
        %750 = vmatpush1.msra.mxu0 0.0
        %751 = vmatprep.subr.mxu0 0.0
        %752 = vmatpush1.msra.mxu0 0.0
        %753 = vmatprep.subr.mxu0 0.0
        %754 = vmatpush1.msra.mxu0 0.0
        %755 = vmatprep.subr.mxu0 0.0
        %756 = vmatpush1.msra.mxu0 0.0
        %757 = vmatprep.subr.mxu0 0.0
        %758 = vmatpush1.msra.mxu0 0.0
        %759 = vmatprep.subr.mxu0 0.0
        %760 = vmatpush1.msra.mxu0 0.0
        %761 = vmatprep.subr.mxu0 0.0
        %762 = vmatpush1.msra.mxu0 0.0
        %763 = vmatprep.subr.mxu0 0.0
        %764 = vmatpush1.msra.mxu0 0.0
        %765 = vmatprep.subr.mxu0 0.0
        %766 = vmatpush1.msra.mxu0 0.0
        %767 = vmatprep.subr.mxu0 0.0
        %768 = vmatpush1.msra.mxu0 0.0
        %769 = vmatprep.subr.mxu0 0.0
        %770 = vmatpush1.msra.mxu0 0.0
        %771 = vmatprep.subr.mxu0 0.0
        %772 = vmatpush1.msra.mxu0 0.0
        %773 = vmatprep.mubr.f32.mxu0 0.0
        %774 = vmatmul.mubr.f32.gmra.mrb[0].mxu0 %v302
        %v775 = vpop.f32.mrb[0].mxu0
        %v776 = vadd.f32 0.0, %v775
        %v777 = vpop.f32.mrb[0].mxu0
        %v778 = vadd.f32 0.0, %v777
        %779 = vdwg.mxu0
        %s780 = scalar_lea.vmem %s259, 192 [#allocation2]
        %v781 = vld [vmem:[%s780] sm:$0xff]
        %v782 = vld [vmem:[%s780 + $0x8] sm:$0xff]
        %v783 = vld [vmem:[%s780 + $0x10] sm:$0xff]
        %v784 = vld [vmem:[%s780 + $0x18] sm:$0xff]
        %v785 = vld [vmem:[%s780 + $0x20] sm:$0xff]
        %v786 = vld [vmem:[%s780 + $0x28] sm:$0xff]
        %v787 = vld [vmem:[%s780 + $0x30] sm:$0x1]
        %v788 = vld [vmem:[%s780 + $0x38] sm:$0x1]
        %v789 = vld [vmem:[%s780 + $0x40] sm:$0x1]
        %v790 = vld [vmem:[%s780 + $0x48] sm:$0x1]
        %v791 = vld [vmem:[%s780 + $0x50] sm:$0x1]
        %v792 = vld [vmem:[%s780 + $0x58] sm:$0x1]
        %v794 = vsel %vm304, %v787, 0
        %v797 = vsel %vm304, %v788, 0
        %v800 = vsel %vm304, %v789, 0
        %v803 = vsel %vm304, %v790, 0
        %v806 = vsel %vm304, %v791, 0
        %v809 = vsel %vm304, %v792, 0
        %811 = vmatprep.subr.mxu0 %v782
        %812 = vmatpush1.msra.mxu0 %v781
        %813 = vmatprep.subr.mxu0 %v797
        %814 = vmatpush1.msra.mxu0 %v794
        %815 = vmatprep.subr.mxu0 0.0
        %816 = vmatpush1.msra.mxu0 0.0
        %817 = vmatprep.subr.mxu0 0.0
        %818 = vmatpush1.msra.mxu0 0.0
        %819 = vmatprep.subr.mxu0 0.0
        %820 = vmatpush1.msra.mxu0 0.0
        %821 = vmatprep.subr.mxu0 0.0
        %822 = vmatpush1.msra.mxu0 0.0
        %823 = vmatprep.subr.mxu0 0.0
        %824 = vmatpush1.msra.mxu0 0.0
        %825 = vmatprep.subr.mxu0 0.0
        %826 = vmatpush1.msra.mxu0 0.0
        %827 = vmatprep.subr.mxu0 0.0
        %828 = vmatpush1.msra.mxu0 0.0
        %829 = vmatprep.subr.mxu0 0.0
        %830 = vmatpush1.msra.mxu0 0.0
        %831 = vmatprep.subr.mxu0 0.0
        %832 = vmatpush1.msra.mxu0 0.0
        %833 = vmatprep.subr.mxu0 0.0
        %834 = vmatpush1.msra.mxu0 0.0
        %835 = vmatprep.subr.mxu0 0.0
        %836 = vmatpush1.msra.mxu0 0.0
        %837 = vmatprep.subr.mxu0 0.0
        %838 = vmatpush1.msra.mxu0 0.0
        %839 = vmatprep.subr.mxu0 0.0
        %840 = vmatpush1.msra.mxu0 0.0
        %841 = vmatprep.subr.mxu0 0.0
        %842 = vmatpush1.msra.mxu0 0.0
        %843 = vmatprep.subr.mxu0 0.0
        %844 = vmatpush1.msra.mxu0 0.0
        %845 = vmatprep.subr.mxu0 0.0
        %846 = vmatpush1.msra.mxu0 0.0
        %847 = vmatprep.subr.mxu0 0.0
        %848 = vmatpush1.msra.mxu0 0.0
        %849 = vmatprep.subr.mxu0 0.0
        %850 = vmatpush1.msra.mxu0 0.0
        %851 = vmatprep.subr.mxu0 0.0
        %852 = vmatpush1.msra.mxu0 0.0
        %853 = vmatprep.subr.mxu0 0.0
        %854 = vmatpush1.msra.mxu0 0.0
        %855 = vmatprep.subr.mxu0 0.0
        %856 = vmatpush1.msra.mxu0 0.0
        %857 = vmatprep.subr.mxu0 0.0
        %858 = vmatpush1.msra.mxu0 0.0
        %859 = vmatprep.subr.mxu0 0.0
        %860 = vmatpush1.msra.mxu0 0.0
        %861 = vmatprep.subr.mxu0 0.0
        %862 = vmatpush1.msra.mxu0 0.0
        %863 = vmatprep.subr.mxu0 0.0
        %864 = vmatpush1.msra.mxu0 0.0
        %865 = vmatprep.subr.mxu0 0.0
        %866 = vmatpush1.msra.mxu0 0.0
        %867 = vmatprep.subr.mxu0 0.0
        %868 = vmatpush1.msra.mxu0 0.0
        %869 = vmatprep.subr.mxu0 0.0
        %870 = vmatpush1.msra.mxu0 0.0
        %871 = vmatprep.subr.mxu0 0.0
        %872 = vmatpush1.msra.mxu0 0.0
        %873 = vmatprep.subr.mxu0 0.0
        %874 = vmatpush1.msra.mxu0 0.0
        %875 = vmatprep.mubr.f32.mxu0 0.0
        %876 = vmatmul.mubr.f32.gmra.mrb[0].mxu0 %v302
        %v877 = vpop.f32.mrb[0].mxu0
        %v878 = vadd.f32 0.0, %v877
        %v879 = vpop.f32.mrb[0].mxu0
        %v880 = vadd.f32 0.0, %v879
        %881 = vdwg.mxu0
        %882 = vmatprep.subr.mxu0 %v784
        %883 = vmatpush1.msra.mxu0 %v783
        %884 = vmatprep.subr.mxu0 %v803
        %885 = vmatpush1.msra.mxu0 %v800
        %886 = vmatprep.subr.mxu0 0.0
        %887 = vmatpush1.msra.mxu0 0.0
        %888 = vmatprep.subr.mxu0 0.0
        %889 = vmatpush1.msra.mxu0 0.0
        %890 = vmatprep.subr.mxu0 0.0
        %891 = vmatpush1.msra.mxu0 0.0
        %892 = vmatprep.subr.mxu0 0.0
        %893 = vmatpush1.msra.mxu0 0.0
        %894 = vmatprep.subr.mxu0 0.0
        %895 = vmatpush1.msra.mxu0 0.0
        %896 = vmatprep.subr.mxu0 0.0
        %897 = vmatpush1.msra.mxu0 0.0
        %898 = vmatprep.subr.mxu0 0.0
        %899 = vmatpush1.msra.mxu0 0.0
        %900 = vmatprep.subr.mxu0 0.0
        %901 = vmatpush1.msra.mxu0 0.0
        %902 = vmatprep.subr.mxu0 0.0
        %903 = vmatpush1.msra.mxu0 0.0
        %904 = vmatprep.subr.mxu0 0.0
        %905 = vmatpush1.msra.mxu0 0.0
        %906 = vmatprep.subr.mxu0 0.0
        %907 = vmatpush1.msra.mxu0 0.0
        %908 = vmatprep.subr.mxu0 0.0
        %909 = vmatpush1.msra.mxu0 0.0
        %910 = vmatprep.subr.mxu0 0.0
        %911 = vmatpush1.msra.mxu0 0.0
        %912 = vmatprep.subr.mxu0 0.0
        %913 = vmatpush1.msra.mxu0 0.0
        %914 = vmatprep.subr.mxu0 0.0
        %915 = vmatpush1.msra.mxu0 0.0
        %916 = vmatprep.subr.mxu0 0.0
        %917 = vmatpush1.msra.mxu0 0.0
        %918 = vmatprep.subr.mxu0 0.0
        %919 = vmatpush1.msra.mxu0 0.0
        %920 = vmatprep.subr.mxu0 0.0
        %921 = vmatpush1.msra.mxu0 0.0
        %922 = vmatprep.subr.mxu0 0.0
        %923 = vmatpush1.msra.mxu0 0.0
        %924 = vmatprep.subr.mxu0 0.0
        %925 = vmatpush1.msra.mxu0 0.0
        %926 = vmatprep.subr.mxu0 0.0
        %927 = vmatpush1.msra.mxu0 0.0
        %928 = vmatprep.subr.mxu0 0.0
        %929 = vmatpush1.msra.mxu0 0.0
        %930 = vmatprep.subr.mxu0 0.0
        %931 = vmatpush1.msra.mxu0 0.0
        %932 = vmatprep.subr.mxu0 0.0
        %933 = vmatpush1.msra.mxu0 0.0
        %934 = vmatprep.subr.mxu0 0.0
        %935 = vmatpush1.msra.mxu0 0.0
        %936 = vmatprep.subr.mxu0 0.0
        %937 = vmatpush1.msra.mxu0 0.0
        %938 = vmatprep.subr.mxu0 0.0
        %939 = vmatpush1.msra.mxu0 0.0
        %940 = vmatprep.subr.mxu0 0.0
        %941 = vmatpush1.msra.mxu0 0.0
        %942 = vmatprep.subr.mxu0 0.0
        %943 = vmatpush1.msra.mxu0 0.0
        %944 = vmatprep.subr.mxu0 0.0
        %945 = vmatpush1.msra.mxu0 0.0
        %946 = vmatprep.mubr.f32.mxu0 0.0
        %947 = vmatmul.mubr.f32.gmra.mrb[0].mxu0 %v302
        %v948 = vpop.f32.mrb[0].mxu0
        %v949 = vadd.f32 0.0, %v948
        %v950 = vpop.f32.mrb[0].mxu0
        %v951 = vadd.f32 0.0, %v950
        %952 = vdwg.mxu0
        %953 = vmatprep.subr.mxu0 %v786
        %954 = vmatpush1.msra.mxu0 %v785
        %955 = vmatprep.subr.mxu0 %v809
        %956 = vmatpush1.msra.mxu0 %v806
        %957 = vmatprep.subr.mxu0 0.0
        %958 = vmatpush1.msra.mxu0 0.0
        %959 = vmatprep.subr.mxu0 0.0
        %960 = vmatpush1.msra.mxu0 0.0
        %961 = vmatprep.subr.mxu0 0.0
        %962 = vmatpush1.msra.mxu0 0.0
        %963 = vmatprep.subr.mxu0 0.0
        %964 = vmatpush1.msra.mxu0 0.0
        %965 = vmatprep.subr.mxu0 0.0
        %966 = vmatpush1.msra.mxu0 0.0
        %967 = vmatprep.subr.mxu0 0.0
        %968 = vmatpush1.msra.mxu0 0.0
        %969 = vmatprep.subr.mxu0 0.0
        %970 = vmatpush1.msra.mxu0 0.0
        %971 = vmatprep.subr.mxu0 0.0
        %972 = vmatpush1.msra.mxu0 0.0
        %973 = vmatprep.subr.mxu0 0.0
        %974 = vmatpush1.msra.mxu0 0.0
        %975 = vmatprep.subr.mxu0 0.0
        %976 = vmatpush1.msra.mxu0 0.0
        %977 = vmatprep.subr.mxu0 0.0
        %978 = vmatpush1.msra.mxu0 0.0
        %979 = vmatprep.subr.mxu0 0.0
        %980 = vmatpush1.msra.mxu0 0.0
        %981 = vmatprep.subr.mxu0 0.0
        %982 = vmatpush1.msra.mxu0 0.0
        %983 = vmatprep.subr.mxu0 0.0
        %984 = vmatpush1.msra.mxu0 0.0
        %985 = vmatprep.subr.mxu0 0.0
        %986 = vmatpush1.msra.mxu0 0.0
        %987 = vmatprep.subr.mxu0 0.0
        %988 = vmatpush1.msra.mxu0 0.0
        %989 = vmatprep.subr.mxu0 0.0
        %990 = vmatpush1.msra.mxu0 0.0
        %991 = vmatprep.subr.mxu0 0.0
        %992 = vmatpush1.msra.mxu0 0.0
        %993 = vmatprep.subr.mxu0 0.0
        %994 = vmatpush1.msra.mxu0 0.0
        %995 = vmatprep.subr.mxu0 0.0
        %996 = vmatpush1.msra.mxu0 0.0
        %997 = vmatprep.subr.mxu0 0.0
        %998 = vmatpush1.msra.mxu0 0.0
        %999 = vmatprep.subr.mxu0 0.0
        %1000 = vmatpush1.msra.mxu0 0.0
        %1001 = vmatprep.subr.mxu0 0.0
        %1002 = vmatpush1.msra.mxu0 0.0
        %1003 = vmatprep.subr.mxu0 0.0
        %1004 = vmatpush1.msra.mxu0 0.0
        %1005 = vmatprep.subr.mxu0 0.0
        %1006 = vmatpush1.msra.mxu0 0.0
        %1007 = vmatprep.subr.mxu0 0.0
        %1008 = vmatpush1.msra.mxu0 0.0
        %1009 = vmatprep.subr.mxu0 0.0
        %1010 = vmatpush1.msra.mxu0 0.0
        %1011 = vmatprep.subr.mxu0 0.0
        %1012 = vmatpush1.msra.mxu0 0.0
        %1013 = vmatprep.subr.mxu0 0.0
        %1014 = vmatpush1.msra.mxu0 0.0
        %1015 = vmatprep.subr.mxu0 0.0
        %1016 = vmatpush1.msra.mxu0 0.0
        %1017 = vmatprep.mubr.f32.mxu0 0.0
        %1018 = vmatmul.mubr.f32.gmra.mrb[0].mxu0 %v302
        %v1019 = vpop.f32.mrb[0].mxu0
        %v1020 = vadd.f32 0.0, %v1019
        %v1021 = vpop.f32.mrb[0].mxu0
        %v1022 = vadd.f32 0.0, %v1021
        %1023 = vdwg.mxu0
        %s1024 = scalar_lea.vmem %s259, 288 [#allocation2]
        %v1025 = vld [vmem:[%s1024] sm:$0xff]
        %v1026 = vld [vmem:[%s1024 + $0x8] sm:$0xff]
        %v1027 = vld [vmem:[%s1024 + $0x10] sm:$0xff]
        %v1028 = vld [vmem:[%s1024 + $0x18] sm:$0xff]
        %v1029 = vld [vmem:[%s1024 + $0x20] sm:$0xff]
        %v1030 = vld [vmem:[%s1024 + $0x28] sm:$0xff]
        %v1031 = vld [vmem:[%s1024 + $0x30] sm:$0x1]
        %v1032 = vld [vmem:[%s1024 + $0x38] sm:$0x1]
        %v1033 = vld [vmem:[%s1024 + $0x40] sm:$0x1]
        %v1034 = vld [vmem:[%s1024 + $0x48] sm:$0x1]
        %v1035 = vld [vmem:[%s1024 + $0x50] sm:$0x1]
        %v1036 = vld [vmem:[%s1024 + $0x58] sm:$0x1]
        %v1038 = vsel %vm304, %v1031, 0
        %v1041 = vsel %vm304, %v1032, 0
        %v1044 = vsel %vm304, %v1033, 0
        %v1047 = vsel %vm304, %v1034, 0
        %v1050 = vsel %vm304, %v1035, 0
        %v1053 = vsel %vm304, %v1036, 0
        %1055 = vmatprep.subr.mxu0 %v1026
        %1056 = vmatpush1.msra.mxu0 %v1025
        %1057 = vmatprep.subr.mxu0 %v1041
        %1058 = vmatpush1.msra.mxu0 %v1038
        %1059 = vmatprep.subr.mxu0 0.0
        %1060 = vmatpush1.msra.mxu0 0.0
        %1061 = vmatprep.subr.mxu0 0.0
        %1062 = vmatpush1.msra.mxu0 0.0
        %1063 = vmatprep.subr.mxu0 0.0
        %1064 = vmatpush1.msra.mxu0 0.0
        %1065 = vmatprep.subr.mxu0 0.0
        %1066 = vmatpush1.msra.mxu0 0.0
        %1067 = vmatprep.subr.mxu0 0.0
        %1068 = vmatpush1.msra.mxu0 0.0
        %1069 = vmatprep.subr.mxu0 0.0
        %1070 = vmatpush1.msra.mxu0 0.0
        %1071 = vmatprep.subr.mxu0 0.0
        %1072 = vmatpush1.msra.mxu0 0.0
        %1073 = vmatprep.subr.mxu0 0.0
        %1074 = vmatpush1.msra.mxu0 0.0
        %1075 = vmatprep.subr.mxu0 0.0
        %1076 = vmatpush1.msra.mxu0 0.0
        %1077 = vmatprep.subr.mxu0 0.0
        %1078 = vmatpush1.msra.mxu0 0.0
        %1079 = vmatprep.subr.mxu0 0.0
        %1080 = vmatpush1.msra.mxu0 0.0
        %1081 = vmatprep.subr.mxu0 0.0
        %1082 = vmatpush1.msra.mxu0 0.0
        %1083 = vmatprep.subr.mxu0 0.0
        %1084 = vmatpush1.msra.mxu0 0.0
        %1085 = vmatprep.subr.mxu0 0.0
        %1086 = vmatpush1.msra.mxu0 0.0
        %1087 = vmatprep.subr.mxu0 0.0
        %1088 = vmatpush1.msra.mxu0 0.0
        %1089 = vmatprep.subr.mxu0 0.0
        %1090 = vmatpush1.msra.mxu0 0.0
        %1091 = vmatprep.subr.mxu0 0.0
        %1092 = vmatpush1.msra.mxu0 0.0
        %1093 = vmatprep.subr.mxu0 0.0
        %1094 = vmatpush1.msra.mxu0 0.0
        %1095 = vmatprep.subr.mxu0 0.0
        %1096 = vmatpush1.msra.mxu0 0.0
        %1097 = vmatprep.subr.mxu0 0.0
        %1098 = vmatpush1.msra.mxu0 0.0
        %1099 = vmatprep.subr.mxu0 0.0
        %1100 = vmatpush1.msra.mxu0 0.0
        %1101 = vmatprep.subr.mxu0 0.0
        %1102 = vmatpush1.msra.mxu0 0.0
        %1103 = vmatprep.subr.mxu0 0.0
        %1104 = vmatpush1.msra.mxu0 0.0
        %1105 = vmatprep.subr.mxu0 0.0
        %1106 = vmatpush1.msra.mxu0 0.0
        %1107 = vmatprep.subr.mxu0 0.0
        %1108 = vmatpush1.msra.mxu0 0.0
        %1109 = vmatprep.subr.mxu0 0.0
        %1110 = vmatpush1.msra.mxu0 0.0
        %1111 = vmatprep.subr.mxu0 0.0
        %1112 = vmatpush1.msra.mxu0 0.0
        %1113 = vmatprep.subr.mxu0 0.0
        %1114 = vmatpush1.msra.mxu0 0.0
        %1115 = vmatprep.subr.mxu0 0.0
        %1116 = vmatpush1.msra.mxu0 0.0
        %1117 = vmatprep.subr.mxu0 0.0
        %1118 = vmatpush1.msra.mxu0 0.0
        %1119 = vmatprep.mubr.f32.mxu0 0.0
        %1120 = vmatmul.mubr.f32.gmra.mrb[0].mxu0 %v302
        %v1121 = vpop.f32.mrb[0].mxu0
        %v1122 = vadd.f32 0.0, %v1121
        %v1123 = vpop.f32.mrb[0].mxu0
        %v1124 = vadd.f32 0.0, %v1123
        %1125 = vdwg.mxu0
        %1126 = vmatprep.subr.mxu0 %v1028
        %1127 = vmatpush1.msra.mxu0 %v1027
        %1128 = vmatprep.subr.mxu0 %v1047
        %1129 = vmatpush1.msra.mxu0 %v1044
        %1130 = vmatprep.subr.mxu0 0.0
        %1131 = vmatpush1.msra.mxu0 0.0
        %1132 = vmatprep.subr.mxu0 0.0
        %1133 = vmatpush1.msra.mxu0 0.0
        %1134 = vmatprep.subr.mxu0 0.0
        %1135 = vmatpush1.msra.mxu0 0.0
        %1136 = vmatprep.subr.mxu0 0.0
        %1137 = vmatpush1.msra.mxu0 0.0
        %1138 = vmatprep.subr.mxu0 0.0
        %1139 = vmatpush1.msra.mxu0 0.0
        %1140 = vmatprep.subr.mxu0 0.0
        %1141 = vmatpush1.msra.mxu0 0.0
        %1142 = vmatprep.subr.mxu0 0.0
        %1143 = vmatpush1.msra.mxu0 0.0
        %1144 = vmatprep.subr.mxu0 0.0
        %1145 = vmatpush1.msra.mxu0 0.0
        %1146 = vmatprep.subr.mxu0 0.0
        %1147 = vmatpush1.msra.mxu0 0.0
        %1148 = vmatprep.subr.mxu0 0.0
        %1149 = vmatpush1.msra.mxu0 0.0
        %1150 = vmatprep.subr.mxu0 0.0
        %1151 = vmatpush1.msra.mxu0 0.0
        %1152 = vmatprep.subr.mxu0 0.0
        %1153 = vmatpush1.msra.mxu0 0.0
        %1154 = vmatprep.subr.mxu0 0.0
        %1155 = vmatpush1.msra.mxu0 0.0
        %1156 = vmatprep.subr.mxu0 0.0
        %1157 = vmatpush1.msra.mxu0 0.0
        %1158 = vmatprep.subr.mxu0 0.0
        %1159 = vmatpush1.msra.mxu0 0.0
        %1160 = vmatprep.subr.mxu0 0.0
        %1161 = vmatpush1.msra.mxu0 0.0
        %1162 = vmatprep.subr.mxu0 0.0
        %1163 = vmatpush1.msra.mxu0 0.0
        %1164 = vmatprep.subr.mxu0 0.0
        %1165 = vmatpush1.msra.mxu0 0.0
        %1166 = vmatprep.subr.mxu0 0.0
        %1167 = vmatpush1.msra.mxu0 0.0
        %1168 = vmatprep.subr.mxu0 0.0
        %1169 = vmatpush1.msra.mxu0 0.0
        %1170 = vmatprep.subr.mxu0 0.0
        %1171 = vmatpush1.msra.mxu0 0.0
        %1172 = vmatprep.subr.mxu0 0.0
        %1173 = vmatpush1.msra.mxu0 0.0
        %1174 = vmatprep.subr.mxu0 0.0
        %1175 = vmatpush1.msra.mxu0 0.0
        %1176 = vmatprep.subr.mxu0 0.0
        %1177 = vmatpush1.msra.mxu0 0.0
        %1178 = vmatprep.subr.mxu0 0.0
        %1179 = vmatpush1.msra.mxu0 0.0
        %1180 = vmatprep.subr.mxu0 0.0
        %1181 = vmatpush1.msra.mxu0 0.0
        %1182 = vmatprep.subr.mxu0 0.0
        %1183 = vmatpush1.msra.mxu0 0.0
        %1184 = vmatprep.subr.mxu0 0.0
        %1185 = vmatpush1.msra.mxu0 0.0
        %1186 = vmatprep.subr.mxu0 0.0
        %1187 = vmatpush1.msra.mxu0 0.0
        %1188 = vmatprep.subr.mxu0 0.0
        %1189 = vmatpush1.msra.mxu0 0.0
        %1190 = vmatprep.mubr.f32.mxu0 0.0
        %1191 = vmatmul.mubr.f32.gmra.mrb[0].mxu0 %v302
        %v1192 = vpop.f32.mrb[0].mxu0
        %v1193 = vadd.f32 0.0, %v1192
        %v1194 = vpop.f32.mrb[0].mxu0
        %v1195 = vadd.f32 0.0, %v1194
        %1196 = vdwg.mxu0
        %1197 = vmatprep.subr.mxu0 %v1030
        %1198 = vmatpush1.msra.mxu0 %v1029
        %1199 = vmatprep.subr.mxu0 %v1053
        %1200 = vmatpush1.msra.mxu0 %v1050
        %1201 = vmatprep.subr.mxu0 0.0
        %1202 = vmatpush1.msra.mxu0 0.0
        %1203 = vmatprep.subr.mxu0 0.0
        %1204 = vmatpush1.msra.mxu0 0.0
        %1205 = vmatprep.subr.mxu0 0.0
        %1206 = vmatpush1.msra.mxu0 0.0
        %1207 = vmatprep.subr.mxu0 0.0
        %1208 = vmatpush1.msra.mxu0 0.0
        %1209 = vmatprep.subr.mxu0 0.0
        %1210 = vmatpush1.msra.mxu0 0.0
        %1211 = vmatprep.subr.mxu0 0.0
        %1212 = vmatpush1.msra.mxu0 0.0
        %1213 = vmatprep.subr.mxu0 0.0
        %1214 = vmatpush1.msra.mxu0 0.0
        %1215 = vmatprep.subr.mxu0 0.0
        %1216 = vmatpush1.msra.mxu0 0.0
        %1217 = vmatprep.subr.mxu0 0.0
        %1218 = vmatpush1.msra.mxu0 0.0
        %1219 = vmatprep.subr.mxu0 0.0
        %1220 = vmatpush1.msra.mxu0 0.0
        %1221 = vmatprep.subr.mxu0 0.0
        %1222 = vmatpush1.msra.mxu0 0.0
        %1223 = vmatprep.subr.mxu0 0.0
        %1224 = vmatpush1.msra.mxu0 0.0
        %1225 = vmatprep.subr.mxu0 0.0
        %1226 = vmatpush1.msra.mxu0 0.0
        %1227 = vmatprep.subr.mxu0 0.0
        %1228 = vmatpush1.msra.mxu0 0.0
        %1229 = vmatprep.subr.mxu0 0.0
        %1230 = vmatpush1.msra.mxu0 0.0
        %1231 = vmatprep.subr.mxu0 0.0
        %1232 = vmatpush1.msra.mxu0 0.0
        %1233 = vmatprep.subr.mxu0 0.0
        %1234 = vmatpush1.msra.mxu0 0.0
        %1235 = vmatprep.subr.mxu0 0.0
        %1236 = vmatpush1.msra.mxu0 0.0
        %1237 = vmatprep.subr.mxu0 0.0
        %1238 = vmatpush1.msra.mxu0 0.0
        %1239 = vmatprep.subr.mxu0 0.0
        %1240 = vmatpush1.msra.mxu0 0.0
        %1241 = vmatprep.subr.mxu0 0.0
        %1242 = vmatpush1.msra.mxu0 0.0
        %1243 = vmatprep.subr.mxu0 0.0
        %1244 = vmatpush1.msra.mxu0 0.0
        %1245 = vmatprep.subr.mxu0 0.0
        %1246 = vmatpush1.msra.mxu0 0.0
        %1247 = vmatprep.subr.mxu0 0.0
        %1248 = vmatpush1.msra.mxu0 0.0
        %1249 = vmatprep.subr.mxu0 0.0
        %1250 = vmatpush1.msra.mxu0 0.0
        %1251 = vmatprep.subr.mxu0 0.0
        %1252 = vmatpush1.msra.mxu0 0.0
        %1253 = vmatprep.subr.mxu0 0.0
        %1254 = vmatpush1.msra.mxu0 0.0
        %1255 = vmatprep.subr.mxu0 0.0
        %1256 = vmatpush1.msra.mxu0 0.0
        %1257 = vmatprep.subr.mxu0 0.0
        %1258 = vmatpush1.msra.mxu0 0.0
        %1259 = vmatprep.subr.mxu0 0.0
        %1260 = vmatpush1.msra.mxu0 0.0
        %1261 = vmatprep.mubr.f32.mxu0 0.0
        %1262 = vmatmul.mubr.f32.gmra.mrb[0].mxu0 %v302
        %v1263 = vpop.f32.mrb[0].mxu0
        %v1264 = vadd.f32 0.0, %v1263
        %v1265 = vpop.f32.mrb[0].mxu0
        %v1266 = vadd.f32 0.0, %v1265
        %1267 = vdwg.mxu0
        %v1268 = vmax.f32 %v390, %v634
        %v1269 = vmax.f32 %v392, %v636
        %v1270 = vmax.f32 %v461, %v705
        %v1271 = vmax.f32 %v463, %v707
        %v1272 = vmax.f32 %v532, %v776
        %v1273 = vmax.f32 %v534, %v778
        %v1274 = vmax.f32 %v878, %v1122
        %v1275 = vmax.f32 %v880, %v1124
        %v1276 = vmax.f32 %v949, %v1193
        %v1277 = vmax.f32 %v951, %v1195
        %v1278 = vmax.f32 %v1020, %v1264
        %v1279 = vmax.f32 %v1022, %v1266
        %v1280 = vmax.f32 %v1268, %v1274
        %v1281 = vmax.f32 %v1269, %v1275
        %v1282 = vmax.f32 %v1270, %v1276
        %v1283 = vmax.f32 %v1271, %v1277
        %v1284 = vmax.f32 %v1272, %v1278
        %v1285 = vmax.f32 %v1273, %v1279
        %v1286 = vld [vmem:[%s2] sm:$0x1f]
        %1288 = vset.pattern.permute.xlu0 0
        %1289 = vperm.xlu0 %1288, %v1286
        %v1290 = vpop.permute.xlu0 %1289
        %v1292 = vadd.f32 %v1280, %v1290
        %v1293 = vadd.f32 %v1281, %v1290
        %v1294 = vadd.f32 %v1282, %v1290
        %v1295 = vadd.f32 %v1283, %v1290
        %v1296 = vadd.f32 %v1284, %v1290
        %v1297 = vadd.f32 %v1285, %v1290
        %v1298 = vmax.f32 %v1292, 0.0
        %v1299 = vmax.f32 %v1293, 0.0
        %v1300 = vmax.f32 %v1294, 0.0
        %v1301 = vmax.f32 %v1295, 0.0
        %v1302 = vmax.f32 %v1296, 0.0
        %v1303 = vmax.f32 %v1297, 0.0
        %1304 = vst [vmem:[%s285] sm:$0x1f] %v1298
        %1305 = vst [vmem:[%s285 + $0x8] sm:$0x1f] %v1299
        %1306 = vst [vmem:[%s285 + $0x10] sm:$0x1f] %v1300
        %1307 = vst [vmem:[%s285 + $0x18] sm:$0x1f] %v1301
        %1308 = vst [vmem:[%s285 + $0x20] sm:$0x1f] %v1302
        %1309 = vst [vmem:[%s285 + $0x28] sm:$0x1f] %v1303
        %s1310 = smul.u32 6, %s14
        %p1311 = scmp.lt.s32.totalorder %s1310, 11
        %s1312 = scalar_select %p1311, %s1310, 11
        %s1313 = smul.addr %s1312, 8
        %s1314 = scalar_lea.vmem %s3, %s1313
        // Predicated region
        $region56: #{forward_pallas.3} parent=50 // pred_check
          %p1315 = pneg %p100
        $region57: #{forward_pallas.3} parent=50 // pred_check_branch
          %1317 = sbr.rel (%p1315) target = $region59
        $region58: #{forward_pallas.3} parent=50 // pred_region
          %s1318 = smul.u32 6, %s14
        $region59: #{forward_pallas.3} parent=50 // pred_fallthru
          _
      $region51: #{forward_pallas.3} parent=5 // pred_fallthru
        _
      %p1319 = scmp.le.s32.totalorder 2, %s9
      // Predicated region
      $region60: #{forward_pallas.3} parent=5 // pred_check
        %p1320 = pneg %p1319
      $region61: #{forward_pallas.3} parent=5 // pred_check_branch
        %1322 = sbr.rel (%p1320) target = $region63
      $region62: #{forward_pallas.3} parent=5 // pred_region
        %s1323 = ssub.s32 %s9, 2
        // Predicated region
        $region64: #{forward_pallas.3} parent=62 // pred_check
          %p1324 = pneg %p106
        $region65: #{forward_pallas.3} parent=62 // pred_check_branch
          %1326 = sbr.rel (%p1324) target = $region67
        $region66: #{forward_pallas.3} parent=62 // pred_region
          %s1327 = smul.u32 6, %s15
          %p1328 = scmp.lt.s32.totalorder %s1327, 11
          %s1329 = scalar_select %p1328, %s1327, 11
          %s1330 = smul.addr %s1329, 8
          %s1331 = scalar_lea.vmem %s3, %s1330
        $region67: #{forward_pallas.3} parent=62 // pred_fallthru
          _
      $region63: #{forward_pallas.3} parent=5 // pred_fallthru
        _
    $region6: #{forward_pallas.3} parent=1 // loop_footer
      %s13 = sadd.s32 1, %s9
    $region7: #{forward_pallas.3} parent=1 // loop_footer_branch
      %8 = sbr.rel target = $region3
    $region8: #{forward_pallas.3} parent=1 // loop_exit
      _

// kernel: forward_pallas.4
$region0: #{forward_pallas.4}
  #allocation0 [shape = 'u32[]', space=smem, size = 0x4, offset = 0x4, fixed_abs, tag = 'smem constant byte address 0x4 - core index']
  #allocation1 [shape = 'u32[144,128]{1,0:T(1,128)}', space=vmem, size = 0x12000, scoped, tag = 'internal scratch']
  %s0 = inlined_call_operand.vmem [shape: f32[4,45,256], index: 0, kind: input, shape index: {}]
  %s1 = inlined_call_operand.vmem [shape: f32[10,45], index: 1, kind: input, shape index: {}]
  %s2 = inlined_call_operand.vmem [shape: f32[10,1], index: 2, kind: input, shape index: {}]
  %s3 = inlined_call_operand.vmem [shape: f32[10,256], index: 3, kind: output, shape index: {}]
  %s4 = sld [smem:[#allocation0]]
  $region117: #{forward_pallas.4} parent=0
    _
  %s6 = ssub.s32 1, %s4
  %s7 = scalar_select 0, %s6, %s4
  $region1: #{forward_pallas.4} parent=0
    #allocation2 [shape = 'u8[196608]{0}', space=vmem, size = 0x30000, scoped, tag = 'input window, operand 0']
    #allocation3 [shape = 'u8[16384]{0}', space=vmem, size = 0x4000, scoped, tag = 'output window, operand 0']
    loop: start=0, step=1, limit=4
    $region2: #{forward_pallas.4} parent=1 // loop_pre_header
      _
    $region3: #{forward_pallas.4} parent=1 // loop_header
      %s9 = sphi 0, %s13
      %p10 = scmp.ge.s32.totalorder %s9, 4
      %s19 = sphi 0, %s21
      %s22 = sphi 0, %s19
      %s23 = sphi 0, %s22
      %s39 = sphi 0, %s23
      %s43 = sphi 0, %s43
      %s45 = sphi 0, %s43
      %s46 = sphi 0, %s45
      %s60 = sphi 0, %s46
      %s64 = sphi 0, %s64
      %s66 = sphi 0, %s64
      %s67 = sphi 0, %s66
      %s81 = sphi 0, %s67
      %s87 = sphi 0, %s89
      %s90 = sphi 0, %s87
      %s91 = sphi 0, %s90
      %s107 = sphi 0, %s91
    $region4: #{forward_pallas.4} parent=1 // loop_header_branch
      %12 = sbr.rel (%p10) target = $region8
    $region5: #{forward_pallas.4} parent=1 // loop_body
      %s14 = ssub.s32 %s9, 1
      %s15 = ssub.s32 %s9, 2
      %s16 = sadd.s32 %s9, 1
      %s17 = ssub.s32 %s9, %s16
      %p18 = scmp.eq.s32.totalorder %s17, 0
      %s20 = sadd.s32 %s19, 1
      %s21 = scalar_select %p18, %s19, %s20
      %p24 = pneg %p18
      %p25 = scmp.eq.s32.totalorder %s9, 1
      %p26 = por %p24, %p25
      %p27 = scmp.ne.s32.totalorder %s19, %s22
      %p28 = scmp.eq.s32.totalorder %s9, 0
      %p29 = por %p27, %p28
      %p30 = scmp.ne.s32.totalorder %s19, %s22
      %p31 = scmp.eq.s32.totalorder %s14, 1
      %p32 = por %p30, %p31
      %p33 = scmp.ne.s32.totalorder %s22, %s23
      %p34 = scmp.eq.s32.totalorder %s14, 0
      %p35 = por %p33, %p34
      %p36 = scmp.ne.s32.totalorder %s22, %s23
      %p37 = scmp.eq.s32.totalorder %s15, 1
      %p38 = por %p36, %p37
      %p40 = scmp.ne.s32.totalorder %s23, %s39
      %p41 = scmp.eq.s32.totalorder %s15, 0
      %p42 = por %p40, %p41
      %s44 = sadd.s32 %s43, 1
      %p47 = scmp.eq.s32.totalorder %s9, 1
      %p48 = scmp.ne.s32.totalorder %s43, %s45
      %p49 = scmp.eq.s32.totalorder %s9, 0
      %p50 = por %p48, %p49
      %p51 = scmp.ne.s32.totalorder %s43, %s45
      %p52 = scmp.eq.s32.totalorder %s14, 1
      %p53 = por %p51, %p52
      %p54 = scmp.ne.s32.totalorder %s45, %s46
      %p55 = scmp.eq.s32.totalorder %s14, 0
      %p56 = por %p54, %p55
      %p57 = scmp.ne.s32.totalorder %s45, %s46
      %p58 = scmp.eq.s32.totalorder %s15, 1
      %p59 = por %p57, %p58
      %p61 = scmp.ne.s32.totalorder %s46, %s60
      %p62 = scmp.eq.s32.totalorder %s15, 0
      %p63 = por %p61, %p62
      %s65 = sadd.s32 %s64, 1
      %p68 = scmp.eq.s32.totalorder %s9, 1
      %p69 = scmp.ne.s32.totalorder %s64, %s66
      %p70 = scmp.eq.s32.totalorder %s9, 0
      %p71 = por %p69, %p70
      %p72 = scmp.ne.s32.totalorder %s64, %s66
      %p73 = scmp.eq.s32.totalorder %s14, 1
      %p74 = por %p72, %p73
      %p75 = scmp.ne.s32.totalorder %s66, %s67
      %p76 = scmp.eq.s32.totalorder %s14, 0
      %p77 = por %p75, %p76
      %p78 = scmp.ne.s32.totalorder %s66, %s67
      %p79 = scmp.eq.s32.totalorder %s15, 1
      %p80 = por %p78, %p79
      %p82 = scmp.ne.s32.totalorder %s67, %s81
      %p83 = scmp.eq.s32.totalorder %s15, 0
      %p84 = por %p82, %p83
      %s85 = ssub.s32 %s9, %s16
      %p86 = scmp.eq.s32.totalorder %s85, 0
      %s88 = sadd.s32 %s87, 1
      %s89 = scalar_select %p86, %s87, %s88
      %p92 = pneg %p86
      %p93 = scmp.eq.s32.totalorder %s9, 1
      %p94 = por %p92, %p93
      %p95 = scmp.ne.s32.totalorder %s87, %s90
      %p96 = scmp.eq.s32.totalorder %s9, 0
      %p97 = por %p95, %p96
      %p98 = scmp.ne.s32.totalorder %s87, %s90
      %p99 = scmp.eq.s32.totalorder %s14, 1
      %p100 = por %p98, %p99
      %p101 = scmp.ne.s32.totalorder %s90, %s91
      %p102 = scmp.eq.s32.totalorder %s14, 0
      %p103 = por %p101, %p102
      %p104 = scmp.ne.s32.totalorder %s90, %s91
      %p105 = scmp.eq.s32.totalorder %s15, 1
      %p106 = por %p104, %p105
      %p108 = scmp.ne.s32.totalorder %s91, %s107
      %p109 = scmp.eq.s32.totalorder %s15, 0
      %p110 = por %p108, %p109
      %p111 = scmp.le.s32.totalorder 1, %s9
      %p112 = scmp.lt.s32.totalorder %s9, 3
      %p113 = pnand %p111, %p112
      %p114 = pneg %p113
      // Predicated region
      $region9: #{forward_pallas.4} parent=5 // pred_check
        _
      $region10: #{forward_pallas.4} parent=5 // pred_check_branch
        %116 = sbr.rel (%p113) target = $region12
      $region11: #{forward_pallas.4} parent=5 // pred_region
        %s117 = ssub.s32 %s9, 1
        // Predicated region
        $region13: #{forward_pallas.4} parent=11 // pred_check
          %p118 = pneg %p56
        $region14: #{forward_pallas.4} parent=11 // pred_check_branch
          %120 = sbr.rel (%p118) target = $region16
        $region15: #{forward_pallas.4} parent=11 // pred_region
          _
        $region16: #{forward_pallas.4} parent=11 // pred_fallthru
          _
        // Predicated region
        $region17: #{forward_pallas.4} parent=11 // pred_check
          %p121 = pneg %p77
        $region18: #{forward_pallas.4} parent=11 // pred_check_branch
          %123 = sbr.rel (%p121) target = $region20
        $region19: #{forward_pallas.4} parent=11 // pred_region
          _
        $region20: #{forward_pallas.4} parent=11 // pred_fallthru
          _
      $region12: #{forward_pallas.4} parent=5 // pred_fallthru
        _
      %p124 = scmp.lt.s32.totalorder %s9, 2
      // Predicated region
      $region21: #{forward_pallas.4} parent=5 // pred_check
        %p125 = pneg %p124
      $region22: #{forward_pallas.4} parent=5 // pred_check_branch
        %127 = sbr.rel (%p125) target = $region24
      $region23: #{forward_pallas.4} parent=5 // pred_region
        // Predicated region
        $region25: #{forward_pallas.4} parent=23 // pred_check
          %p128 = pneg %p29
        $region26: #{forward_pallas.4} parent=23 // pred_check_branch
          %130 = sbr.rel (%p128) target = $region28
        $region27: #{forward_pallas.4} parent=23 // pred_region
          %s131 = sand.u32 %s19, 1
          %s132 = sand.u32 %s19, 1
          %s133 = smul.addr %s132, 192
          %s134 = scalar_lea.vmem [#allocation2], %s133
          %s135 = smul.addr %s9, 8
          %s136 = scalar_lea.vmem %s0, %s135
          // Predicated region
          $region29: #{forward_pallas.4} parent=27 // pred_check
            _
          $region30: #{forward_pallas.4} parent=27 // pred_check_branch
            %138 = sbr.rel (0) target = $region32
          $region31: #{forward_pallas.4} parent=27 // pred_region
            // Predicated region
            $region33: #{forward_pallas.4} parent=31 // pred_check
              _
            $region34: #{forward_pallas.4} parent=31 // pred_check_branch
              %140 = sbr.rel (0) target = $region36
            $region35: #{forward_pallas.4} parent=31 // pred_region
              // Predicated region
              $region48: #{forward_pallas.4} parent=35 // pred_check
                _
              $region49: #{forward_pallas.4} parent=35 // pred_check_branch
                %201 = sbr.rel (0) target = $region51
              $region50: #{forward_pallas.4} parent=35 // pred_region
                loop: start=0, step=1, limit=1
                $region52: #{forward_pallas.4} parent=50 // loop_pre_header
                  _
                $region53: #{forward_pallas.4} parent=50 // loop_header
                  %s203 = sphi 0, %s207
                  %p204 = scmp.ge.s32.totalorder %s203, 1
                  %s208 = sphi %s136, %s136
                  %s209 = sphi %s134, %s134
                $region54: #{forward_pallas.4} parent=50 // loop_header_branch
                  %206 = sbr.rel (%p204) target = $region58
                $region55: #{forward_pallas.4} parent=50 // loop_body
                  %v210 = vld [vmem:[%s208] sm:$0xff]
                  %211 = vst [vmem:[%s209] sm:$0xff] %v210
                  %v212 = vld [vmem:[%s208 + $0x10] sm:$0xff]
                  %213 = vst [vmem:[%s209 + $0x8] sm:$0xff] %v212
                  %v214 = vld [vmem:[%s208 + $0x20] sm:$0xff]
                  %215 = vst [vmem:[%s209 + $0x10] sm:$0xff] %v214
                  %v216 = vld [vmem:[%s208 + $0x30] sm:$0xff]
                  %217 = vst [vmem:[%s209 + $0x18] sm:$0xff] %v216
                  %v218 = vld [vmem:[%s208 + $0x40] sm:$0xff]
                  %219 = vst [vmem:[%s209 + $0x20] sm:$0xff] %v218
                  %v220 = vld [vmem:[%s208 + $0x50] sm:$0xff]
                  %221 = vst [vmem:[%s209 + $0x28] sm:$0xff] %v220
                  %v222 = vld [vmem:[%s208 + $0x60] sm:$0xff]
                  %223 = vst [vmem:[%s209 + $0x30] sm:$0xff] %v222
                  %v224 = vld [vmem:[%s208 + $0x70] sm:$0xff]
                  %225 = vst [vmem:[%s209 + $0x38] sm:$0xff] %v224
                  %v226 = vld [vmem:[%s208 + $0x80] sm:$0xff]
                  %227 = vst [vmem:[%s209 + $0x40] sm:$0xff] %v226
                  %v228 = vld [vmem:[%s208 + $0x90] sm:$0xff]
                  %229 = vst [vmem:[%s209 + $0x48] sm:$0xff] %v228
                  %v230 = vld [vmem:[%s208 + $0xa0] sm:$0xff]
                  %231 = vst [vmem:[%s209 + $0x50] sm:$0xff] %v230
                  %v232 = vld [vmem:[%s208 + $0xb0] sm:$0xff]
                  %233 = vst [vmem:[%s209 + $0x58] sm:$0xff] %v232
                  %v234 = vld [vmem:[%s208 + $0xc0] sm:$0xff]
                  %235 = vst [vmem:[%s209 + $0x60] sm:$0xff] %v234
                  %v236 = vld [vmem:[%s208 + $0xd0] sm:$0xff]
                  %237 = vst [vmem:[%s209 + $0x68] sm:$0xff] %v236
                  %v238 = vld [vmem:[%s208 + $0xe0] sm:$0xff]
                  %239 = vst [vmem:[%s209 + $0x70] sm:$0xff] %v238
                  %v240 = vld [vmem:[%s208 + $0xf0] sm:$0xff]
                  %241 = vst [vmem:[%s209 + $0x78] sm:$0xff] %v240
                  %v242 = vld [vmem:[%s208 + $0x100] sm:$0xff]
                  %243 = vst [vmem:[%s209 + $0x80] sm:$0xff] %v242
                  %v244 = vld [vmem:[%s208 + $0x110] sm:$0xff]
                  %245 = vst [vmem:[%s209 + $0x88] sm:$0xff] %v244
                  %v246 = vld [vmem:[%s208 + $0x120] sm:$0xff]
                  %247 = vst [vmem:[%s209 + $0x90] sm:$0xff] %v246
                  %v248 = vld [vmem:[%s208 + $0x130] sm:$0xff]
                  %249 = vst [vmem:[%s209 + $0x98] sm:$0xff] %v248
                  %v250 = vld [vmem:[%s208 + $0x140] sm:$0xff]
                  %251 = vst [vmem:[%s209 + $0xa0] sm:$0xff] %v250
                  %v252 = vld [vmem:[%s208 + $0x150] sm:$0xff]
                  %253 = vst [vmem:[%s209 + $0xa8] sm:$0xff] %v252
                  %v254 = vld [vmem:[%s208 + $0x160] sm:$0xff]
                  %255 = vst [vmem:[%s209 + $0xb0] sm:$0xff] %v254
                  %v256 = vld [vmem:[%s208 + $0x170] sm:$0xff]
                  %257 = vst [vmem:[%s209 + $0xb8] sm:$0xff] %v256
                $region56: #{forward_pallas.4} parent=50 // loop_footer
                  %s207 = sadd.s32 1, %s203
                $region57: #{forward_pallas.4} parent=50 // loop_footer_branch
                  %202 = sbr.rel target = $region53
                $region58: #{forward_pallas.4} parent=50 // loop_exit
                  _
              $region51: #{forward_pallas.4} parent=35 // pred_fallthru
                _
              // Predicated region
              $region59: #{forward_pallas.4} parent=35 // pred_check
                _
              $region60: #{forward_pallas.4} parent=35 // pred_check_branch
                %259 = sbr.rel target = $region62
              $region61: #{forward_pallas.4} parent=35 // pred_region
                _
              $region62: #{forward_pallas.4} parent=35 // pred_fallthru
                _
            $region36: #{forward_pallas.4} parent=31 // pred_fallthru
              _
            // Predicated region
            $region37: #{forward_pallas.4} parent=31 // pred_check
              _
            $region38: #{forward_pallas.4} parent=31 // pred_check_branch
              %142 = sbr.rel target = $region40
            $region39: #{forward_pallas.4} parent=31 // pred_region
              loop: start=0, step=1, limit=1
              $region41: #{forward_pallas.4} parent=39 // loop_pre_header
                _
              $region42: #{forward_pallas.4} parent=39 // loop_header
                %s145 = sphi 0, %s149
                %p146 = scmp.ge.s32.totalorder %s145, 1
                %s150 = sphi %s136, %s136
                %s151 = sphi %s134, %s134
              $region43: #{forward_pallas.4} parent=39 // loop_header_branch
                %148 = sbr.rel (%p146) target = $region47
              $region44: #{forward_pallas.4} parent=39 // loop_body
                %v152 = vld [vmem:[%s150] sm:$0xff]
                %153 = vst [vmem:[%s151] sm:$0xff] %v152
                %v154 = vld [vmem:[%s150 + $0x10] sm:$0xff]
                %155 = vst [vmem:[%s151 + $0x8] sm:$0xff] %v154
                %v156 = vld [vmem:[%s150 + $0x20] sm:$0xff]
                %157 = vst [vmem:[%s151 + $0x10] sm:$0xff] %v156
                %v158 = vld [vmem:[%s150 + $0x30] sm:$0xff]
                %159 = vst [vmem:[%s151 + $0x18] sm:$0xff] %v158
                %v160 = vld [vmem:[%s150 + $0x40] sm:$0xff]
                %161 = vst [vmem:[%s151 + $0x20] sm:$0xff] %v160
                %v162 = vld [vmem:[%s150 + $0x50] sm:$0xff]
                %163 = vst [vmem:[%s151 + $0x28] sm:$0xff] %v162
                %v164 = vld [vmem:[%s150 + $0x60] sm:$0xff]
                %165 = vst [vmem:[%s151 + $0x30] sm:$0xff] %v164
                %v166 = vld [vmem:[%s150 + $0x70] sm:$0xff]
                %167 = vst [vmem:[%s151 + $0x38] sm:$0xff] %v166
                %v168 = vld [vmem:[%s150 + $0x80] sm:$0xff]
                %169 = vst [vmem:[%s151 + $0x40] sm:$0xff] %v168
                %v170 = vld [vmem:[%s150 + $0x90] sm:$0xff]
                %171 = vst [vmem:[%s151 + $0x48] sm:$0xff] %v170
                %v172 = vld [vmem:[%s150 + $0xa0] sm:$0xff]
                %173 = vst [vmem:[%s151 + $0x50] sm:$0xff] %v172
                %v174 = vld [vmem:[%s150 + $0xb0] sm:$0xff]
                %175 = vst [vmem:[%s151 + $0x58] sm:$0xff] %v174
                %v176 = vld [vmem:[%s150 + $0xc0] sm:$0xff]
                %177 = vst [vmem:[%s151 + $0x60] sm:$0xff] %v176
                %v178 = vld [vmem:[%s150 + $0xd0] sm:$0xff]
                %179 = vst [vmem:[%s151 + $0x68] sm:$0xff] %v178
                %v180 = vld [vmem:[%s150 + $0xe0] sm:$0xff]
                %181 = vst [vmem:[%s151 + $0x70] sm:$0xff] %v180
                %v182 = vld [vmem:[%s150 + $0xf0] sm:$0xff]
                %183 = vst [vmem:[%s151 + $0x78] sm:$0xff] %v182
                %v184 = vld [vmem:[%s150 + $0x100] sm:$0xff]
                %185 = vst [vmem:[%s151 + $0x80] sm:$0xff] %v184
                %v186 = vld [vmem:[%s150 + $0x110] sm:$0xff]
                %187 = vst [vmem:[%s151 + $0x88] sm:$0xff] %v186
                %v188 = vld [vmem:[%s150 + $0x120] sm:$0xff]
                %189 = vst [vmem:[%s151 + $0x90] sm:$0xff] %v188
                %v190 = vld [vmem:[%s150 + $0x130] sm:$0xff]
                %191 = vst [vmem:[%s151 + $0x98] sm:$0xff] %v190
                %v192 = vld [vmem:[%s150 + $0x140] sm:$0xff]
                %193 = vst [vmem:[%s151 + $0xa0] sm:$0xff] %v192
                %v194 = vld [vmem:[%s150 + $0x150] sm:$0xff]
                %195 = vst [vmem:[%s151 + $0xa8] sm:$0xff] %v194
                %v196 = vld [vmem:[%s150 + $0x160] sm:$0xff]
                %197 = vst [vmem:[%s151 + $0xb0] sm:$0xff] %v196
                %v198 = vld [vmem:[%s150 + $0x170] sm:$0xff]
                %199 = vst [vmem:[%s151 + $0xb8] sm:$0xff] %v198
              $region45: #{forward_pallas.4} parent=39 // loop_footer
                %s149 = sadd.s32 1, %s145
              $region46: #{forward_pallas.4} parent=39 // loop_footer_branch
                %144 = sbr.rel target = $region42
              $region47: #{forward_pallas.4} parent=39 // loop_exit
                _
            $region40: #{forward_pallas.4} parent=31 // pred_fallthru
              _
          $region32: #{forward_pallas.4} parent=27 // pred_fallthru
            _
          %260 = vnop
        $region28: #{forward_pallas.4} parent=23 // pred_fallthru
          _
      $region24: #{forward_pallas.4} parent=5 // pred_fallthru
        _
      %p261 = scmp.le.s32.totalorder 1, %s9
      %p262 = scmp.lt.s32.totalorder %s9, 3
      %p263 = pnand %p261, %p262
      %p264 = pneg %p263
      // Predicated region
      $region63: #{forward_pallas.4} parent=5 // pred_check
        _
      $region64: #{forward_pallas.4} parent=5 // pred_check_branch
        %266 = sbr.rel (%p263) target = $region66
      $region65: #{forward_pallas.4} parent=5 // pred_region
        %s267 = ssub.s32 %s9, 1
        %s268 = sand.u32 %s22, 1
        %s269 = sand.u32 %s22, 1
        %s270 = smul.addr %s269, 192
        %s271 = scalar_lea.vmem [#allocation2], %s270
        // Predicated region
        $region67: #{forward_pallas.4} parent=65 // pred_check
          %p272 = pneg %p35
        $region68: #{forward_pallas.4} parent=65 // pred_check_branch
          %274 = sbr.rel (%p272) target = $region70
        $region69: #{forward_pallas.4} parent=65 // pred_region
          _
        $region70: #{forward_pallas.4} parent=65 // pred_fallthru
          _
        %s275 = sand.u32 %s22, 1
        %s276 = sand.u32 %s22, 1
        %s277 = smul.addr %s276, 192
        %s278 = scalar_lea.vmem [#allocation2], %s277
        %p279 = pneg %p35
        %p280 = pneg %p32
        %p281 = pneg %p56
        %p282 = pneg %p53
        %p283 = pneg %p77
        %p284 = pneg %p74
        %p285 = pneg %p103
        %p286 = pneg %p100
        %s287 = sand.u32 %s90, 1
        %s288 = sand.u32 %s90, 1
        %s289 = smul.addr %s288, 16
        %s290 = scalar_lea.vmem [#allocation3], %s289
        %v291 = vld [vmem:[%s1] sm:$0xff]
        %v292 = vld [vmem:[%s1 + $0x8] sm:$0x3]
        %v293 = vld [vmem:[%s271] sm:$0xff]
        %v294 = vld [vmem:[%s271 + $0x8] sm:$0xff]
        %v295 = vld [vmem:[%s271 + $0x10] sm:$0xff]
        %v296 = vld [vmem:[%s271 + $0x18] sm:$0xff]
        %v297 = vld [vmem:[%s271 + $0x20] sm:$0xff]
        %v298 = vld [vmem:[%s271 + $0x28] sm:$0x1f]
        %vm299 = vcmask 367616
        %v301 = vsel %vm299, %v291, 0
        %v304 = vsel %vm299, %v292, 0
        %vm306 = vcmask 1044480
        %v308 = vsel %vm306, %v298, 0
        %310 = vmatprep.subr.mxu0 0.0
        %311 = vmatpush1.msra.mxu0 %v293
        %312 = vmatprep.subr.mxu0 0.0
        %313 = vmatpush1.msra.mxu0 %v294
        %314 = vmatprep.subr.mxu0 0.0
        %315 = vmatpush1.msra.mxu0 %v295
        %316 = vmatprep.subr.mxu0 0.0
        %317 = vmatpush1.msra.mxu0 %v296
        %318 = vmatprep.subr.mxu0 0.0
        %319 = vmatpush1.msra.mxu0 %v297
        %320 = vmatprep.subr.mxu0 0.0
        %321 = vmatpush1.msra.mxu0 %v308
        %322 = vmatprep.subr.mxu0 0.0
        %323 = vmatpush1.msra.mxu0 0.0
        %324 = vmatprep.subr.mxu0 0.0
        %325 = vmatpush1.msra.mxu0 0.0
        %326 = vmatprep.subr.mxu0 0.0
        %327 = vmatpush1.msra.mxu0 0.0
        %328 = vmatprep.subr.mxu0 0.0
        %329 = vmatpush1.msra.mxu0 0.0
        %330 = vmatprep.subr.mxu0 0.0
        %331 = vmatpush1.msra.mxu0 0.0
        %332 = vmatprep.subr.mxu0 0.0
        %333 = vmatpush1.msra.mxu0 0.0
        %334 = vmatprep.subr.mxu0 0.0
        %335 = vmatpush1.msra.mxu0 0.0
        %336 = vmatprep.subr.mxu0 0.0
        %337 = vmatpush1.msra.mxu0 0.0
        %338 = vmatprep.subr.mxu0 0.0
        %339 = vmatpush1.msra.mxu0 0.0
        %340 = vmatprep.subr.mxu0 0.0
        %341 = vmatpush1.msra.mxu0 0.0
        %342 = vmatprep.subr.mxu0 0.0
        %343 = vmatpush1.msra.mxu0 0.0
        %344 = vmatprep.subr.mxu0 0.0
        %345 = vmatpush1.msra.mxu0 0.0
        %346 = vmatprep.subr.mxu0 0.0
        %347 = vmatpush1.msra.mxu0 0.0
        %348 = vmatprep.subr.mxu0 0.0
        %349 = vmatpush1.msra.mxu0 0.0
        %350 = vmatprep.subr.mxu0 0.0
        %351 = vmatpush1.msra.mxu0 0.0
        %352 = vmatprep.subr.mxu0 0.0
        %353 = vmatpush1.msra.mxu0 0.0
        %354 = vmatprep.subr.mxu0 0.0
        %355 = vmatpush1.msra.mxu0 0.0
        %356 = vmatprep.subr.mxu0 0.0
        %357 = vmatpush1.msra.mxu0 0.0
        %358 = vmatprep.subr.mxu0 0.0
        %359 = vmatpush1.msra.mxu0 0.0
        %360 = vmatprep.subr.mxu0 0.0
        %361 = vmatpush1.msra.mxu0 0.0
        %362 = vmatprep.subr.mxu0 0.0
        %363 = vmatpush1.msra.mxu0 0.0
        %364 = vmatprep.subr.mxu0 0.0
        %365 = vmatpush1.msra.mxu0 0.0
        %366 = vmatprep.subr.mxu0 0.0
        %367 = vmatpush1.msra.mxu0 0.0
        %368 = vmatprep.subr.mxu0 0.0
        %369 = vmatpush1.msra.mxu0 0.0
        %370 = vmatprep.subr.mxu0 0.0
        %371 = vmatpush1.msra.mxu0 0.0
        %372 = vmatprep.subr.mxu0 0.0
        %373 = vmatpush1.msra.mxu0 0.0
        %374 = vmatprep.mubr.f32.mxu0 0.0
        %375 = vmatmul.mubr.f32.gmra.mrb[0].mxu0 %v301
        %v376 = vpop.f32.mrb[0].mxu0
        %v377 = vadd.f32 0.0, %v376
        %v378 = vpop.f32.mrb[0].mxu0
        %379 = vmatprep.mubr.f32.mxu0 0.0
        %380 = vmatmul.mubr.f32.gmra.mrb[0].mxu0 %v304
        %v381 = vpop.f32.mrb[0].mxu0
        %v382 = vadd.f32 0.0, %v381
        %v383 = vpop.f32.mrb[0].mxu0
        %384 = vdwg.mxu0
        %s385 = scalar_lea.vmem %s271, 48 [#allocation2]
        %v386 = vld [vmem:[%s385] sm:$0xff]
        %v387 = vld [vmem:[%s385 + $0x8] sm:$0xff]
        %v388 = vld [vmem:[%s385 + $0x10] sm:$0xff]
        %v389 = vld [vmem:[%s385 + $0x18] sm:$0xff]
        %v390 = vld [vmem:[%s385 + $0x20] sm:$0xff]
        %v391 = vld [vmem:[%s385 + $0x28] sm:$0x1f]
        %v393 = vsel %vm306, %v391, 0
        %395 = vmatprep.subr.mxu0 0.0
        %396 = vmatpush1.msra.mxu0 %v386
        %397 = vmatprep.subr.mxu0 0.0
        %398 = vmatpush1.msra.mxu0 %v387
        %399 = vmatprep.subr.mxu0 0.0
        %400 = vmatpush1.msra.mxu0 %v388
        %401 = vmatprep.subr.mxu0 0.0
        %402 = vmatpush1.msra.mxu0 %v389
        %403 = vmatprep.subr.mxu0 0.0
        %404 = vmatpush1.msra.mxu0 %v390
        %405 = vmatprep.subr.mxu0 0.0
        %406 = vmatpush1.msra.mxu0 %v393
        %407 = vmatprep.subr.mxu0 0.0
        %408 = vmatpush1.msra.mxu0 0.0
        %409 = vmatprep.subr.mxu0 0.0
        %410 = vmatpush1.msra.mxu0 0.0
        %411 = vmatprep.subr.mxu0 0.0
        %412 = vmatpush1.msra.mxu0 0.0
        %413 = vmatprep.subr.mxu0 0.0
        %414 = vmatpush1.msra.mxu0 0.0
        %415 = vmatprep.subr.mxu0 0.0
        %416 = vmatpush1.msra.mxu0 0.0
        %417 = vmatprep.subr.mxu0 0.0
        %418 = vmatpush1.msra.mxu0 0.0
        %419 = vmatprep.subr.mxu0 0.0
        %420 = vmatpush1.msra.mxu0 0.0
        %421 = vmatprep.subr.mxu0 0.0
        %422 = vmatpush1.msra.mxu0 0.0
        %423 = vmatprep.subr.mxu0 0.0
        %424 = vmatpush1.msra.mxu0 0.0
        %425 = vmatprep.subr.mxu0 0.0
        %426 = vmatpush1.msra.mxu0 0.0
        %427 = vmatprep.subr.mxu0 0.0
        %428 = vmatpush1.msra.mxu0 0.0
        %429 = vmatprep.subr.mxu0 0.0
        %430 = vmatpush1.msra.mxu0 0.0
        %431 = vmatprep.subr.mxu0 0.0
        %432 = vmatpush1.msra.mxu0 0.0
        %433 = vmatprep.subr.mxu0 0.0
        %434 = vmatpush1.msra.mxu0 0.0
        %435 = vmatprep.subr.mxu0 0.0
        %436 = vmatpush1.msra.mxu0 0.0
        %437 = vmatprep.subr.mxu0 0.0
        %438 = vmatpush1.msra.mxu0 0.0
        %439 = vmatprep.subr.mxu0 0.0
        %440 = vmatpush1.msra.mxu0 0.0
        %441 = vmatprep.subr.mxu0 0.0
        %442 = vmatpush1.msra.mxu0 0.0
        %443 = vmatprep.subr.mxu0 0.0
        %444 = vmatpush1.msra.mxu0 0.0
        %445 = vmatprep.subr.mxu0 0.0
        %446 = vmatpush1.msra.mxu0 0.0
        %447 = vmatprep.subr.mxu0 0.0
        %448 = vmatpush1.msra.mxu0 0.0
        %449 = vmatprep.subr.mxu0 0.0
        %450 = vmatpush1.msra.mxu0 0.0
        %451 = vmatprep.subr.mxu0 0.0
        %452 = vmatpush1.msra.mxu0 0.0
        %453 = vmatprep.subr.mxu0 0.0
        %454 = vmatpush1.msra.mxu0 0.0
        %455 = vmatprep.subr.mxu0 0.0
        %456 = vmatpush1.msra.mxu0 0.0
        %457 = vmatprep.subr.mxu0 0.0
        %458 = vmatpush1.msra.mxu0 0.0
        %459 = vmatprep.mubr.f32.mxu0 0.0
        %460 = vmatmul.mubr.f32.gmra.mrb[0].mxu0 %v301
        %v461 = vpop.f32.mrb[0].mxu0
        %v462 = vadd.f32 0.0, %v461
        %v463 = vpop.f32.mrb[0].mxu0
        %464 = vmatprep.mubr.f32.mxu0 0.0
        %465 = vmatmul.mubr.f32.gmra.mrb[0].mxu0 %v304
        %v466 = vpop.f32.mrb[0].mxu0
        %v467 = vadd.f32 0.0, %v466
        %v468 = vpop.f32.mrb[0].mxu0
        %469 = vdwg.mxu0
        %s470 = scalar_lea.vmem %s271, 96 [#allocation2]
        %v471 = vld [vmem:[%s470] sm:$0xff]
        %v472 = vld [vmem:[%s470 + $0x8] sm:$0xff]
        %v473 = vld [vmem:[%s470 + $0x10] sm:$0xff]
        %v474 = vld [vmem:[%s470 + $0x18] sm:$0xff]
        %v475 = vld [vmem:[%s470 + $0x20] sm:$0xff]
        %v476 = vld [vmem:[%s470 + $0x28] sm:$0x1f]
        %v478 = vsel %vm306, %v476, 0
        %480 = vmatprep.subr.mxu0 0.0
        %481 = vmatpush1.msra.mxu0 %v471
        %482 = vmatprep.subr.mxu0 0.0
        %483 = vmatpush1.msra.mxu0 %v472
        %484 = vmatprep.subr.mxu0 0.0
        %485 = vmatpush1.msra.mxu0 %v473
        %486 = vmatprep.subr.mxu0 0.0
        %487 = vmatpush1.msra.mxu0 %v474
        %488 = vmatprep.subr.mxu0 0.0
        %489 = vmatpush1.msra.mxu0 %v475
        %490 = vmatprep.subr.mxu0 0.0
        %491 = vmatpush1.msra.mxu0 %v478
        %492 = vmatprep.subr.mxu0 0.0
        %493 = vmatpush1.msra.mxu0 0.0
        %494 = vmatprep.subr.mxu0 0.0
        %495 = vmatpush1.msra.mxu0 0.0
        %496 = vmatprep.subr.mxu0 0.0
        %497 = vmatpush1.msra.mxu0 0.0
        %498 = vmatprep.subr.mxu0 0.0
        %499 = vmatpush1.msra.mxu0 0.0
        %500 = vmatprep.subr.mxu0 0.0
        %501 = vmatpush1.msra.mxu0 0.0
        %502 = vmatprep.subr.mxu0 0.0
        %503 = vmatpush1.msra.mxu0 0.0
        %504 = vmatprep.subr.mxu0 0.0
        %505 = vmatpush1.msra.mxu0 0.0
        %506 = vmatprep.subr.mxu0 0.0
        %507 = vmatpush1.msra.mxu0 0.0
        %508 = vmatprep.subr.mxu0 0.0
        %509 = vmatpush1.msra.mxu0 0.0
        %510 = vmatprep.subr.mxu0 0.0
        %511 = vmatpush1.msra.mxu0 0.0
        %512 = vmatprep.subr.mxu0 0.0
        %513 = vmatpush1.msra.mxu0 0.0
        %514 = vmatprep.subr.mxu0 0.0
        %515 = vmatpush1.msra.mxu0 0.0
        %516 = vmatprep.subr.mxu0 0.0
        %517 = vmatpush1.msra.mxu0 0.0
        %518 = vmatprep.subr.mxu0 0.0
        %519 = vmatpush1.msra.mxu0 0.0
        %520 = vmatprep.subr.mxu0 0.0
        %521 = vmatpush1.msra.mxu0 0.0
        %522 = vmatprep.subr.mxu0 0.0
        %523 = vmatpush1.msra.mxu0 0.0
        %524 = vmatprep.subr.mxu0 0.0
        %525 = vmatpush1.msra.mxu0 0.0
        %526 = vmatprep.subr.mxu0 0.0
        %527 = vmatpush1.msra.mxu0 0.0
        %528 = vmatprep.subr.mxu0 0.0
        %529 = vmatpush1.msra.mxu0 0.0
        %530 = vmatprep.subr.mxu0 0.0
        %531 = vmatpush1.msra.mxu0 0.0
        %532 = vmatprep.subr.mxu0 0.0
        %533 = vmatpush1.msra.mxu0 0.0
        %534 = vmatprep.subr.mxu0 0.0
        %535 = vmatpush1.msra.mxu0 0.0
        %536 = vmatprep.subr.mxu0 0.0
        %537 = vmatpush1.msra.mxu0 0.0
        %538 = vmatprep.subr.mxu0 0.0
        %539 = vmatpush1.msra.mxu0 0.0
        %540 = vmatprep.subr.mxu0 0.0
        %541 = vmatpush1.msra.mxu0 0.0
        %542 = vmatprep.subr.mxu0 0.0
        %543 = vmatpush1.msra.mxu0 0.0
        %544 = vmatprep.mubr.f32.mxu0 0.0
        %545 = vmatmul.mubr.f32.gmra.mrb[0].mxu0 %v301
        %v546 = vpop.f32.mrb[0].mxu0
        %v547 = vadd.f32 0.0, %v546
        %v548 = vpop.f32.mrb[0].mxu0
        %549 = vmatprep.mubr.f32.mxu0 0.0
        %550 = vmatmul.mubr.f32.gmra.mrb[0].mxu0 %v304
        %v551 = vpop.f32.mrb[0].mxu0
        %v552 = vadd.f32 0.0, %v551
        %v553 = vpop.f32.mrb[0].mxu0
        %554 = vdwg.mxu0
        %s555 = scalar_lea.vmem %s271, 144 [#allocation2]
        %v556 = vld [vmem:[%s555] sm:$0xff]
        %v557 = vld [vmem:[%s555 + $0x8] sm:$0xff]
        %v558 = vld [vmem:[%s555 + $0x10] sm:$0xff]
        %v559 = vld [vmem:[%s555 + $0x18] sm:$0xff]
        %v560 = vld [vmem:[%s555 + $0x20] sm:$0xff]
        %v561 = vld [vmem:[%s555 + $0x28] sm:$0x1f]
        %v563 = vsel %vm306, %v561, 0
        %565 = vmatprep.subr.mxu0 0.0
        %566 = vmatpush1.msra.mxu0 %v556
        %567 = vmatprep.subr.mxu0 0.0
        %568 = vmatpush1.msra.mxu0 %v557
        %569 = vmatprep.subr.mxu0 0.0
        %570 = vmatpush1.msra.mxu0 %v558
        %571 = vmatprep.subr.mxu0 0.0
        %572 = vmatpush1.msra.mxu0 %v559
        %573 = vmatprep.subr.mxu0 0.0
        %574 = vmatpush1.msra.mxu0 %v560
        %575 = vmatprep.subr.mxu0 0.0
        %576 = vmatpush1.msra.mxu0 %v563
        %577 = vmatprep.subr.mxu0 0.0
        %578 = vmatpush1.msra.mxu0 0.0
        %579 = vmatprep.subr.mxu0 0.0
        %580 = vmatpush1.msra.mxu0 0.0
        %581 = vmatprep.subr.mxu0 0.0
        %582 = vmatpush1.msra.mxu0 0.0
        %583 = vmatprep.subr.mxu0 0.0
        %584 = vmatpush1.msra.mxu0 0.0
        %585 = vmatprep.subr.mxu0 0.0
        %586 = vmatpush1.msra.mxu0 0.0
        %587 = vmatprep.subr.mxu0 0.0
        %588 = vmatpush1.msra.mxu0 0.0
        %589 = vmatprep.subr.mxu0 0.0
        %590 = vmatpush1.msra.mxu0 0.0
        %591 = vmatprep.subr.mxu0 0.0
        %592 = vmatpush1.msra.mxu0 0.0
        %593 = vmatprep.subr.mxu0 0.0
        %594 = vmatpush1.msra.mxu0 0.0
        %595 = vmatprep.subr.mxu0 0.0
        %596 = vmatpush1.msra.mxu0 0.0
        %597 = vmatprep.subr.mxu0 0.0
        %598 = vmatpush1.msra.mxu0 0.0
        %599 = vmatprep.subr.mxu0 0.0
        %600 = vmatpush1.msra.mxu0 0.0
        %601 = vmatprep.subr.mxu0 0.0
        %602 = vmatpush1.msra.mxu0 0.0
        %603 = vmatprep.subr.mxu0 0.0
        %604 = vmatpush1.msra.mxu0 0.0
        %605 = vmatprep.subr.mxu0 0.0
        %606 = vmatpush1.msra.mxu0 0.0
        %607 = vmatprep.subr.mxu0 0.0
        %608 = vmatpush1.msra.mxu0 0.0
        %609 = vmatprep.subr.mxu0 0.0
        %610 = vmatpush1.msra.mxu0 0.0
        %611 = vmatprep.subr.mxu0 0.0
        %612 = vmatpush1.msra.mxu0 0.0
        %613 = vmatprep.subr.mxu0 0.0
        %614 = vmatpush1.msra.mxu0 0.0
        %615 = vmatprep.subr.mxu0 0.0
        %616 = vmatpush1.msra.mxu0 0.0
        %617 = vmatprep.subr.mxu0 0.0
        %618 = vmatpush1.msra.mxu0 0.0
        %619 = vmatprep.subr.mxu0 0.0
        %620 = vmatpush1.msra.mxu0 0.0
        %621 = vmatprep.subr.mxu0 0.0
        %622 = vmatpush1.msra.mxu0 0.0
        %623 = vmatprep.subr.mxu0 0.0
        %624 = vmatpush1.msra.mxu0 0.0
        %625 = vmatprep.subr.mxu0 0.0
        %626 = vmatpush1.msra.mxu0 0.0
        %627 = vmatprep.subr.mxu0 0.0
        %628 = vmatpush1.msra.mxu0 0.0
        %629 = vmatprep.mubr.f32.mxu0 0.0
        %630 = vmatmul.mubr.f32.gmra.mrb[0].mxu0 %v301
        %v631 = vpop.f32.mrb[0].mxu0
        %v632 = vadd.f32 0.0, %v631
        %v633 = vpop.f32.mrb[0].mxu0
        %634 = vmatprep.mubr.f32.mxu0 0.0
        %635 = vmatmul.mubr.f32.gmra.mrb[0].mxu0 %v304
        %v636 = vpop.f32.mrb[0].mxu0
        %v637 = vadd.f32 0.0, %v636
        %v638 = vpop.f32.mrb[0].mxu0
        %639 = vdwg.mxu0
        %v640 = vmax.f32 %v377, %v462
        %v641 = vmax.f32 %v382, %v467
        %v642 = vmax.f32 %v547, %v632
        %v643 = vmax.f32 %v552, %v637
        %v644 = vmax.f32 %v640, %v642
        %v645 = vmax.f32 %v641, %v643
        %v646 = vld [vmem:[%s2] sm:$0xff]
        %v647 = vld [vmem:[%s2 + $0x8] sm:$0x3]
        %649 = vset.pattern.permute.xlu0 0
        %650 = vperm.xlu0 %649, %v646
        %v651 = vpop.permute.xlu0 %650
        %654 = vset.pattern.permute.xlu0 0
        %655 = vperm.xlu0 %654, %v647
        %v656 = vpop.permute.xlu0 %655
        %v658 = vadd.f32 %v644, %v651
        %v659 = vadd.f32 %v645, %v656
        %v660 = vmax.f32 %v658, 0.0
        %v661 = vmax.f32 %v659, 0.0
        %662 = vst [vmem:[%s290] sm:$0xff] %v660
        %663 = vst [vmem:[%s290 + $0x8] sm:$0x3] %v661
        %s664 = sand.u32 %s90, 1
        %s665 = sand.u32 %s90, 1
        %s666 = smul.addr %s665, 16
        %s667 = scalar_lea.vmem [#allocation3], %s666
        // Predicated region
        $region71: #{forward_pallas.4} parent=65 // pred_check
          %p668 = pneg %p100
        $region72: #{forward_pallas.4} parent=65 // pred_check_branch
          %670 = sbr.rel (%p668) target = $region74
        $region73: #{forward_pallas.4} parent=65 // pred_region
          %s671 = smul.addr %s14, 8
          %s672 = scalar_lea.vmem %s3, %s671
          // Predicated region
          $region75: #{forward_pallas.4} parent=73 // pred_check
            _
          $region76: #{forward_pallas.4} parent=73 // pred_check_branch
            %674 = sbr.rel (0) target = $region78
          $region77: #{forward_pallas.4} parent=73 // pred_region
            // Predicated region
            $region79: #{forward_pallas.4} parent=77 // pred_check
              _
            $region80: #{forward_pallas.4} parent=77 // pred_check_branch
              %676 = sbr.rel (0) target = $region82
            $region81: #{forward_pallas.4} parent=77 // pred_region
              // Predicated region
              $region94: #{forward_pallas.4} parent=81 // pred_check
                _
              $region95: #{forward_pallas.4} parent=81 // pred_check_branch
                %693 = sbr.rel (0) target = $region97
              $region96: #{forward_pallas.4} parent=81 // pred_region
                loop: start=0, step=1, limit=1
                $region98: #{forward_pallas.4} parent=96 // loop_pre_header
                  _
                $region99: #{forward_pallas.4} parent=96 // loop_header
                  %s695 = sphi 0, %s699
                  %p696 = scmp.ge.s32.totalorder %s695, 1
                  %s700 = sphi %s667, %s667
                  %s701 = sphi %s672, %s672
                $region100: #{forward_pallas.4} parent=96 // loop_header_branch
                  %698 = sbr.rel (%p696) target = $region104
                $region101: #{forward_pallas.4} parent=96 // loop_body
                  %v702 = vld [vmem:[%s700] sm:$0xff]
                  %703 = vst [vmem:[%s701] sm:$0xff] %v702
                  %v704 = vld [vmem:[%s700 + $0x8] sm:$0xff]
                  %705 = vst [vmem:[%s701 + $0x10] sm:$0xff] %v704
                $region102: #{forward_pallas.4} parent=96 // loop_footer
                  %s699 = sadd.s32 1, %s695
                $region103: #{forward_pallas.4} parent=96 // loop_footer_branch
                  %694 = sbr.rel target = $region99
                $region104: #{forward_pallas.4} parent=96 // loop_exit
                  _
              $region97: #{forward_pallas.4} parent=81 // pred_fallthru
                _
              // Predicated region
              $region105: #{forward_pallas.4} parent=81 // pred_check
                _
              $region106: #{forward_pallas.4} parent=81 // pred_check_branch
                %707 = sbr.rel target = $region108
              $region107: #{forward_pallas.4} parent=81 // pred_region
                _
              $region108: #{forward_pallas.4} parent=81 // pred_fallthru
                _
            $region82: #{forward_pallas.4} parent=77 // pred_fallthru
              _
            // Predicated region
            $region83: #{forward_pallas.4} parent=77 // pred_check
              _
            $region84: #{forward_pallas.4} parent=77 // pred_check_branch
              %678 = sbr.rel target = $region86
            $region85: #{forward_pallas.4} parent=77 // pred_region
              loop: start=0, step=1, limit=1
              $region87: #{forward_pallas.4} parent=85 // loop_pre_header
                _
              $region88: #{forward_pallas.4} parent=85 // loop_header
                %s681 = sphi 0, %s685
                %p682 = scmp.ge.s32.totalorder %s681, 1
                %s686 = sphi %s667, %s667
                %s687 = sphi %s672, %s672
              $region89: #{forward_pallas.4} parent=85 // loop_header_branch
                %684 = sbr.rel (%p682) target = $region93
              $region90: #{forward_pallas.4} parent=85 // loop_body
                %v688 = vld [vmem:[%s686] sm:$0xff]
                %689 = vst [vmem:[%s687] sm:$0xff] %v688
                %v690 = vld [vmem:[%s686 + $0x8] sm:$0xff]
                %691 = vst [vmem:[%s687 + $0x10] sm:$0xff] %v690
              $region91: #{forward_pallas.4} parent=85 // loop_footer
                %s685 = sadd.s32 1, %s681
              $region92: #{forward_pallas.4} parent=85 // loop_footer_branch
                %680 = sbr.rel target = $region88
              $region93: #{forward_pallas.4} parent=85 // loop_exit
                _
            $region86: #{forward_pallas.4} parent=77 // pred_fallthru
              _
          $region78: #{forward_pallas.4} parent=73 // pred_fallthru
            _
          %708 = vnop
        $region74: #{forward_pallas.4} parent=65 // pred_fallthru
          _
      $region66: #{forward_pallas.4} parent=5 // pred_fallthru
        _
      %p709 = scmp.le.s32.totalorder 2, %s9
      // Predicated region
      $region109: #{forward_pallas.4} parent=5 // pred_check
        %p710 = pneg %p709
      $region110: #{forward_pallas.4} parent=5 // pred_check_branch
        %712 = sbr.rel (%p710) target = $region112
      $region111: #{forward_pallas.4} parent=5 // pred_region
        %s713 = ssub.s32 %s9, 2
        // Predicated region
        $region113: #{forward_pallas.4} parent=111 // pred_check
          %p714 = pneg %p106
        $region114: #{forward_pallas.4} parent=111 // pred_check_branch
          %716 = sbr.rel (%p714) target = $region116
        $region115: #{forward_pallas.4} parent=111 // pred_region
          %s717 = sand.u32 %s91, 1
          %s718 = sand.u32 %s91, 1
          %s719 = smul.addr %s718, 16
          %s720 = scalar_lea.vmem [#allocation3], %s719
        $region116: #{forward_pallas.4} parent=111 // pred_fallthru
          _
      $region112: #{forward_pallas.4} parent=5 // pred_fallthru
        _
    $region6: #{forward_pallas.4} parent=1 // loop_footer
      %s13 = sadd.s32 1, %s9
    $region7: #{forward_pallas.4} parent=1 // loop_footer_branch
      %8 = sbr.rel target = $region3
    $region8: #{forward_pallas.4} parent=1 // loop_exit
      _

// kernel: forward_pallas.5
$region0: #{forward_pallas.5}
  #allocation0 [shape = 'u32[]', space=smem, size = 0x4, offset = 0x4, fixed_abs, tag = 'smem constant byte address 0x4 - core index']
  #allocation1 [shape = 'u32[144,128]{1,0:T(1,128)}', space=vmem, size = 0x12000, scoped, tag = 'internal scratch']
  %s0 = inlined_call_operand.vmem [shape: f32[8,256], index: 0, kind: input, shape index: {}]
  %s1 = inlined_call_operand.vmem [shape: f32[42,256], index: 1, kind: input, shape index: {}]
  %s2 = inlined_call_operand.vmem [shape: f32[9,256,128], index: 2, kind: input, shape index: {}]
  %s3 = inlined_call_operand.hbm [shape: f32[8,128], index: 3, kind: output, shape index: {}]
  %s4 = sld [smem:[#allocation0]]
  $region22: #{forward_pallas.5} parent=0
    _
  %s6 = ssub.s32 1, %s4
  %s7 = scalar_select 0, %s6, %s4
  $region1: #{forward_pallas.5} parent=0
    #allocation2 [shape = 'u8[4096]{0}', space=vmem, size = 0x1000, scoped, tag = 'output window, operand 0, single buffered']
    #allocation3 [shape = 's32[1]{0}', space=sflag, size = 0x4, scoped, tag = 'scoped memory for forward_pallas.5']
    %8 = vsyncpa [#allocation3], 0
    // Predicated region
    $region2: #{forward_pallas.5} parent=1 // pred_check
      _
    $region3: #{forward_pallas.5} parent=1 // pred_check_branch
      %10 = sbr.rel (0) target = $region5
    $region4: #{forward_pallas.5} parent=1 // pred_region
      _
    $region5: #{forward_pallas.5} parent=1 // pred_fallthru
      _
    // Predicated region
    $region6: #{forward_pallas.5} parent=1 // pred_check
      _
    $region7: #{forward_pallas.5} parent=1 // pred_check_branch
      %12 = sbr.rel (0) target = $region9
    $region8: #{forward_pallas.5} parent=1 // pred_region
      _
    $region9: #{forward_pallas.5} parent=1 // pred_fallthru
      _
    // Predicated region
    $region10: #{forward_pallas.5} parent=1 // pred_check
      _
    $region11: #{forward_pallas.5} parent=1 // pred_check_branch
      %14 = sbr.rel (0) target = $region13
    $region12: #{forward_pallas.5} parent=1 // pred_region
      _
    $region13: #{forward_pallas.5} parent=1 // pred_fallthru
      _
    %v15 = vld [vmem:[%s0] sm:$0xff]
    %v16 = vld [vmem:[%s0 + $0x8] sm:$0xff]
    %v17 = vld [vmem:[%s1] sm:$0xff]
    %v18 = vld [vmem:[%s1 + $0x8] sm:$0xff]
    %v19 = vld [vmem:[%s1 + $0x10] sm:$0xff]
    %v20 = vld [vmem:[%s1 + $0x18] sm:$0xff]
    %v21 = vld [vmem:[%s1 + $0x20] sm:$0xff]
    %v22 = vld [vmem:[%s1 + $0x28] sm:$0xff]
    %v23 = vld [vmem:[%s1 + $0x30] sm:$0xff]
    %v24 = vld [vmem:[%s1 + $0x38] sm:$0xff]
    %v25 = vld [vmem:[%s1 + $0x40] sm:$0xff]
    %v26 = vld [vmem:[%s1 + $0x48] sm:$0xff]
    %v27 = vld [vmem:[%s1 + $0x50] sm:$0x3]
    %v28 = vld [vmem:[%s1 + $0x58] sm:$0x3]
    %v29 = vsub.f32 0.0, %v15
    %v30 = vsub.f32 0.0, %v16
    %v31 = vmul.f32 %v29, 1.442695
    %v32 = vpow.pop %v31
    %v33 = vmul.f32 %v30, 1.442695
    %v34 = vpow.pop %v33
    %v35 = vadd.f32 %v32, 1.0
    %v36 = vadd.f32 %v34, 1.0
    %v37 = vrcp.pop %v35
    %v38 = vmul.f32 1.0, %v37
    %v39 = vrcp.pop %v36
    %v40 = vmul.f32 1.0, %v39
    %v41 = vmul.f32 %v15, %v38
    %v42 = vmul.f32 %v16, %v40
    %v43 = vlaneseq
    %v44 = vshrl.u32 %v43, 7
    %v45 = vsub.s32 0, %v44
    %v46 = vrot.slane %v17, %v45
    %v47 = vlaneseq
    %v48 = vshrl.u32 %v47, 7
    %v49 = vsub.s32 0, %v48
    %v50 = vrot.slane %v18, %v49
    %vm51 = vcmp.ge.f32.partialorder %v15, %v46
    %vm52 = vcmp.ge.f32.partialorder %v16, %v50
    %v53 = vlaneseq
    %v54 = vshrl.u32 %v53, 7
    %v55 = vsub.s32 1, %v54
    %v56 = vrot.slane %v17, %v55
    %v57 = vlaneseq
    %v58 = vshrl.u32 %v57, 7
    %v59 = vsub.s32 1, %v58
    %v60 = vrot.slane %v18, %v59
    %vm61 = vcmp.lt.f32.partialorder %v15, %v56
    %vm62 = vcmp.lt.f32.partialorder %v16, %v60
    %vm63 = vmand %vm51, %vm61
    %vm64 = vmand %vm52, %vm62
    %v65 = vsel %vm63, 1, 0
    %v66 = vsel %vm64, 1, 0
    %v67 = vcvt.s32.f32 %v65
    %v68 = vcvt.s32.f32 %v66
    %vm69 = vcmp.ge.f32.partialorder %v15, %v56
    %vm70 = vcmp.ge.f32.partialorder %v16, %v60
    %v71 = vlaneseq
    %v72 = vshrl.u32 %v71, 7
    %v73 = vsub.s32 2, %v72
    %v74 = vrot.slane %v17, %v73
    %v75 = vlaneseq
    %v76 = vshrl.u32 %v75, 7
    %v77 = vsub.s32 2, %v76
    %v78 = vrot.slane %v18, %v77
    %vm79 = vcmp.lt.f32.partialorder %v15, %v74
    %vm80 = vcmp.lt.f32.partialorder %v16, %v78
    %vm81 = vmand %vm69, %vm79
    %vm82 = vmand %vm70, %vm80
    %v83 = vsel %vm81, 1, 0
    %v84 = vsel %vm82, 1, 0
    %v85 = vcvt.s32.f32 %v83
    %v86 = vcvt.s32.f32 %v84
    %vm87 = vcmp.ge.f32.partialorder %v15, %v74
    %vm88 = vcmp.ge.f32.partialorder %v16, %v78
    %v89 = vlaneseq
    %v90 = vshrl.u32 %v89, 7
    %v91 = vsub.s32 3, %v90
    %v92 = vrot.slane %v17, %v91
    %v93 = vlaneseq
    %v94 = vshrl.u32 %v93, 7
    %v95 = vsub.s32 3, %v94
    %v96 = vrot.slane %v18, %v95
    %vm97 = vcmp.lt.f32.partialorder %v15, %v92
    %vm98 = vcmp.lt.f32.partialorder %v16, %v96
    %vm99 = vmand %vm87, %vm97
    %vm100 = vmand %vm88, %vm98
    %v101 = vsel %vm99, 1, 0
    %v102 = vsel %vm100, 1, 0
    %v103 = vcvt.s32.f32 %v101
    %v104 = vcvt.s32.f32 %v102
    %vm105 = vcmp.ge.f32.partialorder %v15, %v92
    %vm106 = vcmp.ge.f32.partialorder %v16, %v96
    %v107 = vlaneseq
    %v108 = vshrl.u32 %v107, 7
    %v109 = vsub.s32 4, %v108
    %v110 = vrot.slane %v17, %v109
    %v111 = vlaneseq
    %v112 = vshrl.u32 %v111, 7
    %v113 = vsub.s32 4, %v112
    %v114 = vrot.slane %v18, %v113
    %vm115 = vcmp.lt.f32.partialorder %v15, %v110
    %vm116 = vcmp.lt.f32.partialorder %v16, %v114
    %vm117 = vmand %vm105, %vm115
    %vm118 = vmand %vm106, %vm116
    %v119 = vsel %vm117, 1, 0
    %v120 = vsel %vm118, 1, 0
    %v121 = vcvt.s32.f32 %v119
    %v122 = vcvt.s32.f32 %v120
    %vm123 = vcmp.ge.f32.partialorder %v15, %v110
    %vm124 = vcmp.ge.f32.partialorder %v16, %v114
    %v125 = vlaneseq
    %v126 = vshrl.u32 %v125, 7
    %v127 = vsub.s32 5, %v126
    %v128 = vrot.slane %v17, %v127
    %v129 = vlaneseq
    %v130 = vshrl.u32 %v129, 7
    %v131 = vsub.s32 5, %v130
    %v132 = vrot.slane %v18, %v131
    %vm133 = vcmp.lt.f32.partialorder %v15, %v128
    %vm134 = vcmp.lt.f32.partialorder %v16, %v132
    %vm135 = vmand %vm123, %vm133
    %vm136 = vmand %vm124, %vm134
    %v137 = vsel %vm135, 1, 0
    %v138 = vsel %vm136, 1, 0
    %v139 = vcvt.s32.f32 %v137
    %v140 = vcvt.s32.f32 %v138
    %vm141 = vcmp.ge.f32.partialorder %v15, %v128
    %vm142 = vcmp.ge.f32.partialorder %v16, %v132
    %v143 = vlaneseq
    %v144 = vshrl.u32 %v143, 7
    %v145 = vsub.s32 6, %v144
    %v146 = vrot.slane %v17, %v145
    %v147 = vlaneseq
    %v148 = vshrl.u32 %v147, 7
    %v149 = vsub.s32 6, %v148
    %v150 = vrot.slane %v18, %v149
    %vm151 = vcmp.lt.f32.partialorder %v15, %v146
    %vm152 = vcmp.lt.f32.partialorder %v16, %v150
    %vm153 = vmand %vm141, %vm151
    %vm154 = vmand %vm142, %vm152
    %v155 = vsel %vm153, 1, 0
    %v156 = vsel %vm154, 1, 0
    %v157 = vcvt.s32.f32 %v155
    %v158 = vcvt.s32.f32 %v156
    %vm159 = vcmp.ge.f32.partialorder %v15, %v146
    %vm160 = vcmp.ge.f32.partialorder %v16, %v150
    %v161 = vlaneseq
    %v162 = vshrl.u32 %v161, 7
    %v163 = vsub.s32 7, %v162
    %v164 = vrot.slane %v17, %v163
    %v165 = vlaneseq
    %v166 = vshrl.u32 %v165, 7
    %v167 = vsub.s32 7, %v166
    %v168 = vrot.slane %v18, %v167
    %vm169 = vcmp.lt.f32.partialorder %v15, %v164
    %vm170 = vcmp.lt.f32.partialorder %v16, %v168
    %vm171 = vmand %vm159, %vm169
    %vm172 = vmand %vm160, %vm170
    %v173 = vsel %vm171, 1, 0
    %v174 = vsel %vm172, 1, 0
    %v175 = vcvt.s32.f32 %v173
    %v176 = vcvt.s32.f32 %v174
    %vm177 = vcmp.ge.f32.partialorder %v15, %v164
    %vm178 = vcmp.ge.f32.partialorder %v16, %v168
    %v179 = vlaneseq
    %v180 = vshrl.u32 %v179, 7
    %v181 = vsub.s32 0, %v180
    %v182 = vrot.slane %v19, %v181
    %v183 = vlaneseq
    %v184 = vshrl.u32 %v183, 7
    %v185 = vsub.s32 0, %v184
    %v186 = vrot.slane %v20, %v185
    %vm187 = vcmp.lt.f32.partialorder %v15, %v182
    %vm188 = vcmp.lt.f32.partialorder %v16, %v186
    %vm189 = vmand %vm177, %vm187
    %vm190 = vmand %vm178, %vm188
    %v191 = vsel %vm189, 1, 0
    %v192 = vsel %vm190, 1, 0
    %v193 = vcvt.s32.f32 %v191
    %v194 = vcvt.s32.f32 %v192
    %vm195 = vcmp.ge.f32.partialorder %v15, %v182
    %vm196 = vcmp.ge.f32.partialorder %v16, %v186
    %v197 = vlaneseq
    %v198 = vshrl.u32 %v197, 7
    %v199 = vsub.s32 1, %v198
    %v200 = vrot.slane %v19, %v199
    %v201 = vlaneseq
    %v202 = vshrl.u32 %v201, 7
    %v203 = vsub.s32 1, %v202
    %v204 = vrot.slane %v20, %v203
    %vm205 = vcmp.lt.f32.partialorder %v15, %v200
    %vm206 = vcmp.lt.f32.partialorder %v16, %v204
    %vm207 = vmand %vm195, %vm205
    %vm208 = vmand %vm196, %vm206
    %v209 = vsel %vm207, 1, 0
    %v210 = vsel %vm208, 1, 0
    %v211 = vcvt.s32.f32 %v209
    %v212 = vcvt.s32.f32 %v210
    %vm213 = vcmp.ge.f32.partialorder %v15, %v200
    %vm214 = vcmp.ge.f32.partialorder %v16, %v204
    %v215 = vlaneseq
    %v216 = vshrl.u32 %v215, 7
    %v217 = vsub.s32 2, %v216
    %v218 = vrot.slane %v19, %v217
    %v219 = vlaneseq
    %v220 = vshrl.u32 %v219, 7
    %v221 = vsub.s32 2, %v220
    %v222 = vrot.slane %v20, %v221
    %vm223 = vcmp.lt.f32.partialorder %v15, %v218
    %vm224 = vcmp.lt.f32.partialorder %v16, %v222
    %vm225 = vmand %vm213, %vm223
    %vm226 = vmand %vm214, %vm224
    %v227 = vsel %vm225, 1, 0
    %v228 = vsel %vm226, 1, 0
    %v229 = vcvt.s32.f32 %v227
    %v230 = vcvt.s32.f32 %v228
    %vm231 = vcmp.ge.f32.partialorder %v15, %v218
    %vm232 = vcmp.ge.f32.partialorder %v16, %v222
    %v233 = vlaneseq
    %v234 = vshrl.u32 %v233, 7
    %v235 = vsub.s32 3, %v234
    %v236 = vrot.slane %v19, %v235
    %v237 = vlaneseq
    %v238 = vshrl.u32 %v237, 7
    %v239 = vsub.s32 3, %v238
    %v240 = vrot.slane %v20, %v239
    %vm241 = vcmp.lt.f32.partialorder %v15, %v236
    %vm242 = vcmp.lt.f32.partialorder %v16, %v240
    %vm243 = vmand %vm231, %vm241
    %vm244 = vmand %vm232, %vm242
    %v245 = vsel %vm243, 1, 0
    %v246 = vsel %vm244, 1, 0
    %v247 = vcvt.s32.f32 %v245
    %v248 = vcvt.s32.f32 %v246
    %v249 = vsub.f32 %v15, %v46
    %v250 = vsub.f32 %v16, %v50
    %v251 = vlaneseq
    %v252 = vshrl.u32 %v251, 7
    %v253 = vsub.s32 4, %v252
    %v254 = vrot.slane %v19, %v253
    %v255 = vlaneseq
    %v256 = vshrl.u32 %v255, 7
    %v257 = vsub.s32 4, %v256
    %v258 = vrot.slane %v20, %v257
    %v259 = vmul.f32 %v249, %v254
    %v260 = vmul.f32 %v250, %v258
    %v261 = vmul.f32 %v259, %v67
    %v262 = vmul.f32 %v260, %v68
    %v263 = vsub.f32 %v74, %v15
    %v264 = vsub.f32 %v78, %v16
    %v265 = vlaneseq
    %v266 = vshrl.u32 %v265, 7
    %v267 = vsub.s32 5, %v266
    %v268 = vrot.slane %v19, %v267
    %v269 = vlaneseq
    %v270 = vshrl.u32 %v269, 7
    %v271 = vsub.s32 5, %v270
    %v272 = vrot.slane %v20, %v271
    %v273 = vmul.f32 %v263, %v268
    %v274 = vmul.f32 %v264, %v272
    %v275 = vmul.f32 %v273, %v85
    %v276 = vmul.f32 %v274, %v86
    %v277 = vadd.f32 %v261, %v275
    %v278 = vadd.f32 %v262, %v276
    %v279 = vsub.f32 %v15, %v56
    %v280 = vsub.f32 %v16, %v60
    %v281 = vmul.f32 %v279, %v268
    %v282 = vmul.f32 %v280, %v272
    %v283 = vmul.f32 %v281, %v85
    %v284 = vmul.f32 %v282, %v86
    %v285 = vsub.f32 %v92, %v15
    %v286 = vsub.f32 %v96, %v16
    %v287 = vlaneseq
    %v288 = vshrl.u32 %v287, 7
    %v289 = vsub.s32 6, %v288
    %v290 = vrot.slane %v19, %v289
    %v291 = vlaneseq
    %v292 = vshrl.u32 %v291, 7
    %v293 = vsub.s32 6, %v292
    %v294 = vrot.slane %v20, %v293
    %v295 = vmul.f32 %v285, %v290
    %v296 = vmul.f32 %v286, %v294
    %v297 = vmul.f32 %v295, %v103
    %v298 = vmul.f32 %v296, %v104
    %v299 = vadd.f32 %v283, %v297
    %v300 = vadd.f32 %v284, %v298
    %v301 = vsub.f32 %v15, %v74
    %v302 = vsub.f32 %v16, %v78
    %v303 = vmul.f32 %v301, %v290
    %v304 = vmul.f32 %v302, %v294
    %v305 = vmul.f32 %v303, %v103
    %v306 = vmul.f32 %v304, %v104
    %v307 = vsub.f32 %v110, %v15
    %v308 = vsub.f32 %v114, %v16
    %v309 = vlaneseq
    %v310 = vshrl.u32 %v309, 7
    %v311 = vsub.s32 7, %v310
    %v312 = vrot.slane %v19, %v311
    %v313 = vlaneseq
    %v314 = vshrl.u32 %v313, 7
    %v315 = vsub.s32 7, %v314
    %v316 = vrot.slane %v20, %v315
    %v317 = vmul.f32 %v307, %v312
    %v318 = vmul.f32 %v308, %v316
    %v319 = vmul.f32 %v317, %v121
    %v320 = vmul.f32 %v318, %v122
    %v321 = vadd.f32 %v305, %v319
    %v322 = vadd.f32 %v306, %v320
    %v323 = vsub.f32 %v15, %v92
    %v324 = vsub.f32 %v16, %v96
    %v325 = vmul.f32 %v323, %v312
    %v326 = vmul.f32 %v324, %v316
    %v327 = vmul.f32 %v325, %v121
    %v328 = vmul.f32 %v326, %v122
    %v329 = vsub.f32 %v128, %v15
    %v330 = vsub.f32 %v132, %v16
    %v331 = vlaneseq
    %v332 = vshrl.u32 %v331, 7
    %v333 = vsub.s32 0, %v332
    %v334 = vrot.slane %v21, %v333
    %v335 = vlaneseq
    %v336 = vshrl.u32 %v335, 7
    %v337 = vsub.s32 0, %v336
    %v338 = vrot.slane %v22, %v337
    %v339 = vmul.f32 %v329, %v334
    %v340 = vmul.f32 %v330, %v338
    %v341 = vmul.f32 %v339, %v139
    %v342 = vmul.f32 %v340, %v140
    %v343 = vadd.f32 %v327, %v341
    %v344 = vadd.f32 %v328, %v342
    %v345 = vsub.f32 %v15, %v110
    %v346 = vsub.f32 %v16, %v114
    %v347 = vmul.f32 %v345, %v334
    %v348 = vmul.f32 %v346, %v338
    %v349 = vmul.f32 %v347, %v139
    %v350 = vmul.f32 %v348, %v140
    %v351 = vsub.f32 %v146, %v15
    %v352 = vsub.f32 %v150, %v16
    %v353 = vlaneseq
    %v354 = vshrl.u32 %v353, 7
    %v355 = vsub.s32 1, %v354
    %v356 = vrot.slane %v21, %v355
    %v357 = vlaneseq
    %v358 = vshrl.u32 %v357, 7
    %v359 = vsub.s32 1, %v358
    %v360 = vrot.slane %v22, %v359
    %v361 = vmul.f32 %v351, %v356
    %v362 = vmul.f32 %v352, %v360
    %v363 = vmul.f32 %v361, %v157
    %v364 = vmul.f32 %v362, %v158
    %v365 = vadd.f32 %v349, %v363
    %v366 = vadd.f32 %v350, %v364
    %v367 = vsub.f32 %v15, %v128
    %v368 = vsub.f32 %v16, %v132
    %v369 = vmul.f32 %v367, %v356
    %v370 = vmul.f32 %v368, %v360
    %v371 = vmul.f32 %v369, %v157
    %v372 = vmul.f32 %v370, %v158
    %v373 = vsub.f32 %v164, %v15
    %v374 = vsub.f32 %v168, %v16
    %v375 = vlaneseq
    %v376 = vshrl.u32 %v375, 7
    %v377 = vsub.s32 2, %v376
    %v378 = vrot.slane %v21, %v377
    %v379 = vlaneseq
    %v380 = vshrl.u32 %v379, 7
    %v381 = vsub.s32 2, %v380
    %v382 = vrot.slane %v22, %v381
    %v383 = vmul.f32 %v373, %v378
    %v384 = vmul.f32 %v374, %v382
    %v385 = vmul.f32 %v383, %v175
    %v386 = vmul.f32 %v384, %v176
    %v387 = vadd.f32 %v371, %v385
    %v388 = vadd.f32 %v372, %v386
    %v389 = vsub.f32 %v15, %v146
    %v390 = vsub.f32 %v16, %v150
    %v391 = vmul.f32 %v389, %v378
    %v392 = vmul.f32 %v390, %v382
    %v393 = vmul.f32 %v391, %v175
    %v394 = vmul.f32 %v392, %v176
    %v395 = vsub.f32 %v182, %v15
    %v396 = vsub.f32 %v186, %v16
    %v397 = vlaneseq
    %v398 = vshrl.u32 %v397, 7
    %v399 = vsub.s32 3, %v398
    %v400 = vrot.slane %v21, %v399
    %v401 = vlaneseq
    %v402 = vshrl.u32 %v401, 7
    %v403 = vsub.s32 3, %v402
    %v404 = vrot.slane %v22, %v403
    %v405 = vmul.f32 %v395, %v400
    %v406 = vmul.f32 %v396, %v404
    %v407 = vmul.f32 %v405, %v193
    %v408 = vmul.f32 %v406, %v194
    %v409 = vadd.f32 %v393, %v407
    %v410 = vadd.f32 %v394, %v408
    %v411 = vsub.f32 %v15, %v164
    %v412 = vsub.f32 %v16, %v168
    %v413 = vmul.f32 %v411, %v400
    %v414 = vmul.f32 %v412, %v404
    %v415 = vmul.f32 %v413, %v193
    %v416 = vmul.f32 %v414, %v194
    %v417 = vsub.f32 %v200, %v15
    %v418 = vsub.f32 %v204, %v16
    %v419 = vlaneseq
    %v420 = vshrl.u32 %v419, 7
    %v421 = vsub.s32 4, %v420
    %v422 = vrot.slane %v21, %v421
    %v423 = vlaneseq
    %v424 = vshrl.u32 %v423, 7
    %v425 = vsub.s32 4, %v424
    %v426 = vrot.slane %v22, %v425
    %v427 = vmul.f32 %v417, %v422
    %v428 = vmul.f32 %v418, %v426
    %v429 = vmul.f32 %v427, %v211
    %v430 = vmul.f32 %v428, %v212
    %v431 = vadd.f32 %v415, %v429
    %v432 = vadd.f32 %v416, %v430
    %v433 = vsub.f32 %v15, %v182
    %v434 = vsub.f32 %v16, %v186
    %v435 = vmul.f32 %v433, %v422
    %v436 = vmul.f32 %v434, %v426
    %v437 = vmul.f32 %v435, %v211
    %v438 = vmul.f32 %v436, %v212
    %v439 = vsub.f32 %v218, %v15
    %v440 = vsub.f32 %v222, %v16
    %v441 = vlaneseq
    %v442 = vshrl.u32 %v441, 7
    %v443 = vsub.s32 5, %v442
    %v444 = vrot.slane %v21, %v443
    %v445 = vlaneseq
    %v446 = vshrl.u32 %v445, 7
    %v447 = vsub.s32 5, %v446
    %v448 = vrot.slane %v22, %v447
    %v449 = vmul.f32 %v439, %v444
    %v450 = vmul.f32 %v440, %v448
    %v451 = vmul.f32 %v449, %v229
    %v452 = vmul.f32 %v450, %v230
    %v453 = vadd.f32 %v437, %v451
    %v454 = vadd.f32 %v438, %v452
    %v455 = vsub.f32 %v15, %v200
    %v456 = vsub.f32 %v16, %v204
    %v457 = vmul.f32 %v455, %v444
    %v458 = vmul.f32 %v456, %v448
    %v459 = vmul.f32 %v457, %v229
    %v460 = vmul.f32 %v458, %v230
    %v461 = vsub.f32 %v236, %v15
    %v462 = vsub.f32 %v240, %v16
    %v463 = vlaneseq
    %v464 = vshrl.u32 %v463, 7
    %v465 = vsub.s32 6, %v464
    %v466 = vrot.slane %v21, %v465
    %v467 = vlaneseq
    %v468 = vshrl.u32 %v467, 7
    %v469 = vsub.s32 6, %v468
    %v470 = vrot.slane %v22, %v469
    %v471 = vmul.f32 %v461, %v466
    %v472 = vmul.f32 %v462, %v470
    %v473 = vmul.f32 %v471, %v247
    %v474 = vmul.f32 %v472, %v248
    %v475 = vadd.f32 %v459, %v473
    %v476 = vadd.f32 %v460, %v474
    %v477 = vlaneseq
    %v478 = vshrl.u32 %v477, 7
    %v479 = vsub.s32 7, %v478
    %v480 = vrot.slane %v21, %v479
    %v481 = vlaneseq
    %v482 = vshrl.u32 %v481, 7
    %v483 = vsub.s32 7, %v482
    %v484 = vrot.slane %v22, %v483
    %v485 = vmul.f32 %v249, %v480
    %v486 = vmul.f32 %v250, %v484
    %v487 = vmul.f32 %v485, %v277
    %v488 = vmul.f32 %v486, %v278
    %v489 = vlaneseq
    %v490 = vshrl.u32 %v489, 7
    %v491 = vsub.s32 0, %v490
    %v492 = vrot.slane %v23, %v491
    %v493 = vlaneseq
    %v494 = vshrl.u32 %v493, 7
    %v495 = vsub.s32 0, %v494
    %v496 = vrot.slane %v24, %v495
    %v497 = vmul.f32 %v285, %v492
    %v498 = vmul.f32 %v286, %v496
    %v499 = vmul.f32 %v497, %v299
    %v500 = vmul.f32 %v498, %v300
    %v501 = vadd.f32 %v487, %v499
    %v502 = vadd.f32 %v488, %v500
    %v503 = vmul.f32 %v279, %v492
    %v504 = vmul.f32 %v280, %v496
    %v505 = vmul.f32 %v503, %v299
    %v506 = vmul.f32 %v504, %v300
    %v507 = vlaneseq
    %v508 = vshrl.u32 %v507, 7
    %v509 = vsub.s32 1, %v508
    %v510 = vrot.slane %v23, %v509
    %v511 = vlaneseq
    %v512 = vshrl.u32 %v511, 7
    %v513 = vsub.s32 1, %v512
    %v514 = vrot.slane %v24, %v513
    %v515 = vmul.f32 %v307, %v510
    %v516 = vmul.f32 %v308, %v514
    %v517 = vmul.f32 %v515, %v321
    %v518 = vmul.f32 %v516, %v322
    %v519 = vadd.f32 %v505, %v517
    %v520 = vadd.f32 %v506, %v518
    %v521 = vmul.f32 %v301, %v510
    %v522 = vmul.f32 %v302, %v514
    %v523 = vmul.f32 %v521, %v321
    %v524 = vmul.f32 %v522, %v322
    %v525 = vlaneseq
    %v526 = vshrl.u32 %v525, 7
    %v527 = vsub.s32 2, %v526
    %v528 = vrot.slane %v23, %v527
    %v529 = vlaneseq
    %v530 = vshrl.u32 %v529, 7
    %v531 = vsub.s32 2, %v530
    %v532 = vrot.slane %v24, %v531
    %v533 = vmul.f32 %v329, %v528
    %v534 = vmul.f32 %v330, %v532
    %v535 = vmul.f32 %v533, %v343
    %v536 = vmul.f32 %v534, %v344
    %v537 = vadd.f32 %v523, %v535
    %v538 = vadd.f32 %v524, %v536
    %v539 = vmul.f32 %v323, %v528
    %v540 = vmul.f32 %v324, %v532
    %v541 = vmul.f32 %v539, %v343
    %v542 = vmul.f32 %v540, %v344
    %v543 = vlaneseq
    %v544 = vshrl.u32 %v543, 7
    %v545 = vsub.s32 3, %v544
    %v546 = vrot.slane %v23, %v545
    %v547 = vlaneseq
    %v548 = vshrl.u32 %v547, 7
    %v549 = vsub.s32 3, %v548
    %v550 = vrot.slane %v24, %v549
    %v551 = vmul.f32 %v351, %v546
    %v552 = vmul.f32 %v352, %v550
    %v553 = vmul.f32 %v551, %v365
    %v554 = vmul.f32 %v552, %v366
    %v555 = vadd.f32 %v541, %v553
    %v556 = vadd.f32 %v542, %v554
    %v557 = vmul.f32 %v345, %v546
    %v558 = vmul.f32 %v346, %v550
    %v559 = vmul.f32 %v557, %v365
    %v560 = vmul.f32 %v558, %v366
    %v561 = vlaneseq
    %v562 = vshrl.u32 %v561, 7
    %v563 = vsub.s32 4, %v562
    %v564 = vrot.slane %v23, %v563
    %v565 = vlaneseq
    %v566 = vshrl.u32 %v565, 7
    %v567 = vsub.s32 4, %v566
    %v568 = vrot.slane %v24, %v567
    %v569 = vmul.f32 %v373, %v564
    %v570 = vmul.f32 %v374, %v568
    %v571 = vmul.f32 %v569, %v387
    %v572 = vmul.f32 %v570, %v388
    %v573 = vadd.f32 %v559, %v571
    %v574 = vadd.f32 %v560, %v572
    %v575 = vmul.f32 %v367, %v564
    %v576 = vmul.f32 %v368, %v568
    %v577 = vmul.f32 %v575, %v387
    %v578 = vmul.f32 %v576, %v388
    %v579 = vlaneseq
    %v580 = vshrl.u32 %v579, 7
    %v581 = vsub.s32 5, %v580
    %v582 = vrot.slane %v23, %v581
    %v583 = vlaneseq
    %v584 = vshrl.u32 %v583, 7
    %v585 = vsub.s32 5, %v584
    %v586 = vrot.slane %v24, %v585
    %v587 = vmul.f32 %v395, %v582
    %v588 = vmul.f32 %v396, %v586
    %v589 = vmul.f32 %v587, %v409
    %v590 = vmul.f32 %v588, %v410
    %v591 = vadd.f32 %v577, %v589
    %v592 = vadd.f32 %v578, %v590
    %v593 = vmul.f32 %v389, %v582
    %v594 = vmul.f32 %v390, %v586
    %v595 = vmul.f32 %v593, %v409
    %v596 = vmul.f32 %v594, %v410
    %v597 = vlaneseq
    %v598 = vshrl.u32 %v597, 7
    %v599 = vsub.s32 6, %v598
    %v600 = vrot.slane %v23, %v599
    %v601 = vlaneseq
    %v602 = vshrl.u32 %v601, 7
    %v603 = vsub.s32 6, %v602
    %v604 = vrot.slane %v24, %v603
    %v605 = vmul.f32 %v417, %v600
    %v606 = vmul.f32 %v418, %v604
    %v607 = vmul.f32 %v605, %v431
    %v608 = vmul.f32 %v606, %v432
    %v609 = vadd.f32 %v595, %v607
    %v610 = vadd.f32 %v596, %v608
    %v611 = vmul.f32 %v411, %v600
    %v612 = vmul.f32 %v412, %v604
    %v613 = vmul.f32 %v611, %v431
    %v614 = vmul.f32 %v612, %v432
    %v615 = vlaneseq
    %v616 = vshrl.u32 %v615, 7
    %v617 = vsub.s32 7, %v616
    %v618 = vrot.slane %v23, %v617
    %v619 = vlaneseq
    %v620 = vshrl.u32 %v619, 7
    %v621 = vsub.s32 7, %v620
    %v622 = vrot.slane %v24, %v621
    %v623 = vmul.f32 %v439, %v618
    %v624 = vmul.f32 %v440, %v622
    %v625 = vmul.f32 %v623, %v453
    %v626 = vmul.f32 %v624, %v454
    %v627 = vadd.f32 %v613, %v625
    %v628 = vadd.f32 %v614, %v626
    %v629 = vmul.f32 %v433, %v618
    %v630 = vmul.f32 %v434, %v622
    %v631 = vmul.f32 %v629, %v453
    %v632 = vmul.f32 %v630, %v454
    %v633 = vlaneseq
    %v634 = vshrl.u32 %v633, 7
    %v635 = vsub.s32 0, %v634
    %v636 = vrot.slane %v25, %v635
    %v637 = vlaneseq
    %v638 = vshrl.u32 %v637, 7
    %v639 = vsub.s32 0, %v638
    %v640 = vrot.slane %v26, %v639
    %v641 = vmul.f32 %v461, %v636
    %v642 = vmul.f32 %v462, %v640
    %v643 = vmul.f32 %v641, %v475
    %v644 = vmul.f32 %v642, %v476
    %v645 = vadd.f32 %v631, %v643
    %v646 = vadd.f32 %v632, %v644
    %v647 = vlaneseq
    %v648 = vshrl.u32 %v647, 7
    %v649 = vsub.s32 1, %v648
    %v650 = vrot.slane %v25, %v649
    %v651 = vlaneseq
    %v652 = vshrl.u32 %v651, 7
    %v653 = vsub.s32 1, %v652
    %v654 = vrot.slane %v26, %v653
    %v655 = vmul.f32 %v249, %v650
    %v656 = vmul.f32 %v250, %v654
    %v657 = vmul.f32 %v655, %v501
    %v658 = vmul.f32 %v656, %v502
    %v659 = vlaneseq
    %v660 = vshrl.u32 %v659, 7
    %v661 = vsub.s32 2, %v660
    %v662 = vrot.slane %v25, %v661
    %v663 = vlaneseq
    %v664 = vshrl.u32 %v663, 7
    %v665 = vsub.s32 2, %v664
    %v666 = vrot.slane %v26, %v665
    %v667 = vmul.f32 %v307, %v662
    %v668 = vmul.f32 %v308, %v666
    %v669 = vmul.f32 %v667, %v519
    %v670 = vmul.f32 %v668, %v520
    %v671 = vadd.f32 %v657, %v669
    %v672 = vadd.f32 %v658, %v670
    %v673 = vmul.f32 %v279, %v662
    %v674 = vmul.f32 %v280, %v666
    %v675 = vmul.f32 %v673, %v519
    %v676 = vmul.f32 %v674, %v520
    %v677 = vlaneseq
    %v678 = vshrl.u32 %v677, 7
    %v679 = vsub.s32 3, %v678
    %v680 = vrot.slane %v25, %v679
    %v681 = vlaneseq
    %v682 = vshrl.u32 %v681, 7
    %v683 = vsub.s32 3, %v682
    %v684 = vrot.slane %v26, %v683
    %v685 = vmul.f32 %v329, %v680
    %v686 = vmul.f32 %v330, %v684
    %v687 = vmul.f32 %v685, %v537
    %v688 = vmul.f32 %v686, %v538
    %v689 = vadd.f32 %v675, %v687
    %v690 = vadd.f32 %v676, %v688
    %v691 = vmul.f32 %v301, %v680
    %v692 = vmul.f32 %v302, %v684
    %v693 = vmul.f32 %v691, %v537
    %v694 = vmul.f32 %v692, %v538
    %v695 = vlaneseq
    %v696 = vshrl.u32 %v695, 7
    %v697 = vsub.s32 4, %v696
    %v698 = vrot.slane %v25, %v697
    %v699 = vlaneseq
    %v700 = vshrl.u32 %v699, 7
    %v701 = vsub.s32 4, %v700
    %v702 = vrot.slane %v26, %v701
    %v703 = vmul.f32 %v351, %v698
    %v704 = vmul.f32 %v352, %v702
    %v705 = vmul.f32 %v703, %v555
    %v706 = vmul.f32 %v704, %v556
    %v707 = vadd.f32 %v693, %v705
    %v708 = vadd.f32 %v694, %v706
    %v709 = vmul.f32 %v323, %v698
    %v710 = vmul.f32 %v324, %v702
    %v711 = vmul.f32 %v709, %v555
    %v712 = vmul.f32 %v710, %v556
    %v713 = vlaneseq
    %v714 = vshrl.u32 %v713, 7
    %v715 = vsub.s32 5, %v714
    %v716 = vrot.slane %v25, %v715
    %v717 = vlaneseq
    %v718 = vshrl.u32 %v717, 7
    %v719 = vsub.s32 5, %v718
    %v720 = vrot.slane %v26, %v719
    %v721 = vmul.f32 %v373, %v716
    %v722 = vmul.f32 %v374, %v720
    %v723 = vmul.f32 %v721, %v573
    %v724 = vmul.f32 %v722, %v574
    %v725 = vadd.f32 %v711, %v723
    %v726 = vadd.f32 %v712, %v724
    %v727 = vmul.f32 %v345, %v716
    %v728 = vmul.f32 %v346, %v720
    %v729 = vmul.f32 %v727, %v573
    %v730 = vmul.f32 %v728, %v574
    %v731 = vlaneseq
    %v732 = vshrl.u32 %v731, 7
    %v733 = vsub.s32 6, %v732
    %v734 = vrot.slane %v25, %v733
    %v735 = vlaneseq
    %v736 = vshrl.u32 %v735, 7
    %v737 = vsub.s32 6, %v736
    %v738 = vrot.slane %v26, %v737
    %v739 = vmul.f32 %v395, %v734
    %v740 = vmul.f32 %v396, %v738
    %v741 = vmul.f32 %v739, %v591
    %v742 = vmul.f32 %v740, %v592
    %v743 = vadd.f32 %v729, %v741
    %v744 = vadd.f32 %v730, %v742
    %v745 = vmul.f32 %v367, %v734
    %v746 = vmul.f32 %v368, %v738
    %v747 = vmul.f32 %v745, %v591
    %v748 = vmul.f32 %v746, %v592
    %v749 = vlaneseq
    %v750 = vshrl.u32 %v749, 7
    %v751 = vsub.s32 7, %v750
    %v752 = vrot.slane %v25, %v751
    %v753 = vlaneseq
    %v754 = vshrl.u32 %v753, 7
    %v755 = vsub.s32 7, %v754
    %v756 = vrot.slane %v26, %v755
    %v757 = vmul.f32 %v417, %v752
    %v758 = vmul.f32 %v418, %v756
    %v759 = vmul.f32 %v757, %v609
    %v760 = vmul.f32 %v758, %v610
    %v761 = vadd.f32 %v747, %v759
    %v762 = vadd.f32 %v748, %v760
    %v763 = vmul.f32 %v389, %v752
    %v764 = vmul.f32 %v390, %v756
    %v765 = vmul.f32 %v763, %v609
    %v766 = vmul.f32 %v764, %v610
    %v767 = vlaneseq
    %v768 = vshrl.u32 %v767, 7
    %v769 = vsub.s32 0, %v768
    %v770 = vrot.slane %v27, %v769
    %v771 = vlaneseq
    %v772 = vshrl.u32 %v771, 7
    %v773 = vsub.s32 0, %v772
    %v774 = vrot.slane %v28, %v773
    %v775 = vmul.f32 %v439, %v770
    %v776 = vmul.f32 %v440, %v774
    %v777 = vmul.f32 %v775, %v627
    %v778 = vmul.f32 %v776, %v628
    %v779 = vadd.f32 %v765, %v777
    %v780 = vadd.f32 %v766, %v778
    %v781 = vmul.f32 %v411, %v770
    %v782 = vmul.f32 %v412, %v774
    %v783 = vmul.f32 %v781, %v627
    %v784 = vmul.f32 %v782, %v628
    %v785 = vlaneseq
    %v786 = vshrl.u32 %v785, 7
    %v787 = vsub.s32 1, %v786
    %v788 = vrot.slane %v27, %v787
    %v789 = vlaneseq
    %v790 = vshrl.u32 %v789, 7
    %v791 = vsub.s32 1, %v790
    %v792 = vrot.slane %v28, %v791
    %v793 = vmul.f32 %v461, %v788
    %v794 = vmul.f32 %v462, %v792
    %v795 = vmul.f32 %v793, %v645
    %v796 = vmul.f32 %v794, %v646
    %v797 = vadd.f32 %v783, %v795
    %v798 = vadd.f32 %v784, %v796
    %v799 = vld [vmem:[%s2] sm:$0xff]
    %v800 = vld [vmem:[%s2 + $0x8] sm:$0xff]
    %v801 = vld [vmem:[%s2 + $0x10] sm:$0xff]
    %v802 = vld [vmem:[%s2 + $0x18] sm:$0xff]
    %v803 = vld [vmem:[%s2 + $0x20] sm:$0xff]
    %v804 = vld [vmem:[%s2 + $0x28] sm:$0xff]
    %v805 = vld [vmem:[%s2 + $0x30] sm:$0xff]
    %v806 = vld [vmem:[%s2 + $0x38] sm:$0xff]
    %v807 = vld [vmem:[%s2 + $0x40] sm:$0xff]
    %v808 = vld [vmem:[%s2 + $0x48] sm:$0xff]
    %v809 = vld [vmem:[%s2 + $0x50] sm:$0xff]
    %v810 = vld [vmem:[%s2 + $0x58] sm:$0xff]
    %v811 = vld [vmem:[%s2 + $0x60] sm:$0xff]
    %v812 = vld [vmem:[%s2 + $0x68] sm:$0xff]
    %v813 = vld [vmem:[%s2 + $0x70] sm:$0xff]
    %v814 = vld [vmem:[%s2 + $0x78] sm:$0xff]
    %v815 = vld [vmem:[%s2 + $0x80] sm:$0xff]
    %v816 = vld [vmem:[%s2 + $0x88] sm:$0xff]
    %v817 = vld [vmem:[%s2 + $0x90] sm:$0xff]
    %v818 = vld [vmem:[%s2 + $0x98] sm:$0xff]
    %v819 = vld [vmem:[%s2 + $0xa0] sm:$0xff]
    %v820 = vld [vmem:[%s2 + $0xa8] sm:$0xff]
    %v821 = vld [vmem:[%s2 + $0xb0] sm:$0xff]
    %v822 = vld [vmem:[%s2 + $0xb8] sm:$0xff]
    %v823 = vld [vmem:[%s2 + $0xc0] sm:$0xff]
    %v824 = vld [vmem:[%s2 + $0xc8] sm:$0xff]
    %v825 = vld [vmem:[%s2 + $0xd0] sm:$0xff]
    %v826 = vld [vmem:[%s2 + $0xd8] sm:$0xff]
    %v827 = vld [vmem:[%s2 + $0xe0] sm:$0xff]
    %v828 = vld [vmem:[%s2 + $0xe8] sm:$0xff]
    %v829 = vld [vmem:[%s2 + $0xf0] sm:$0xff]
    %v830 = vld [vmem:[%s2 + $0xf8] sm:$0xff]
    %s831 = scalar_lea.vmem %s2, 256
    %v832 = vld [vmem:[%s831] sm:$0xff]
    %v833 = vld [vmem:[%s831 + $0x8] sm:$0xff]
    %v834 = vld [vmem:[%s831 + $0x10] sm:$0xff]
    %v835 = vld [vmem:[%s831 + $0x18] sm:$0xff]
    %v836 = vld [vmem:[%s831 + $0x20] sm:$0xff]
    %v837 = vld [vmem:[%s831 + $0x28] sm:$0xff]
    %v838 = vld [vmem:[%s831 + $0x30] sm:$0xff]
    %v839 = vld [vmem:[%s831 + $0x38] sm:$0xff]
    %v840 = vld [vmem:[%s831 + $0x40] sm:$0xff]
    %v841 = vld [vmem:[%s831 + $0x48] sm:$0xff]
    %v842 = vld [vmem:[%s831 + $0x50] sm:$0xff]
    %v843 = vld [vmem:[%s831 + $0x58] sm:$0xff]
    %v844 = vld [vmem:[%s831 + $0x60] sm:$0xff]
    %v845 = vld [vmem:[%s831 + $0x68] sm:$0xff]
    %v846 = vld [vmem:[%s831 + $0x70] sm:$0xff]
    %v847 = vld [vmem:[%s831 + $0x78] sm:$0xff]
    %v848 = vld [vmem:[%s831 + $0x80] sm:$0xff]
    %v849 = vld [vmem:[%s831 + $0x88] sm:$0xff]
    %v850 = vld [vmem:[%s831 + $0x90] sm:$0xff]
    %v851 = vld [vmem:[%s831 + $0x98] sm:$0xff]
    %v852 = vld [vmem:[%s831 + $0xa0] sm:$0xff]
    %v853 = vld [vmem:[%s831 + $0xa8] sm:$0xff]
    %v854 = vld [vmem:[%s831 + $0xb0] sm:$0xff]
    %v855 = vld [vmem:[%s831 + $0xb8] sm:$0xff]
    %v856 = vld [vmem:[%s831 + $0xc0] sm:$0xff]
    %v857 = vld [vmem:[%s831 + $0xc8] sm:$0xff]
    %v858 = vld [vmem:[%s831 + $0xd0] sm:$0xff]
    %v859 = vld [vmem:[%s831 + $0xd8] sm:$0xff]
    %v860 = vld [vmem:[%s831 + $0xe0] sm:$0xff]
    %v861 = vld [vmem:[%s831 + $0xe8] sm:$0xff]
    %v862 = vld [vmem:[%s831 + $0xf0] sm:$0xff]
    %v863 = vld [vmem:[%s831 + $0xf8] sm:$0xff]
    %864 = vmatprep.subr.mxu0 0.0
    %865 = vmatpush1.msra.mxu0 %v832
    %866 = vmatprep.subr.mxu0 0.0
    %867 = vmatpush1.msra.mxu0 %v833
    %868 = vmatprep.subr.mxu0 0.0
    %869 = vmatpush1.msra.mxu0 %v834
    %870 = vmatprep.subr.mxu0 0.0
    %871 = vmatpush1.msra.mxu0 %v835
    %872 = vmatprep.subr.mxu0 0.0
    %873 = vmatpush1.msra.mxu0 %v836
    %874 = vmatprep.subr.mxu0 0.0
    %875 = vmatpush1.msra.mxu0 %v837
    %876 = vmatprep.subr.mxu0 0.0
    %877 = vmatpush1.msra.mxu0 %v838
    %878 = vmatprep.subr.mxu0 0.0
    %879 = vmatpush1.msra.mxu0 %v839
    %880 = vmatprep.subr.mxu0 0.0
    %881 = vmatpush1.msra.mxu0 %v840
    %882 = vmatprep.subr.mxu0 0.0
    %883 = vmatpush1.msra.mxu0 %v841
    %884 = vmatprep.subr.mxu0 0.0
    %885 = vmatpush1.msra.mxu0 %v842
    %886 = vmatprep.subr.mxu0 0.0
    %887 = vmatpush1.msra.mxu0 %v843
    %888 = vmatprep.subr.mxu0 0.0
    %889 = vmatpush1.msra.mxu0 %v844
    %890 = vmatprep.subr.mxu0 0.0
    %891 = vmatpush1.msra.mxu0 %v845
    %892 = vmatprep.subr.mxu0 0.0
    %893 = vmatpush1.msra.mxu0 %v846
    %894 = vmatprep.subr.mxu0 0.0
    %895 = vmatpush1.msra.mxu0 %v847
    %896 = vmatprep.subr.mxu0 0.0
    %897 = vmatpush1.msra.mxu0 %v848
    %898 = vmatprep.subr.mxu0 0.0
    %899 = vmatpush1.msra.mxu0 %v849
    %900 = vmatprep.subr.mxu0 0.0
    %901 = vmatpush1.msra.mxu0 %v850
    %902 = vmatprep.subr.mxu0 0.0
    %903 = vmatpush1.msra.mxu0 %v851
    %904 = vmatprep.subr.mxu0 0.0
    %905 = vmatpush1.msra.mxu0 %v852
    %906 = vmatprep.subr.mxu0 0.0
    %907 = vmatpush1.msra.mxu0 %v853
    %908 = vmatprep.subr.mxu0 0.0
    %909 = vmatpush1.msra.mxu0 %v854
    %910 = vmatprep.subr.mxu0 0.0
    %911 = vmatpush1.msra.mxu0 %v855
    %912 = vmatprep.subr.mxu0 0.0
    %913 = vmatpush1.msra.mxu0 %v856
    %914 = vmatprep.subr.mxu0 0.0
    %915 = vmatpush1.msra.mxu0 %v857
    %916 = vmatprep.subr.mxu0 0.0
    %917 = vmatpush1.msra.mxu0 %v858
    %918 = vmatprep.subr.mxu0 0.0
    %919 = vmatpush1.msra.mxu0 %v859
    %920 = vmatprep.subr.mxu0 0.0
    %921 = vmatpush1.msra.mxu0 %v860
    %922 = vmatprep.subr.mxu0 0.0
    %923 = vmatpush1.msra.mxu0 %v861
    %924 = vmatprep.subr.mxu0 0.0
    %925 = vmatpush1.msra.mxu0 %v862
    %926 = vmatprep.subr.mxu0 0.0
    %927 = vmatpush1.msra.mxu0 %v863
    %928 = vmatprep.mubr.f32.mxu0 %v672
    %929 = vmatmul.mubr.f32.gmra.mrb[0].mxu0 %v671
    %v930 = vpop.f32.mrb[0].mxu0
    %v931 = vadd.f32 0.0, %v930
    %v932 = vpop.f32.mrb[0].mxu0
    %933 = vdwg.mxu0
    %934 = vmatprep.subr.mxu0 0.0
    %935 = vmatpush1.msra.mxu0 %v799
    %936 = vmatprep.subr.mxu0 0.0
    %937 = vmatpush1.msra.mxu0 %v800
    %938 = vmatprep.subr.mxu0 0.0
    %939 = vmatpush1.msra.mxu0 %v801
    %940 = vmatprep.subr.mxu0 0.0
    %941 = vmatpush1.msra.mxu0 %v802
    %942 = vmatprep.subr.mxu0 0.0
    %943 = vmatpush1.msra.mxu0 %v803
    %944 = vmatprep.subr.mxu0 0.0
    %945 = vmatpush1.msra.mxu0 %v804
    %946 = vmatprep.subr.mxu0 0.0
    %947 = vmatpush1.msra.mxu0 %v805
    %948 = vmatprep.subr.mxu0 0.0
    %949 = vmatpush1.msra.mxu0 %v806
    %950 = vmatprep.subr.mxu0 0.0
    %951 = vmatpush1.msra.mxu0 %v807
    %952 = vmatprep.subr.mxu0 0.0
    %953 = vmatpush1.msra.mxu0 %v808
    %954 = vmatprep.subr.mxu0 0.0
    %955 = vmatpush1.msra.mxu0 %v809
    %956 = vmatprep.subr.mxu0 0.0
    %957 = vmatpush1.msra.mxu0 %v810
    %958 = vmatprep.subr.mxu0 0.0
    %959 = vmatpush1.msra.mxu0 %v811
    %960 = vmatprep.subr.mxu0 0.0
    %961 = vmatpush1.msra.mxu0 %v812
    %962 = vmatprep.subr.mxu0 0.0
    %963 = vmatpush1.msra.mxu0 %v813
    %964 = vmatprep.subr.mxu0 0.0
    %965 = vmatpush1.msra.mxu0 %v814
    %966 = vmatprep.subr.mxu0 0.0
    %967 = vmatpush1.msra.mxu0 %v815
    %968 = vmatprep.subr.mxu0 0.0
    %969 = vmatpush1.msra.mxu0 %v816
    %970 = vmatprep.subr.mxu0 0.0
    %971 = vmatpush1.msra.mxu0 %v817
    %972 = vmatprep.subr.mxu0 0.0
    %973 = vmatpush1.msra.mxu0 %v818
    %974 = vmatprep.subr.mxu0 0.0
    %975 = vmatpush1.msra.mxu0 %v819
    %976 = vmatprep.subr.mxu0 0.0
    %977 = vmatpush1.msra.mxu0 %v820
    %978 = vmatprep.subr.mxu0 0.0
    %979 = vmatpush1.msra.mxu0 %v821
    %980 = vmatprep.subr.mxu0 0.0
    %981 = vmatpush1.msra.mxu0 %v822
    %982 = vmatprep.subr.mxu0 0.0
    %983 = vmatpush1.msra.mxu0 %v823
    %984 = vmatprep.subr.mxu0 0.0
    %985 = vmatpush1.msra.mxu0 %v824
    %986 = vmatprep.subr.mxu0 0.0
    %987 = vmatpush1.msra.mxu0 %v825
    %988 = vmatprep.subr.mxu0 0.0
    %989 = vmatpush1.msra.mxu0 %v826
    %990 = vmatprep.subr.mxu0 0.0
    %991 = vmatpush1.msra.mxu0 %v827
    %992 = vmatprep.subr.mxu0 0.0
    %993 = vmatpush1.msra.mxu0 %v828
    %994 = vmatprep.subr.mxu0 0.0
    %995 = vmatpush1.msra.mxu0 %v829
    %996 = vmatprep.subr.mxu0 0.0
    %997 = vmatpush1.msra.mxu0 %v830
    %998 = vmatprep.mubr.f32.mxu0 %v42
    %999 = vmatmul.mubr.f32.gmra.mrb[0].mxu0 %v41
    %v1000 = vpop.f32.mrb[0].mxu0
    %v1001 = vadd.f32 %v931, %v1000
    %v1002 = vpop.f32.mrb[0].mxu0
    %1003 = vdwg.mxu0
    %s1004 = scalar_lea.vmem %s2, 512
    %v1005 = vld [vmem:[%s1004] sm:$0xff]
    %v1006 = vld [vmem:[%s1004 + $0x8] sm:$0xff]
    %v1007 = vld [vmem:[%s1004 + $0x10] sm:$0xff]
    %v1008 = vld [vmem:[%s1004 + $0x18] sm:$0xff]
    %v1009 = vld [vmem:[%s1004 + $0x20] sm:$0xff]
    %v1010 = vld [vmem:[%s1004 + $0x28] sm:$0xff]
    %v1011 = vld [vmem:[%s1004 + $0x30] sm:$0xff]
    %v1012 = vld [vmem:[%s1004 + $0x38] sm:$0xff]
    %v1013 = vld [vmem:[%s1004 + $0x40] sm:$0xff]
    %v1014 = vld [vmem:[%s1004 + $0x48] sm:$0xff]
    %v1015 = vld [vmem:[%s1004 + $0x50] sm:$0xff]
    %v1016 = vld [vmem:[%s1004 + $0x58] sm:$0xff]
    %v1017 = vld [vmem:[%s1004 + $0x60] sm:$0xff]
    %v1018 = vld [vmem:[%s1004 + $0x68] sm:$0xff]
    %v1019 = vld [vmem:[%s1004 + $0x70] sm:$0xff]
    %v1020 = vld [vmem:[%s1004 + $0x78] sm:$0xff]
    %v1021 = vld [vmem:[%s1004 + $0x80] sm:$0xff]
    %v1022 = vld [vmem:[%s1004 + $0x88] sm:$0xff]
    %v1023 = vld [vmem:[%s1004 + $0x90] sm:$0xff]
    %v1024 = vld [vmem:[%s1004 + $0x98] sm:$0xff]
    %v1025 = vld [vmem:[%s1004 + $0xa0] sm:$0xff]
    %v1026 = vld [vmem:[%s1004 + $0xa8] sm:$0xff]
    %v1027 = vld [vmem:[%s1004 + $0xb0] sm:$0xff]
    %v1028 = vld [vmem:[%s1004 + $0xb8] sm:$0xff]
    %v1029 = vld [vmem:[%s1004 + $0xc0] sm:$0xff]
    %v1030 = vld [vmem:[%s1004 + $0xc8] sm:$0xff]
    %v1031 = vld [vmem:[%s1004 + $0xd0] sm:$0xff]
    %v1032 = vld [vmem:[%s1004 + $0xd8] sm:$0xff]
    %v1033 = vld [vmem:[%s1004 + $0xe0] sm:$0xff]
    %v1034 = vld [vmem:[%s1004 + $0xe8] sm:$0xff]
    %v1035 = vld [vmem:[%s1004 + $0xf0] sm:$0xff]
    %v1036 = vld [vmem:[%s1004 + $0xf8] sm:$0xff]
    %1037 = vmatprep.subr.mxu0 0.0
    %1038 = vmatpush1.msra.mxu0 %v1005
    %1039 = vmatprep.subr.mxu0 0.0
    %1040 = vmatpush1.msra.mxu0 %v1006
    %1041 = vmatprep.subr.mxu0 0.0
    %1042 = vmatpush1.msra.mxu0 %v1007
    %1043 = vmatprep.subr.mxu0 0.0
    %1044 = vmatpush1.msra.mxu0 %v1008
    %1045 = vmatprep.subr.mxu0 0.0
    %1046 = vmatpush1.msra.mxu0 %v1009
    %1047 = vmatprep.subr.mxu0 0.0
    %1048 = vmatpush1.msra.mxu0 %v1010
    %1049 = vmatprep.subr.mxu0 0.0
    %1050 = vmatpush1.msra.mxu0 %v1011
    %1051 = vmatprep.subr.mxu0 0.0
    %1052 = vmatpush1.msra.mxu0 %v1012
    %1053 = vmatprep.subr.mxu0 0.0
    %1054 = vmatpush1.msra.mxu0 %v1013
    %1055 = vmatprep.subr.mxu0 0.0
    %1056 = vmatpush1.msra.mxu0 %v1014
    %1057 = vmatprep.subr.mxu0 0.0
    %1058 = vmatpush1.msra.mxu0 %v1015
    %1059 = vmatprep.subr.mxu0 0.0
    %1060 = vmatpush1.msra.mxu0 %v1016
    %1061 = vmatprep.subr.mxu0 0.0
    %1062 = vmatpush1.msra.mxu0 %v1017
    %1063 = vmatprep.subr.mxu0 0.0
    %1064 = vmatpush1.msra.mxu0 %v1018
    %1065 = vmatprep.subr.mxu0 0.0
    %1066 = vmatpush1.msra.mxu0 %v1019
    %1067 = vmatprep.subr.mxu0 0.0
    %1068 = vmatpush1.msra.mxu0 %v1020
    %1069 = vmatprep.subr.mxu0 0.0
    %1070 = vmatpush1.msra.mxu0 %v1021
    %1071 = vmatprep.subr.mxu0 0.0
    %1072 = vmatpush1.msra.mxu0 %v1022
    %1073 = vmatprep.subr.mxu0 0.0
    %1074 = vmatpush1.msra.mxu0 %v1023
    %1075 = vmatprep.subr.mxu0 0.0
    %1076 = vmatpush1.msra.mxu0 %v1024
    %1077 = vmatprep.subr.mxu0 0.0
    %1078 = vmatpush1.msra.mxu0 %v1025
    %1079 = vmatprep.subr.mxu0 0.0
    %1080 = vmatpush1.msra.mxu0 %v1026
    %1081 = vmatprep.subr.mxu0 0.0
    %1082 = vmatpush1.msra.mxu0 %v1027
    %1083 = vmatprep.subr.mxu0 0.0
    %1084 = vmatpush1.msra.mxu0 %v1028
    %1085 = vmatprep.subr.mxu0 0.0
    %1086 = vmatpush1.msra.mxu0 %v1029
    %1087 = vmatprep.subr.mxu0 0.0
    %1088 = vmatpush1.msra.mxu0 %v1030
    %1089 = vmatprep.subr.mxu0 0.0
    %1090 = vmatpush1.msra.mxu0 %v1031
    %1091 = vmatprep.subr.mxu0 0.0
    %1092 = vmatpush1.msra.mxu0 %v1032
    %1093 = vmatprep.subr.mxu0 0.0
    %1094 = vmatpush1.msra.mxu0 %v1033
    %1095 = vmatprep.subr.mxu0 0.0
    %1096 = vmatpush1.msra.mxu0 %v1034
    %1097 = vmatprep.subr.mxu0 0.0
    %1098 = vmatpush1.msra.mxu0 %v1035
    %1099 = vmatprep.subr.mxu0 0.0
    %1100 = vmatpush1.msra.mxu0 %v1036
    %1101 = vmatprep.mubr.f32.mxu0 %v690
    %1102 = vmatmul.mubr.f32.gmra.mrb[0].mxu0 %v689
    %v1103 = vpop.f32.mrb[0].mxu0
    %v1104 = vadd.f32 0.0, %v1103
    %v1105 = vpop.f32.mrb[0].mxu0
    %1106 = vdwg.mxu0
    %v1107 = vadd.f32 %v1001, %v1104
    %s1108 = scalar_lea.vmem %s2, 768
    %v1109 = vld [vmem:[%s1108] sm:$0xff]
    %v1110 = vld [vmem:[%s1108 + $0x8] sm:$0xff]
    %v1111 = vld [vmem:[%s1108 + $0x10] sm:$0xff]
    %v1112 = vld [vmem:[%s1108 + $0x18] sm:$0xff]
    %v1113 = vld [vmem:[%s1108 + $0x20] sm:$0xff]
    %v1114 = vld [vmem:[%s1108 + $0x28] sm:$0xff]
    %v1115 = vld [vmem:[%s1108 + $0x30] sm:$0xff]
    %v1116 = vld [vmem:[%s1108 + $0x38] sm:$0xff]
    %v1117 = vld [vmem:[%s1108 + $0x40] sm:$0xff]
    %v1118 = vld [vmem:[%s1108 + $0x48] sm:$0xff]
    %v1119 = vld [vmem:[%s1108 + $0x50] sm:$0xff]
    %v1120 = vld [vmem:[%s1108 + $0x58] sm:$0xff]
    %v1121 = vld [vmem:[%s1108 + $0x60] sm:$0xff]
    %v1122 = vld [vmem:[%s1108 + $0x68] sm:$0xff]
    %v1123 = vld [vmem:[%s1108 + $0x70] sm:$0xff]
    %v1124 = vld [vmem:[%s1108 + $0x78] sm:$0xff]
    %v1125 = vld [vmem:[%s1108 + $0x80] sm:$0xff]
    %v1126 = vld [vmem:[%s1108 + $0x88] sm:$0xff]
    %v1127 = vld [vmem:[%s1108 + $0x90] sm:$0xff]
    %v1128 = vld [vmem:[%s1108 + $0x98] sm:$0xff]
    %v1129 = vld [vmem:[%s1108 + $0xa0] sm:$0xff]
    %v1130 = vld [vmem:[%s1108 + $0xa8] sm:$0xff]
    %v1131 = vld [vmem:[%s1108 + $0xb0] sm:$0xff]
    %v1132 = vld [vmem:[%s1108 + $0xb8] sm:$0xff]
    %v1133 = vld [vmem:[%s1108 + $0xc0] sm:$0xff]
    %v1134 = vld [vmem:[%s1108 + $0xc8] sm:$0xff]
    %v1135 = vld [vmem:[%s1108 + $0xd0] sm:$0xff]
    %v1136 = vld [vmem:[%s1108 + $0xd8] sm:$0xff]
    %v1137 = vld [vmem:[%s1108 + $0xe0] sm:$0xff]
    %v1138 = vld [vmem:[%s1108 + $0xe8] sm:$0xff]
    %v1139 = vld [vmem:[%s1108 + $0xf0] sm:$0xff]
    %v1140 = vld [vmem:[%s1108 + $0xf8] sm:$0xff]
    %1141 = vmatprep.subr.mxu0 0.0
    %1142 = vmatpush1.msra.mxu0 %v1109
    %1143 = vmatprep.subr.mxu0 0.0
    %1144 = vmatpush1.msra.mxu0 %v1110
    %1145 = vmatprep.subr.mxu0 0.0
    %1146 = vmatpush1.msra.mxu0 %v1111
    %1147 = vmatprep.subr.mxu0 0.0
    %1148 = vmatpush1.msra.mxu0 %v1112
    %1149 = vmatprep.subr.mxu0 0.0
    %1150 = vmatpush1.msra.mxu0 %v1113
    %1151 = vmatprep.subr.mxu0 0.0
    %1152 = vmatpush1.msra.mxu0 %v1114
    %1153 = vmatprep.subr.mxu0 0.0
    %1154 = vmatpush1.msra.mxu0 %v1115
    %1155 = vmatprep.subr.mxu0 0.0
    %1156 = vmatpush1.msra.mxu0 %v1116
    %1157 = vmatprep.subr.mxu0 0.0
    %1158 = vmatpush1.msra.mxu0 %v1117
    %1159 = vmatprep.subr.mxu0 0.0
    %1160 = vmatpush1.msra.mxu0 %v1118
    %1161 = vmatprep.subr.mxu0 0.0
    %1162 = vmatpush1.msra.mxu0 %v1119
    %1163 = vmatprep.subr.mxu0 0.0
    %1164 = vmatpush1.msra.mxu0 %v1120
    %1165 = vmatprep.subr.mxu0 0.0
    %1166 = vmatpush1.msra.mxu0 %v1121
    %1167 = vmatprep.subr.mxu0 0.0
    %1168 = vmatpush1.msra.mxu0 %v1122
    %1169 = vmatprep.subr.mxu0 0.0
    %1170 = vmatpush1.msra.mxu0 %v1123
    %1171 = vmatprep.subr.mxu0 0.0
    %1172 = vmatpush1.msra.mxu0 %v1124
    %1173 = vmatprep.subr.mxu0 0.0
    %1174 = vmatpush1.msra.mxu0 %v1125
    %1175 = vmatprep.subr.mxu0 0.0
    %1176 = vmatpush1.msra.mxu0 %v1126
    %1177 = vmatprep.subr.mxu0 0.0
    %1178 = vmatpush1.msra.mxu0 %v1127
    %1179 = vmatprep.subr.mxu0 0.0
    %1180 = vmatpush1.msra.mxu0 %v1128
    %1181 = vmatprep.subr.mxu0 0.0
    %1182 = vmatpush1.msra.mxu0 %v1129
    %1183 = vmatprep.subr.mxu0 0.0
    %1184 = vmatpush1.msra.mxu0 %v1130
    %1185 = vmatprep.subr.mxu0 0.0
    %1186 = vmatpush1.msra.mxu0 %v1131
    %1187 = vmatprep.subr.mxu0 0.0
    %1188 = vmatpush1.msra.mxu0 %v1132
    %1189 = vmatprep.subr.mxu0 0.0
    %1190 = vmatpush1.msra.mxu0 %v1133
    %1191 = vmatprep.subr.mxu0 0.0
    %1192 = vmatpush1.msra.mxu0 %v1134
    %1193 = vmatprep.subr.mxu0 0.0
    %1194 = vmatpush1.msra.mxu0 %v1135
    %1195 = vmatprep.subr.mxu0 0.0
    %1196 = vmatpush1.msra.mxu0 %v1136
    %1197 = vmatprep.subr.mxu0 0.0
    %1198 = vmatpush1.msra.mxu0 %v1137
    %1199 = vmatprep.subr.mxu0 0.0
    %1200 = vmatpush1.msra.mxu0 %v1138
    %1201 = vmatprep.subr.mxu0 0.0
    %1202 = vmatpush1.msra.mxu0 %v1139
    %1203 = vmatprep.subr.mxu0 0.0
    %1204 = vmatpush1.msra.mxu0 %v1140
    %1205 = vmatprep.mubr.f32.mxu0 %v708
    %1206 = vmatmul.mubr.f32.gmra.mrb[0].mxu0 %v707
    %v1207 = vpop.f32.mrb[0].mxu0
    %v1208 = vadd.f32 0.0, %v1207
    %v1209 = vpop.f32.mrb[0].mxu0
    %1210 = vdwg.mxu0
    %v1211 = vadd.f32 %v1107, %v1208
    %s1212 = scalar_lea.vmem %s2, 1024
    %v1213 = vld [vmem:[%s1212] sm:$0xff]
    %v1214 = vld [vmem:[%s1212 + $0x8] sm:$0xff]
    %v1215 = vld [vmem:[%s1212 + $0x10] sm:$0xff]
    %v1216 = vld [vmem:[%s1212 + $0x18] sm:$0xff]
    %v1217 = vld [vmem:[%s1212 + $0x20] sm:$0xff]
    %v1218 = vld [vmem:[%s1212 + $0x28] sm:$0xff]
    %v1219 = vld [vmem:[%s1212 + $0x30] sm:$0xff]
    %v1220 = vld [vmem:[%s1212 + $0x38] sm:$0xff]
    %v1221 = vld [vmem:[%s1212 + $0x40] sm:$0xff]
    %v1222 = vld [vmem:[%s1212 + $0x48] sm:$0xff]
    %v1223 = vld [vmem:[%s1212 + $0x50] sm:$0xff]
    %v1224 = vld [vmem:[%s1212 + $0x58] sm:$0xff]
    %v1225 = vld [vmem:[%s1212 + $0x60] sm:$0xff]
    %v1226 = vld [vmem:[%s1212 + $0x68] sm:$0xff]
    %v1227 = vld [vmem:[%s1212 + $0x70] sm:$0xff]
    %v1228 = vld [vmem:[%s1212 + $0x78] sm:$0xff]
    %v1229 = vld [vmem:[%s1212 + $0x80] sm:$0xff]
    %v1230 = vld [vmem:[%s1212 + $0x88] sm:$0xff]
    %v1231 = vld [vmem:[%s1212 + $0x90] sm:$0xff]
    %v1232 = vld [vmem:[%s1212 + $0x98] sm:$0xff]
    %v1233 = vld [vmem:[%s1212 + $0xa0] sm:$0xff]
    %v1234 = vld [vmem:[%s1212 + $0xa8] sm:$0xff]
    %v1235 = vld [vmem:[%s1212 + $0xb0] sm:$0xff]
    %v1236 = vld [vmem:[%s1212 + $0xb8] sm:$0xff]
    %v1237 = vld [vmem:[%s1212 + $0xc0] sm:$0xff]
    %v1238 = vld [vmem:[%s1212 + $0xc8] sm:$0xff]
    %v1239 = vld [vmem:[%s1212 + $0xd0] sm:$0xff]
    %v1240 = vld [vmem:[%s1212 + $0xd8] sm:$0xff]
    %v1241 = vld [vmem:[%s1212 + $0xe0] sm:$0xff]
    %v1242 = vld [vmem:[%s1212 + $0xe8] sm:$0xff]
    %v1243 = vld [vmem:[%s1212 + $0xf0] sm:$0xff]
    %v1244 = vld [vmem:[%s1212 + $0xf8] sm:$0xff]
    %1245 = vmatprep.subr.mxu0 0.0
    %1246 = vmatpush1.msra.mxu0 %v1213
    %1247 = vmatprep.subr.mxu0 0.0
    %1248 = vmatpush1.msra.mxu0 %v1214
    %1249 = vmatprep.subr.mxu0 0.0
    %1250 = vmatpush1.msra.mxu0 %v1215
    %1251 = vmatprep.subr.mxu0 0.0
    %1252 = vmatpush1.msra.mxu0 %v1216
    %1253 = vmatprep.subr.mxu0 0.0
    %1254 = vmatpush1.msra.mxu0 %v1217
    %1255 = vmatprep.subr.mxu0 0.0
    %1256 = vmatpush1.msra.mxu0 %v1218
    %1257 = vmatprep.subr.mxu0 0.0
    %1258 = vmatpush1.msra.mxu0 %v1219
    %1259 = vmatprep.subr.mxu0 0.0
    %1260 = vmatpush1.msra.mxu0 %v1220
    %1261 = vmatprep.subr.mxu0 0.0
    %1262 = vmatpush1.msra.mxu0 %v1221
    %1263 = vmatprep.subr.mxu0 0.0
    %1264 = vmatpush1.msra.mxu0 %v1222
    %1265 = vmatprep.subr.mxu0 0.0
    %1266 = vmatpush1.msra.mxu0 %v1223
    %1267 = vmatprep.subr.mxu0 0.0
    %1268 = vmatpush1.msra.mxu0 %v1224
    %1269 = vmatprep.subr.mxu0 0.0
    %1270 = vmatpush1.msra.mxu0 %v1225
    %1271 = vmatprep.subr.mxu0 0.0
    %1272 = vmatpush1.msra.mxu0 %v1226
    %1273 = vmatprep.subr.mxu0 0.0
    %1274 = vmatpush1.msra.mxu0 %v1227
    %1275 = vmatprep.subr.mxu0 0.0
    %1276 = vmatpush1.msra.mxu0 %v1228
    %1277 = vmatprep.subr.mxu0 0.0
    %1278 = vmatpush1.msra.mxu0 %v1229
    %1279 = vmatprep.subr.mxu0 0.0
    %1280 = vmatpush1.msra.mxu0 %v1230
    %1281 = vmatprep.subr.mxu0 0.0
    %1282 = vmatpush1.msra.mxu0 %v1231
    %1283 = vmatprep.subr.mxu0 0.0
    %1284 = vmatpush1.msra.mxu0 %v1232
    %1285 = vmatprep.subr.mxu0 0.0
    %1286 = vmatpush1.msra.mxu0 %v1233
    %1287 = vmatprep.subr.mxu0 0.0
    %1288 = vmatpush1.msra.mxu0 %v1234
    %1289 = vmatprep.subr.mxu0 0.0
    %1290 = vmatpush1.msra.mxu0 %v1235
    %1291 = vmatprep.subr.mxu0 0.0
    %1292 = vmatpush1.msra.mxu0 %v1236
    %1293 = vmatprep.subr.mxu0 0.0
    %1294 = vmatpush1.msra.mxu0 %v1237
    %1295 = vmatprep.subr.mxu0 0.0
    %1296 = vmatpush1.msra.mxu0 %v1238
    %1297 = vmatprep.subr.mxu0 0.0
    %1298 = vmatpush1.msra.mxu0 %v1239
    %1299 = vmatprep.subr.mxu0 0.0
    %1300 = vmatpush1.msra.mxu0 %v1240
    %1301 = vmatprep.subr.mxu0 0.0
    %1302 = vmatpush1.msra.mxu0 %v1241
    %1303 = vmatprep.subr.mxu0 0.0
    %1304 = vmatpush1.msra.mxu0 %v1242
    %1305 = vmatprep.subr.mxu0 0.0
    %1306 = vmatpush1.msra.mxu0 %v1243
    %1307 = vmatprep.subr.mxu0 0.0
    %1308 = vmatpush1.msra.mxu0 %v1244
    %1309 = vmatprep.mubr.f32.mxu0 %v726
    %1310 = vmatmul.mubr.f32.gmra.mrb[0].mxu0 %v725
    %v1311 = vpop.f32.mrb[0].mxu0
    %v1312 = vadd.f32 0.0, %v1311
    %v1313 = vpop.f32.mrb[0].mxu0
    %1314 = vdwg.mxu0
    %v1315 = vadd.f32 %v1211, %v1312
    %s1316 = scalar_lea.vmem %s2, 1280
    %v1317 = vld [vmem:[%s1316] sm:$0xff]
    %v1318 = vld [vmem:[%s1316 + $0x8] sm:$0xff]
    %v1319 = vld [vmem:[%s1316 + $0x10] sm:$0xff]
    %v1320 = vld [vmem:[%s1316 + $0x18] sm:$0xff]
    %v1321 = vld [vmem:[%s1316 + $0x20] sm:$0xff]
    %v1322 = vld [vmem:[%s1316 + $0x28] sm:$0xff]
    %v1323 = vld [vmem:[%s1316 + $0x30] sm:$0xff]
    %v1324 = vld [vmem:[%s1316 + $0x38] sm:$0xff]
    %v1325 = vld [vmem:[%s1316 + $0x40] sm:$0xff]
    %v1326 = vld [vmem:[%s1316 + $0x48] sm:$0xff]
    %v1327 = vld [vmem:[%s1316 + $0x50] sm:$0xff]
    %v1328 = vld [vmem:[%s1316 + $0x58] sm:$0xff]
    %v1329 = vld [vmem:[%s1316 + $0x60] sm:$0xff]
    %v1330 = vld [vmem:[%s1316 + $0x68] sm:$0xff]
    %v1331 = vld [vmem:[%s1316 + $0x70] sm:$0xff]
    %v1332 = vld [vmem:[%s1316 + $0x78] sm:$0xff]
    %v1333 = vld [vmem:[%s1316 + $0x80] sm:$0xff]
    %v1334 = vld [vmem:[%s1316 + $0x88] sm:$0xff]
    %v1335 = vld [vmem:[%s1316 + $0x90] sm:$0xff]
    %v1336 = vld [vmem:[%s1316 + $0x98] sm:$0xff]
    %v1337 = vld [vmem:[%s1316 + $0xa0] sm:$0xff]
    %v1338 = vld [vmem:[%s1316 + $0xa8] sm:$0xff]
    %v1339 = vld [vmem:[%s1316 + $0xb0] sm:$0xff]
    %v1340 = vld [vmem:[%s1316 + $0xb8] sm:$0xff]
    %v1341 = vld [vmem:[%s1316 + $0xc0] sm:$0xff]
    %v1342 = vld [vmem:[%s1316 + $0xc8] sm:$0xff]
    %v1343 = vld [vmem:[%s1316 + $0xd0] sm:$0xff]
    %v1344 = vld [vmem:[%s1316 + $0xd8] sm:$0xff]
    %v1345 = vld [vmem:[%s1316 + $0xe0] sm:$0xff]
    %v1346 = vld [vmem:[%s1316 + $0xe8] sm:$0xff]
    %v1347 = vld [vmem:[%s1316 + $0xf0] sm:$0xff]
    %v1348 = vld [vmem:[%s1316 + $0xf8] sm:$0xff]
    %1349 = vmatprep.subr.mxu0 0.0
    %1350 = vmatpush1.msra.mxu0 %v1317
    %1351 = vmatprep.subr.mxu0 0.0
    %1352 = vmatpush1.msra.mxu0 %v1318
    %1353 = vmatprep.subr.mxu0 0.0
    %1354 = vmatpush1.msra.mxu0 %v1319
    %1355 = vmatprep.subr.mxu0 0.0
    %1356 = vmatpush1.msra.mxu0 %v1320
    %1357 = vmatprep.subr.mxu0 0.0
    %1358 = vmatpush1.msra.mxu0 %v1321
    %1359 = vmatprep.subr.mxu0 0.0
    %1360 = vmatpush1.msra.mxu0 %v1322
    %1361 = vmatprep.subr.mxu0 0.0
    %1362 = vmatpush1.msra.mxu0 %v1323
    %1363 = vmatprep.subr.mxu0 0.0
    %1364 = vmatpush1.msra.mxu0 %v1324
    %1365 = vmatprep.subr.mxu0 0.0
    %1366 = vmatpush1.msra.mxu0 %v1325
    %1367 = vmatprep.subr.mxu0 0.0
    %1368 = vmatpush1.msra.mxu0 %v1326
    %1369 = vmatprep.subr.mxu0 0.0
    %1370 = vmatpush1.msra.mxu0 %v1327
    %1371 = vmatprep.subr.mxu0 0.0
    %1372 = vmatpush1.msra.mxu0 %v1328
    %1373 = vmatprep.subr.mxu0 0.0
    %1374 = vmatpush1.msra.mxu0 %v1329
    %1375 = vmatprep.subr.mxu0 0.0
    %1376 = vmatpush1.msra.mxu0 %v1330
    %1377 = vmatprep.subr.mxu0 0.0
    %1378 = vmatpush1.msra.mxu0 %v1331
    %1379 = vmatprep.subr.mxu0 0.0
    %1380 = vmatpush1.msra.mxu0 %v1332
    %1381 = vmatprep.subr.mxu0 0.0
    %1382 = vmatpush1.msra.mxu0 %v1333
    %1383 = vmatprep.subr.mxu0 0.0
    %1384 = vmatpush1.msra.mxu0 %v1334
    %1385 = vmatprep.subr.mxu0 0.0
    %1386 = vmatpush1.msra.mxu0 %v1335
    %1387 = vmatprep.subr.mxu0 0.0
    %1388 = vmatpush1.msra.mxu0 %v1336
    %1389 = vmatprep.subr.mxu0 0.0
    %1390 = vmatpush1.msra.mxu0 %v1337
    %1391 = vmatprep.subr.mxu0 0.0
    %1392 = vmatpush1.msra.mxu0 %v1338
    %1393 = vmatprep.subr.mxu0 0.0
    %1394 = vmatpush1.msra.mxu0 %v1339
    %1395 = vmatprep.subr.mxu0 0.0
    %1396 = vmatpush1.msra.mxu0 %v1340
    %1397 = vmatprep.subr.mxu0 0.0
    %1398 = vmatpush1.msra.mxu0 %v1341
    %1399 = vmatprep.subr.mxu0 0.0
    %1400 = vmatpush1.msra.mxu0 %v1342
    %1401 = vmatprep.subr.mxu0 0.0
    %1402 = vmatpush1.msra.mxu0 %v1343
    %1403 = vmatprep.subr.mxu0 0.0
    %1404 = vmatpush1.msra.mxu0 %v1344
    %1405 = vmatprep.subr.mxu0 0.0
    %1406 = vmatpush1.msra.mxu0 %v1345
    %1407 = vmatprep.subr.mxu0 0.0
    %1408 = vmatpush1.msra.mxu0 %v1346
    %1409 = vmatprep.subr.mxu0 0.0
    %1410 = vmatpush1.msra.mxu0 %v1347
    %1411 = vmatprep.subr.mxu0 0.0
    %1412 = vmatpush1.msra.mxu0 %v1348
    %1413 = vmatprep.mubr.f32.mxu0 %v744
    %1414 = vmatmul.mubr.f32.gmra.mrb[0].mxu0 %v743
    %v1415 = vpop.f32.mrb[0].mxu0
    %v1416 = vadd.f32 0.0, %v1415
    %v1417 = vpop.f32.mrb[0].mxu0
    %1418 = vdwg.mxu0
    %v1419 = vadd.f32 %v1315, %v1416
    %s1420 = scalar_lea.vmem %s2, 1536
    %v1421 = vld [vmem:[%s1420] sm:$0xff]
    %v1422 = vld [vmem:[%s1420 + $0x8] sm:$0xff]
    %v1423 = vld [vmem:[%s1420 + $0x10] sm:$0xff]
    %v1424 = vld [vmem:[%s1420 + $0x18] sm:$0xff]
    %v1425 = vld [vmem:[%s1420 + $0x20] sm:$0xff]
    %v1426 = vld [vmem:[%s1420 + $0x28] sm:$0xff]
    %v1427 = vld [vmem:[%s1420 + $0x30] sm:$0xff]
    %v1428 = vld [vmem:[%s1420 + $0x38] sm:$0xff]
    %v1429 = vld [vmem:[%s1420 + $0x40] sm:$0xff]
    %v1430 = vld [vmem:[%s1420 + $0x48] sm:$0xff]
    %v1431 = vld [vmem:[%s1420 + $0x50] sm:$0xff]
    %v1432 = vld [vmem:[%s1420 + $0x58] sm:$0xff]
    %v1433 = vld [vmem:[%s1420 + $0x60] sm:$0xff]
    %v1434 = vld [vmem:[%s1420 + $0x68] sm:$0xff]
    %v1435 = vld [vmem:[%s1420 + $0x70] sm:$0xff]
    %v1436 = vld [vmem:[%s1420 + $0x78] sm:$0xff]
    %v1437 = vld [vmem:[%s1420 + $0x80] sm:$0xff]
    %v1438 = vld [vmem:[%s1420 + $0x88] sm:$0xff]
    %v1439 = vld [vmem:[%s1420 + $0x90] sm:$0xff]
    %v1440 = vld [vmem:[%s1420 + $0x98] sm:$0xff]
    %v1441 = vld [vmem:[%s1420 + $0xa0] sm:$0xff]
    %v1442 = vld [vmem:[%s1420 + $0xa8] sm:$0xff]
    %v1443 = vld [vmem:[%s1420 + $0xb0] sm:$0xff]
    %v1444 = vld [vmem:[%s1420 + $0xb8] sm:$0xff]
    %v1445 = vld [vmem:[%s1420 + $0xc0] sm:$0xff]
    %v1446 = vld [vmem:[%s1420 + $0xc8] sm:$0xff]
    %v1447 = vld [vmem:[%s1420 + $0xd0] sm:$0xff]
    %v1448 = vld [vmem:[%s1420 + $0xd8] sm:$0xff]
    %v1449 = vld [vmem:[%s1420 + $0xe0] sm:$0xff]
    %v1450 = vld [vmem:[%s1420 + $0xe8] sm:$0xff]
    %v1451 = vld [vmem:[%s1420 + $0xf0] sm:$0xff]
    %v1452 = vld [vmem:[%s1420 + $0xf8] sm:$0xff]
    %1453 = vmatprep.subr.mxu0 0.0
    %1454 = vmatpush1.msra.mxu0 %v1421
    %1455 = vmatprep.subr.mxu0 0.0
    %1456 = vmatpush1.msra.mxu0 %v1422
    %1457 = vmatprep.subr.mxu0 0.0
    %1458 = vmatpush1.msra.mxu0 %v1423
    %1459 = vmatprep.subr.mxu0 0.0
    %1460 = vmatpush1.msra.mxu0 %v1424
    %1461 = vmatprep.subr.mxu0 0.0
    %1462 = vmatpush1.msra.mxu0 %v1425
    %1463 = vmatprep.subr.mxu0 0.0
    %1464 = vmatpush1.msra.mxu0 %v1426
    %1465 = vmatprep.subr.mxu0 0.0
    %1466 = vmatpush1.msra.mxu0 %v1427
    %1467 = vmatprep.subr.mxu0 0.0
    %1468 = vmatpush1.msra.mxu0 %v1428
    %1469 = vmatprep.subr.mxu0 0.0
    %1470 = vmatpush1.msra.mxu0 %v1429
    %1471 = vmatprep.subr.mxu0 0.0
    %1472 = vmatpush1.msra.mxu0 %v1430
    %1473 = vmatprep.subr.mxu0 0.0
    %1474 = vmatpush1.msra.mxu0 %v1431
    %1475 = vmatprep.subr.mxu0 0.0
    %1476 = vmatpush1.msra.mxu0 %v1432
    %1477 = vmatprep.subr.mxu0 0.0
    %1478 = vmatpush1.msra.mxu0 %v1433
    %1479 = vmatprep.subr.mxu0 0.0
    %1480 = vmatpush1.msra.mxu0 %v1434
    %1481 = vmatprep.subr.mxu0 0.0
    %1482 = vmatpush1.msra.mxu0 %v1435
    %1483 = vmatprep.subr.mxu0 0.0
    %1484 = vmatpush1.msra.mxu0 %v1436
    %1485 = vmatprep.subr.mxu0 0.0
    %1486 = vmatpush1.msra.mxu0 %v1437
    %1487 = vmatprep.subr.mxu0 0.0
    %1488 = vmatpush1.msra.mxu0 %v1438
    %1489 = vmatprep.subr.mxu0 0.0
    %1490 = vmatpush1.msra.mxu0 %v1439
    %1491 = vmatprep.subr.mxu0 0.0
    %1492 = vmatpush1.msra.mxu0 %v1440
    %1493 = vmatprep.subr.mxu0 0.0
    %1494 = vmatpush1.msra.mxu0 %v1441
    %1495 = vmatprep.subr.mxu0 0.0
    %1496 = vmatpush1.msra.mxu0 %v1442
    %1497 = vmatprep.subr.mxu0 0.0
    %1498 = vmatpush1.msra.mxu0 %v1443
    %1499 = vmatprep.subr.mxu0 0.0
    %1500 = vmatpush1.msra.mxu0 %v1444
    %1501 = vmatprep.subr.mxu0 0.0
    %1502 = vmatpush1.msra.mxu0 %v1445
    %1503 = vmatprep.subr.mxu0 0.0
    %1504 = vmatpush1.msra.mxu0 %v1446
    %1505 = vmatprep.subr.mxu0 0.0
    %1506 = vmatpush1.msra.mxu0 %v1447
    %1507 = vmatprep.subr.mxu0 0.0
    %1508 = vmatpush1.msra.mxu0 %v1448
    %1509 = vmatprep.subr.mxu0 0.0
    %1510 = vmatpush1.msra.mxu0 %v1449
    %1511 = vmatprep.subr.mxu0 0.0
    %1512 = vmatpush1.msra.mxu0 %v1450
    %1513 = vmatprep.subr.mxu0 0.0
    %1514 = vmatpush1.msra.mxu0 %v1451
    %1515 = vmatprep.subr.mxu0 0.0
    %1516 = vmatpush1.msra.mxu0 %v1452
    %1517 = vmatprep.mubr.f32.mxu0 %v762
    %1518 = vmatmul.mubr.f32.gmra.mrb[0].mxu0 %v761
    %v1519 = vpop.f32.mrb[0].mxu0
    %v1520 = vadd.f32 0.0, %v1519
    %v1521 = vpop.f32.mrb[0].mxu0
    %1522 = vdwg.mxu0
    %v1523 = vadd.f32 %v1419, %v1520
    %s1524 = scalar_lea.vmem %s2, 1792
    %v1525 = vld [vmem:[%s1524] sm:$0xff]
    %v1526 = vld [vmem:[%s1524 + $0x8] sm:$0xff]
    %v1527 = vld [vmem:[%s1524 + $0x10] sm:$0xff]
    %v1528 = vld [vmem:[%s1524 + $0x18] sm:$0xff]
    %v1529 = vld [vmem:[%s1524 + $0x20] sm:$0xff]
    %v1530 = vld [vmem:[%s1524 + $0x28] sm:$0xff]
    %v1531 = vld [vmem:[%s1524 + $0x30] sm:$0xff]
    %v1532 = vld [vmem:[%s1524 + $0x38] sm:$0xff]
    %v1533 = vld [vmem:[%s1524 + $0x40] sm:$0xff]
    %v1534 = vld [vmem:[%s1524 + $0x48] sm:$0xff]
    %v1535 = vld [vmem:[%s1524 + $0x50] sm:$0xff]
    %v1536 = vld [vmem:[%s1524 + $0x58] sm:$0xff]
    %v1537 = vld [vmem:[%s1524 + $0x60] sm:$0xff]
    %v1538 = vld [vmem:[%s1524 + $0x68] sm:$0xff]
    %v1539 = vld [vmem:[%s1524 + $0x70] sm:$0xff]
    %v1540 = vld [vmem:[%s1524 + $0x78] sm:$0xff]
    %v1541 = vld [vmem:[%s1524 + $0x80] sm:$0xff]
    %v1542 = vld [vmem:[%s1524 + $0x88] sm:$0xff]
    %v1543 = vld [vmem:[%s1524 + $0x90] sm:$0xff]
    %v1544 = vld [vmem:[%s1524 + $0x98] sm:$0xff]
    %v1545 = vld [vmem:[%s1524 + $0xa0] sm:$0xff]
    %v1546 = vld [vmem:[%s1524 + $0xa8] sm:$0xff]
    %v1547 = vld [vmem:[%s1524 + $0xb0] sm:$0xff]
    %v1548 = vld [vmem:[%s1524 + $0xb8] sm:$0xff]
    %v1549 = vld [vmem:[%s1524 + $0xc0] sm:$0xff]
    %v1550 = vld [vmem:[%s1524 + $0xc8] sm:$0xff]
    %v1551 = vld [vmem:[%s1524 + $0xd0] sm:$0xff]
    %v1552 = vld [vmem:[%s1524 + $0xd8] sm:$0xff]
    %v1553 = vld [vmem:[%s1524 + $0xe0] sm:$0xff]
    %v1554 = vld [vmem:[%s1524 + $0xe8] sm:$0xff]
    %v1555 = vld [vmem:[%s1524 + $0xf0] sm:$0xff]
    %v1556 = vld [vmem:[%s1524 + $0xf8] sm:$0xff]
    %1557 = vmatprep.subr.mxu0 0.0
    %1558 = vmatpush1.msra.mxu0 %v1525
    %1559 = vmatprep.subr.mxu0 0.0
    %1560 = vmatpush1.msra.mxu0 %v1526
    %1561 = vmatprep.subr.mxu0 0.0
    %1562 = vmatpush1.msra.mxu0 %v1527
    %1563 = vmatprep.subr.mxu0 0.0
    %1564 = vmatpush1.msra.mxu0 %v1528
    %1565 = vmatprep.subr.mxu0 0.0
    %1566 = vmatpush1.msra.mxu0 %v1529
    %1567 = vmatprep.subr.mxu0 0.0
    %1568 = vmatpush1.msra.mxu0 %v1530
    %1569 = vmatprep.subr.mxu0 0.0
    %1570 = vmatpush1.msra.mxu0 %v1531
    %1571 = vmatprep.subr.mxu0 0.0
    %1572 = vmatpush1.msra.mxu0 %v1532
    %1573 = vmatprep.subr.mxu0 0.0
    %1574 = vmatpush1.msra.mxu0 %v1533
    %1575 = vmatprep.subr.mxu0 0.0
    %1576 = vmatpush1.msra.mxu0 %v1534
    %1577 = vmatprep.subr.mxu0 0.0
    %1578 = vmatpush1.msra.mxu0 %v1535
    %1579 = vmatprep.subr.mxu0 0.0
    %1580 = vmatpush1.msra.mxu0 %v1536
    %1581 = vmatprep.subr.mxu0 0.0
    %1582 = vmatpush1.msra.mxu0 %v1537
    %1583 = vmatprep.subr.mxu0 0.0
    %1584 = vmatpush1.msra.mxu0 %v1538
    %1585 = vmatprep.subr.mxu0 0.0
    %1586 = vmatpush1.msra.mxu0 %v1539
    %1587 = vmatprep.subr.mxu0 0.0
    %1588 = vmatpush1.msra.mxu0 %v1540
    %1589 = vmatprep.subr.mxu0 0.0
    %1590 = vmatpush1.msra.mxu0 %v1541
    %1591 = vmatprep.subr.mxu0 0.0
    %1592 = vmatpush1.msra.mxu0 %v1542
    %1593 = vmatprep.subr.mxu0 0.0
    %1594 = vmatpush1.msra.mxu0 %v1543
    %1595 = vmatprep.subr.mxu0 0.0
    %1596 = vmatpush1.msra.mxu0 %v1544
    %1597 = vmatprep.subr.mxu0 0.0
    %1598 = vmatpush1.msra.mxu0 %v1545
    %1599 = vmatprep.subr.mxu0 0.0
    %1600 = vmatpush1.msra.mxu0 %v1546
    %1601 = vmatprep.subr.mxu0 0.0
    %1602 = vmatpush1.msra.mxu0 %v1547
    %1603 = vmatprep.subr.mxu0 0.0
    %1604 = vmatpush1.msra.mxu0 %v1548
    %1605 = vmatprep.subr.mxu0 0.0
    %1606 = vmatpush1.msra.mxu0 %v1549
    %1607 = vmatprep.subr.mxu0 0.0
    %1608 = vmatpush1.msra.mxu0 %v1550
    %1609 = vmatprep.subr.mxu0 0.0
    %1610 = vmatpush1.msra.mxu0 %v1551
    %1611 = vmatprep.subr.mxu0 0.0
    %1612 = vmatpush1.msra.mxu0 %v1552
    %1613 = vmatprep.subr.mxu0 0.0
    %1614 = vmatpush1.msra.mxu0 %v1553
    %1615 = vmatprep.subr.mxu0 0.0
    %1616 = vmatpush1.msra.mxu0 %v1554
    %1617 = vmatprep.subr.mxu0 0.0
    %1618 = vmatpush1.msra.mxu0 %v1555
    %1619 = vmatprep.subr.mxu0 0.0
    %1620 = vmatpush1.msra.mxu0 %v1556
    %1621 = vmatprep.mubr.f32.mxu0 %v780
    %1622 = vmatmul.mubr.f32.gmra.mrb[0].mxu0 %v779
    %v1623 = vpop.f32.mrb[0].mxu0
    %v1624 = vadd.f32 0.0, %v1623
    %v1625 = vpop.f32.mrb[0].mxu0
    %1626 = vdwg.mxu0
    %v1627 = vadd.f32 %v1523, %v1624
    %s1628 = scalar_lea.vmem %s2, 2048
    %v1629 = vld [vmem:[%s1628] sm:$0xff]
    %v1630 = vld [vmem:[%s1628 + $0x8] sm:$0xff]
    %v1631 = vld [vmem:[%s1628 + $0x10] sm:$0xff]
    %v1632 = vld [vmem:[%s1628 + $0x18] sm:$0xff]
    %v1633 = vld [vmem:[%s1628 + $0x20] sm:$0xff]
    %v1634 = vld [vmem:[%s1628 + $0x28] sm:$0xff]
    %v1635 = vld [vmem:[%s1628 + $0x30] sm:$0xff]
    %v1636 = vld [vmem:[%s1628 + $0x38] sm:$0xff]
    %v1637 = vld [vmem:[%s1628 + $0x40] sm:$0xff]
    %v1638 = vld [vmem:[%s1628 + $0x48] sm:$0xff]
    %v1639 = vld [vmem:[%s1628 + $0x50] sm:$0xff]
    %v1640 = vld [vmem:[%s1628 + $0x58] sm:$0xff]
    %v1641 = vld [vmem:[%s1628 + $0x60] sm:$0xff]
    %v1642 = vld [vmem:[%s1628 + $0x68] sm:$0xff]
    %v1643 = vld [vmem:[%s1628 + $0x70] sm:$0xff]
    %v1644 = vld [vmem:[%s1628 + $0x78] sm:$0xff]
    %v1645 = vld [vmem:[%s1628 + $0x80] sm:$0xff]
    %v1646 = vld [vmem:[%s1628 + $0x88] sm:$0xff]
    %v1647 = vld [vmem:[%s1628 + $0x90] sm:$0xff]
    %v1648 = vld [vmem:[%s1628 + $0x98] sm:$0xff]
    %v1649 = vld [vmem:[%s1628 + $0xa0] sm:$0xff]
    %v1650 = vld [vmem:[%s1628 + $0xa8] sm:$0xff]
    %v1651 = vld [vmem:[%s1628 + $0xb0] sm:$0xff]
    %v1652 = vld [vmem:[%s1628 + $0xb8] sm:$0xff]
    %v1653 = vld [vmem:[%s1628 + $0xc0] sm:$0xff]
    %v1654 = vld [vmem:[%s1628 + $0xc8] sm:$0xff]
    %v1655 = vld [vmem:[%s1628 + $0xd0] sm:$0xff]
    %v1656 = vld [vmem:[%s1628 + $0xd8] sm:$0xff]
    %v1657 = vld [vmem:[%s1628 + $0xe0] sm:$0xff]
    %v1658 = vld [vmem:[%s1628 + $0xe8] sm:$0xff]
    %v1659 = vld [vmem:[%s1628 + $0xf0] sm:$0xff]
    %v1660 = vld [vmem:[%s1628 + $0xf8] sm:$0xff]
    %1661 = vmatprep.subr.mxu0 0.0
    %1662 = vmatpush1.msra.mxu0 %v1629
    %1663 = vmatprep.subr.mxu0 0.0
    %1664 = vmatpush1.msra.mxu0 %v1630
    %1665 = vmatprep.subr.mxu0 0.0
    %1666 = vmatpush1.msra.mxu0 %v1631
    %1667 = vmatprep.subr.mxu0 0.0
    %1668 = vmatpush1.msra.mxu0 %v1632
    %1669 = vmatprep.subr.mxu0 0.0
    %1670 = vmatpush1.msra.mxu0 %v1633
    %1671 = vmatprep.subr.mxu0 0.0
    %1672 = vmatpush1.msra.mxu0 %v1634
    %1673 = vmatprep.subr.mxu0 0.0
    %1674 = vmatpush1.msra.mxu0 %v1635
    %1675 = vmatprep.subr.mxu0 0.0
    %1676 = vmatpush1.msra.mxu0 %v1636
    %1677 = vmatprep.subr.mxu0 0.0
    %1678 = vmatpush1.msra.mxu0 %v1637
    %1679 = vmatprep.subr.mxu0 0.0
    %1680 = vmatpush1.msra.mxu0 %v1638
    %1681 = vmatprep.subr.mxu0 0.0
    %1682 = vmatpush1.msra.mxu0 %v1639
    %1683 = vmatprep.subr.mxu0 0.0
    %1684 = vmatpush1.msra.mxu0 %v1640
    %1685 = vmatprep.subr.mxu0 0.0
    %1686 = vmatpush1.msra.mxu0 %v1641
    %1687 = vmatprep.subr.mxu0 0.0
    %1688 = vmatpush1.msra.mxu0 %v1642
    %1689 = vmatprep.subr.mxu0 0.0
    %1690 = vmatpush1.msra.mxu0 %v1643
    %1691 = vmatprep.subr.mxu0 0.0
    %1692 = vmatpush1.msra.mxu0 %v1644
    %1693 = vmatprep.subr.mxu0 0.0
    %1694 = vmatpush1.msra.mxu0 %v1645
    %1695 = vmatprep.subr.mxu0 0.0
    %1696 = vmatpush1.msra.mxu0 %v1646
    %1697 = vmatprep.subr.mxu0 0.0
    %1698 = vmatpush1.msra.mxu0 %v1647
    %1699 = vmatprep.subr.mxu0 0.0
    %1700 = vmatpush1.msra.mxu0 %v1648
    %1701 = vmatprep.subr.mxu0 0.0
    %1702 = vmatpush1.msra.mxu0 %v1649
    %1703 = vmatprep.subr.mxu0 0.0
    %1704 = vmatpush1.msra.mxu0 %v1650
    %1705 = vmatprep.subr.mxu0 0.0
    %1706 = vmatpush1.msra.mxu0 %v1651
    %1707 = vmatprep.subr.mxu0 0.0
    %1708 = vmatpush1.msra.mxu0 %v1652
    %1709 = vmatprep.subr.mxu0 0.0
    %1710 = vmatpush1.msra.mxu0 %v1653
    %1711 = vmatprep.subr.mxu0 0.0
    %1712 = vmatpush1.msra.mxu0 %v1654
    %1713 = vmatprep.subr.mxu0 0.0
    %1714 = vmatpush1.msra.mxu0 %v1655
    %1715 = vmatprep.subr.mxu0 0.0
    %1716 = vmatpush1.msra.mxu0 %v1656
    %1717 = vmatprep.subr.mxu0 0.0
    %1718 = vmatpush1.msra.mxu0 %v1657
    %1719 = vmatprep.subr.mxu0 0.0
    %1720 = vmatpush1.msra.mxu0 %v1658
    %1721 = vmatprep.subr.mxu0 0.0
    %1722 = vmatpush1.msra.mxu0 %v1659
    %1723 = vmatprep.subr.mxu0 0.0
    %1724 = vmatpush1.msra.mxu0 %v1660
    %1725 = vmatprep.mubr.f32.mxu0 %v798
    %1726 = vmatmul.mubr.f32.gmra.mrb[0].mxu0 %v797
    %v1727 = vpop.f32.mrb[0].mxu0
    %v1728 = vadd.f32 0.0, %v1727
    %v1729 = vpop.f32.mrb[0].mxu0
    %1730 = vdwg.mxu0
    %v1731 = vadd.f32 %v1627, %v1728
    %v1732 = vlaneseq
    %v1733 = vand.u32 %v1732, 127
    %vm1734 = vcmp.lt.s32.totalorder %v1733, 10
    %v1735 = vsel %vm1734, %v1731, -1e+30
    %1736 = vmax.xlane.f32.xlu0 %v1735
    %v1737 = vpop.xlane.xlu0 %1736
    %v1738 = vsub.f32 %v1735, %v1737
    %v1739 = vmul.f32 %v1738, 1.442695
    %v1740 = vpow.pop %v1739
    %1741 = vadd.xlane.f32.xlu0 %v1740
    %v1742 = vpop.xlane.xlu0 %1741
    %v1743 = vlog2.pop %v1742
    %v1744 = vmul.f32 %v1743, 0.6931472
    %v1745 = vsub.f32 %v1738, %v1744
    %1746 = vst [vmem:[#allocation2] sm:$0xff] %v1745
    // Predicated region
    $region14: #{forward_pallas.5} parent=1 // pred_check
      _
    $region15: #{forward_pallas.5} parent=1 // pred_check_branch
      %1748 = sbr.rel (0) target = $region17
    $region16: #{forward_pallas.5} parent=1 // pred_region
      %s1750 = ssub.s32 128, 128
      %1751 = vsyncadd [#allocation3], %s1750
      %s1753 = sshll.u32 [#allocation2], 4
      %s1754 = int_to_ptr.vmem [resolvable:$true] %s1753
      %1756 = dma.vmem_to_hbm [thread:$0]  %s1754, 128, %s3, [#allocation3]
    $region17: #{forward_pallas.5} parent=1 // pred_fallthru
      _
    // Predicated region
    $region18: #{forward_pallas.5} parent=1 // pred_check
      _
    $region19: #{forward_pallas.5} parent=1 // pred_check_branch
      %1758 = sbr.rel (0) target = $region21
    $region20: #{forward_pallas.5} parent=1 // pred_region
      %1759 = dma.done [#allocation3], 128
    $region21: #{forward_pallas.5} parent=1 // pred_fallthru
      _
    %1760 = vsyncpa [#allocation3], 1

</llo_original>
